<compile_context>
chip_gen: v7x
topology: tpu7x:2x2x1
jax: 0.10.0
libtpu: 0.0.40
codegen_flags: <defaults>
</compile_context>

<pallas_src>
import functools

import jax
import jax.numpy as jnp
from jax import lax
from jax.experimental import pallas as pl
from jax.experimental.pallas import tpu as pltpu


# ----------------------------------------------------------------------------
# Fused Pallas kernel: 2 bidirectional LSTM layers + FC head
# ----------------------------------------------------------------------------
def _brnn_kernel(x_ref, wih0_ref, whh0_ref, b0_ref,
                 wih1_ref, whh1_ref, b1_ref,
                 wfc_ref, bfc_ref, out_ref, gx_sc, *, T, Bp):
    """Shapes (H = hidden, G = 8H, GH = 4H):
    x_ref:    (T*Bp, Din)    time-major, batch padded to Bp sublanes
    wih*_ref: (Din_l, G)     input->gates, fwd gates in lanes [0:GH), bwd [GH:G)
                             per-direction gate order: [i, f, o, g]
    whh*_ref: (2H, G)        block-diag: rows[0:H) fwd -> cols[0:GH),
                             rows[H:2H) bwd -> cols[GH:G)
    b*_ref:   (1, G)         b_ih + b_hh, same layout as wih
    wfc_ref:  (2H, C), bfc_ref: (1, C), out_ref: (Bp, C)
    gx_sc:    (T*Bp, G)      VMEM scratch for precomputed input gates (reused
                             by both layers)
    """
    H2 = whh0_ref.shape[0]           # 2H
    H = H2 // 2
    GH = 4 * H                       # per-direction gate width (=128 for H=32)

    def run_layer(x_flat, wih_ref, whh_ref, b_ref):
        # Input projection for ALL timesteps and BOTH directions: one matmul,
        # one bias broadcast (outside the serial recurrence).
        gx_sc[...] = (jnp.dot(x_flat, wih_ref[...],
                              preferred_element_type=jnp.float32)
                      + b_ref[...])

        whh = whh_ref[...]                               # stays resident in vregs
        h_cat = jnp.zeros((Bp, H2), jnp.float32)         # [h_fwd | h_bwd]
        c_cat = jnp.zeros((Bp, H2), jnp.float32)         # [c_fwd | c_bwd]
        h_steps = []

        for s in range(T):                               # static unroll (T small)
            gf = gx_sc[s * Bp:(s + 1) * Bp, :GH]             # fwd, position s
            gb = gx_sc[(T - 1 - s) * Bp:(T - s) * Bp, GH:]   # bwd, position T-1-s
            g = (jnp.concatenate([gf, gb], axis=-1)
                 + jnp.dot(h_cat, whh, preferred_element_type=jnp.float32))

            # sigmoid gates (i, f, o of both directions) in one slab, tanh in one
            sig = jax.nn.sigmoid(jnp.concatenate(
                [g[:, 0:3 * H], g[:, GH:GH + 3 * H]], axis=-1))    # (Bp, 6H)
            gg = jnp.tanh(jnp.concatenate(
                [g[:, 3 * H:GH], g[:, GH + 3 * H:]], axis=-1))     # (Bp, 2H)

            i_cat = jnp.concatenate([sig[:, 0:H],       sig[:, 3 * H:4 * H]], -1)
            f_cat = jnp.concatenate([sig[:, H:2 * H],   sig[:, 4 * H:5 * H]], -1)
            o_cat = jnp.concatenate([sig[:, 2 * H:3 * H], sig[:, 5 * H:6 * H]], -1)

            c_cat = f_cat * c_cat + i_cat * gg
            h_cat = o_cat * jnp.tanh(c_cat)
            h_steps.append(h_cat)

        # Per-position layer output t = [h_fwd(step t) | h_bwd(step T-1-t)]
        return [jnp.concatenate([h_steps[t][:, :H], h_steps[T - 1 - t][:, H:]],
                                axis=-1) for t in range(T)]

    # layer 0
    seq1 = run_layer(x_ref[...], wih0_ref, whh0_ref, b0_ref)   # T x (Bp, 2H)
    x1 = jnp.concatenate(seq1, axis=0)                         # (T*Bp, 2H)
    # layer 1
    seq2 = run_layer(x1, wih1_ref, whh1_ref, b1_ref)
    last = seq2[T - 1]                                         # out[:, -1, :]
    # FC head
    out_ref[...] = (jnp.dot(last, wfc_ref[...],
                            preferred_element_type=jnp.float32)
                    + bfc_ref[...])


# ----------------------------------------------------------------------------
# Host wrapper
# ----------------------------------------------------------------------------
def brnn_forward(x, kparams):
    """x: (B, T, input_size) f32 [batch_first] -> (B, num_classes)."""
    assert len(kparams["layers"]) == 2, "fused kernel is specialized for 2 layers"
    B, T, Din = x.shape
    l0, l1 = kparams["layers"]
    H2 = l0["whh"].shape[0]
    G = l0["whh"].shape[1]            # 8H
    C = kparams["wfc"].shape[1]
    Bp = max(8, ((B + 7) // 8) * 8)   # fill sublanes

    x_tm = jnp.transpose(x, (1, 0, 2))                      # (T, B, Din)
    x_p = jnp.pad(x_tm, ((0, 0), (0, Bp - B), (0, 0)))      # (T, Bp, Din)
    x_flat = x_p.reshape(T * Bp, Din)

    out_p = pl.pallas_call(
        functools.partial(_brnn_kernel, T=T, Bp=Bp),
        out_shape=jax.ShapeDtypeStruct((Bp, C), jnp.float32),
        grid=(1,),
        in_specs=[
            pl.BlockSpec((T * Bp, Din), lambda i: (0, 0)),
            pl.BlockSpec((Din, G), lambda i: (0, 0)),
            pl.BlockSpec((H2, G), lambda i: (0, 0)),
            pl.BlockSpec((1, G), lambda i: (0, 0)),
            pl.BlockSpec((H2, G), lambda i: (0, 0)),
            pl.BlockSpec((H2, G), lambda i: (0, 0)),
            pl.BlockSpec((1, G), lambda i: (0, 0)),
            pl.BlockSpec((H2, C), lambda i: (0, 0)),
            pl.BlockSpec((1, C), lambda i: (0, 0)),
        ],
        out_specs=pl.BlockSpec((Bp, C), lambda i: (0, 0)),
        scratch_shapes=[pltpu.VMEM((T * Bp, G), jnp.float32)],
        compiler_params=pltpu.CompilerParams(
            dimension_semantics=("arbitrary",)),
    )(x_flat, l0["wih"], l0["whh"], l0["b"],
      l1["wih"], l1["whh"], l1["b"],
      kparams["wfc"], kparams["bfc"])
    return out_p[:B]


# ----------------------------------------------------------------------------
# Parameter init (PyTorch-style raw weights) + kernel-layout preparation
# ----------------------------------------------------------------------------
def init_params(key, input_size, hidden_size, num_layers, num_classes):
    H = hidden_size
    k = 1.0 / jnp.sqrt(jnp.float32(H))
    layers = []
    for l in range(num_layers):
        din = input_size if l == 0 else 2 * H
        dirs = {}
        for d in ("fwd", "bwd"):
            key, k1, k2, k3, k4 = jax.random.split(key, 5)
            dirs[d] = dict(
                w_ih=jax.random.uniform(k1, (4 * H, din), jnp.float32, -k, k),
                w_hh=jax.random.uniform(k2, (4 * H, H), jnp.float32, -k, k),
                b_ih=jax.random.uniform(k3, (4 * H,), jnp.float32, -k, k),
                b_hh=jax.random.uniform(k4, (4 * H,), jnp.float32, -k, k),
            )
        layers.append(dirs)
    key, k1, k2 = jax.random.split(key, 3)
    kf = 1.0 / jnp.sqrt(jnp.float32(2 * H))
    fc = dict(w=jax.random.uniform(k1, (num_classes, 2 * H), jnp.float32, -kf, kf),
              b=jax.random.uniform(k2, (num_classes,), jnp.float32, -kf, kf))
    return dict(layers=layers, fc=fc)


def _reorder_gates(w):
    """PyTorch gate order [i, f, g, o] -> kernel order [i, f, o, g] (axis 0)."""
    H = w.shape[0] // 4
    return jnp.concatenate([w[:2 * H], w[3 * H:], w[2 * H:3 * H]], axis=0)


def prepare_kernel_params(raw):
    layers = []
    for lp in raw["layers"]:
        pf, pb = lp["fwd"], lp["bwd"]
        wih_f = _reorder_gates(pf["w_ih"]).T          # (Din, 4H)
        wih_b = _reorder_gates(pb["w_ih"]).T
        whh_f = _reorder_gates(pf["w_hh"]).T          # (H, 4H)
        whh_b = _reorder_gates(pb["w_hh"]).T
        b_f = _reorder_gates(pf["b_ih"] + pf["b_hh"])
        b_b = _reorder_gates(pb["b_ih"] + pb["b_hh"])
        H, GH = whh_f.shape
        z = jnp.zeros((H, GH), jnp.float32)
        layers.append(dict(
            wih=jnp.concatenate([wih_f, wih_b], axis=1),                  # (Din, 8H)
            whh=jnp.concatenate(                                           # (2H, 8H)
                [jnp.concatenate([whh_f, z], axis=1),
                 jnp.concatenate([z, whh_b], axis=1)], axis=0),
            b=jnp.concatenate([b_f, b_b]).reshape(1, 2 * GH),             # (1, 8H)
        ))
    return dict(layers=layers,
                wfc=raw["fc"]["w"].T,                                     # (2H, C)
                bfc=raw["fc"]["b"].reshape(1, -1))                        # (1, C)


# ----------------------------------------------------------------------------
# Pure-JAX reference (standard PyTorch LSTM math) for a silent check
# ----------------------------------------------------------------------------
def _ref_lstm_dir(x_tm, w_ih, w_hh, b_ih, b_hh):
    T, B, _ = x_tm.shape
    H = w_hh.shape[1]

    def step(carry, x_t):
        h, c = carry
        g = x_t @ w_ih.T + b_ih + h @ w_hh.T + b_hh
        i = jax.nn.sigmoid(g[:, 0 * H:1 * H])
        f = jax.nn.sigmoid(g[:, 1 * H:2 * H])
        gg = jnp.tanh(g[:, 2 * H:3 * H])
        o = jax.nn.sigmoid(g[:, 3 * H:4 * H])
        c = f * c + i * gg
        h = o * jnp.tanh(c)
        return (h, c), h

    init = (jnp.zeros((B, H), jnp.float32), jnp.zeros((B, H), jnp.float32))
    _, hs = lax.scan(step, init, x_tm)
    return hs


def brnn_reference(x, raw):
    layer_in = x
    for lp in raw["layers"]:
        x_tm = jnp.transpose(layer_in, (1, 0, 2))
        of = _ref_lstm_dir(x_tm, lp["fwd"]["w_ih"], lp["fwd"]["w_hh"],
                           lp["fwd"]["b_ih"], lp["fwd"]["b_hh"])
        ob = _ref_lstm_dir(x_tm[::-1], lp["bwd"]["w_ih"], lp["bwd"]["w_hh"],
                           lp["bwd"]["b_ih"], lp["bwd"]["b_hh"])[::-1]
        layer_in = jnp.transpose(jnp.concatenate([of, ob], axis=-1), (1, 0, 2))
    last = layer_in[:, -1, :]
    return last @ raw["fc"]["w"].T + raw["fc"]["b"]


# ----------------------------------------------------------------------------
if __name__ == "__main__":
    # Small shapes consistent with the module (MNIST-row style input_size=28).
    input_size = 28
    hidden_size = 32
    num_layers = 2
    num_classes = 10
    batch = 2
    seq = 8

    key = jax.random.PRNGKey(0)
    key, kx = jax.random.split(key)
    x = jax.random.normal(kx, (batch, seq, input_size), jnp.float32)
    raw_params = init_params(key, input_size, hidden_size, num_layers, num_classes)
    kparams = prepare_kernel_params(raw_params)

    out = jax.block_until_ready(jax.jit(brnn_forward)(x, kparams))
    assert out.shape == (batch, num_classes)

    ref = jax.block_until_ready(brnn_reference(x, raw_params))
    assert jnp.allclose(out, ref, atol=2e-4, rtol=2e-4), "mismatch vs JAX reference"

    print("KERNEL_OK")
</pallas_src>

<mosaic_0001>
module attributes {stable_mosaic.version = 11 : i64} {
  func.func @_brnn_kernel(%arg0: i32, %arg1: memref<64x28xf32, #tpu.memory_space<vmem>>, %arg2: memref<28x256xf32, #tpu.memory_space<vmem>>, %arg3: memref<64x256xf32, #tpu.memory_space<vmem>>, %arg4: memref<1x256xf32, #tpu.memory_space<vmem>>, %arg5: memref<64x256xf32, #tpu.memory_space<vmem>>, %arg6: memref<64x256xf32, #tpu.memory_space<vmem>>, %arg7: memref<1x256xf32, #tpu.memory_space<vmem>>, %arg8: memref<64x10xf32, #tpu.memory_space<vmem>>, %arg9: memref<1x10xf32, #tpu.memory_space<vmem>>, %arg10: memref<8x10xf32, #tpu.memory_space<vmem>>, %arg11: memref<64x256xf32, #tpu.memory_space<vmem>>) attributes {dimension_semantics = [#tpu.dimension_semantics<arbitrary>], iteration_bounds = array<i64: 1>, scalar_prefetch = 0 : i64, scratch_operands = 1 : i64, tpu.core_type = #tpu.core_type<tc>, window_params = [{pipeline_mode = #tpu.pipeline_mode<synchronous>, transform_indices = @transform_0, window_bounds = array<i64: 64, 28>}, {pipeline_mode = #tpu.pipeline_mode<synchronous>, transform_indices = @transform_1, window_bounds = array<i64: 28, 256>}, {pipeline_mode = #tpu.pipeline_mode<synchronous>, transform_indices = @transform_2, window_bounds = array<i64: 64, 256>}, {pipeline_mode = #tpu.pipeline_mode<synchronous>, transform_indices = @transform_3, window_bounds = array<i64: 1, 256>}, {pipeline_mode = #tpu.pipeline_mode<synchronous>, transform_indices = @transform_4, window_bounds = array<i64: 64, 256>}, {pipeline_mode = #tpu.pipeline_mode<synchronous>, transform_indices = @transform_5, window_bounds = array<i64: 64, 256>}, {pipeline_mode = #tpu.pipeline_mode<synchronous>, transform_indices = @transform_6, window_bounds = array<i64: 1, 256>}, {pipeline_mode = #tpu.pipeline_mode<synchronous>, transform_indices = @transform_7, window_bounds = array<i64: 64, 10>}, {pipeline_mode = #tpu.pipeline_mode<synchronous>, transform_indices = @transform_8, window_bounds = array<i64: 1, 10>}, {pipeline_mode = #tpu.pipeline_mode<synchronous>, transform_indices = @transform_9, window_bounds = array<i64: 8, 10>}]} {
    %c0 = arith.constant 0 : index
    %c0_0 = arith.constant 0 : index
    %0 = vector.load %arg1[%c0, %c0_0] : memref<64x28xf32, #tpu.memory_space<vmem>>, vector<64x28xf32>
    %c0_1 = arith.constant 0 : index
    %c0_2 = arith.constant 0 : index
    %1 = vector.load %arg2[%c0_1, %c0_2] : memref<28x256xf32, #tpu.memory_space<vmem>>, vector<28x256xf32>
    %cst = arith.constant dense<0.000000e+00> : vector<64x256xf32>
    %2 = tpu.matmul %0, %1, %cst {dimension_numbers = #tpu.dot_dimension_numbers<[1], [0], [0], [1], [0, 0, 1, 1], [], []>} : vector<64x28xf32>, vector<28x256xf32>, vector<64x256xf32> -> vector<64x256xf32>
    %c0_3 = arith.constant 0 : index
    %c0_4 = arith.constant 0 : index
    %3 = vector.load %arg4[%c0_3, %c0_4] : memref<1x256xf32, #tpu.memory_space<vmem>>, vector<1x256xf32>
    %4 = vector.broadcast %3 : vector<1x256xf32> to vector<64x256xf32>
    %5 = arith.addf %2, %4 : vector<64x256xf32>
    %c0_5 = arith.constant 0 : index
    %c0_6 = arith.constant 0 : index
    %6 = vector.load %arg11[%c0_5, %c0_6] : memref<64x256xf32, #tpu.memory_space<vmem>>, vector<64x256xf32>
    tpu.vector_store %arg11[%c0_5, %c0_6], %5 {strides = array<i32>} : memref<64x256xf32, #tpu.memory_space<vmem>>, vector<64x256xf32>,
    %c0_7 = arith.constant 0 : index
    %c0_8 = arith.constant 0 : index
    %7 = vector.load %arg3[%c0_7, %c0_8] : memref<64x256xf32, #tpu.memory_space<vmem>>, vector<64x256xf32>
    %cst_9 = arith.constant 0.000000e+00 : f32
    %8 = vector.broadcast %cst_9 : f32 to vector<8x64xf32>
    %cst_10 = arith.constant 0.000000e+00 : f32
    %9 = vector.broadcast %cst_10 : f32 to vector<8x64xf32>
    %c0_11 = arith.constant 0 : index
    %c0_12 = arith.constant 0 : index
    %10 = vector.load %arg11[%c0_11, %c0_12] : memref<64x256xf32, #tpu.memory_space<vmem>>, vector<8x128xf32>
    %c56 = arith.constant 56 : index
    %c128 = arith.constant 128 : index
    %11 = vector.load %arg11[%c56, %c128] : memref<64x256xf32, #tpu.memory_space<vmem>>, vector<8x128xf32>
    %12 = tpu.concatenate %10, %11 in 1 : vector<8x128xf32>, vector<8x128xf32> -> vector<8x256xf32>
    %cst_13 = arith.constant dense<0.000000e+00> : vector<8x256xf32>
    %13 = tpu.matmul %8, %7, %cst_13 {dimension_numbers = #tpu.dot_dimension_numbers<[1], [0], [0], [1], [0, 0, 1, 1], [], []>} : vector<8x64xf32>, vector<64x256xf32>, vector<8x256xf32> -> vector<8x256xf32>
    %14 = arith.addf %12, %13 : vector<8x256xf32>
    %15 = vector.extract_strided_slice %14 {offsets = [0, 0], sizes = [8, 96], strides = [1, 1]} : vector<8x256xf32> to vector<8x96xf32>
    %16 = vector.extract_strided_slice %14 {offsets = [0, 128], sizes = [8, 96], strides = [1, 1]} : vector<8x256xf32> to vector<8x96xf32>
    %17 = tpu.concatenate %15, %16 in 1 : vector<8x96xf32>, vector<8x96xf32> -> vector<8x192xf32>
    %18 = arith.negf %17 : vector<8x192xf32>
    %19 = math.exp %18 : vector<8x192xf32>
    %cst_14 = arith.constant 1.000000e+00 : f32
    %20 = vector.broadcast %cst_14 : f32 to vector<8x192xf32>
    %21 = arith.addf %20, %19 : vector<8x192xf32>
    %22 = arith.divf %20, %21 : vector<8x192xf32>
    %23 = vector.extract_strided_slice %14 {offsets = [0, 96], sizes = [8, 32], strides = [1, 1]} : vector<8x256xf32> to vector<8x32xf32>
    %24 = vector.extract_strided_slice %14 {offsets = [0, 224], sizes = [8, 32], strides = [1, 1]} : vector<8x256xf32> to vector<8x32xf32>
    %25 = tpu.concatenate %23, %24 in 1 : vector<8x32xf32>, vector<8x32xf32> -> vector<8x64xf32>
    %26 = math.tanh %25 : vector<8x64xf32>
    %27 = vector.extract_strided_slice %22 {offsets = [0, 0], sizes = [8, 32], strides = [1, 1]} : vector<8x192xf32> to vector<8x32xf32>
    %28 = vector.extract_strided_slice %22 {offsets = [0, 96], sizes = [8, 32], strides = [1, 1]} : vector<8x192xf32> to vector<8x32xf32>
    %29 = tpu.concatenate %27, %28 in 1 : vector<8x32xf32>, vector<8x32xf32> -> vector<8x64xf32>
    %30 = vector.extract_strided_slice %22 {offsets = [0, 32], sizes = [8, 32], strides = [1, 1]} : vector<8x192xf32> to vector<8x32xf32>
    %31 = vector.extract_strided_slice %22 {offsets = [0, 128], sizes = [8, 32], strides = [1, 1]} : vector<8x192xf32> to vector<8x32xf32>
    %32 = tpu.concatenate %30, %31 in 1 : vector<8x32xf32>, vector<8x32xf32> -> vector<8x64xf32>
    %33 = vector.extract_strided_slice %22 {offsets = [0, 64], sizes = [8, 32], strides = [1, 1]} : vector<8x192xf32> to vector<8x32xf32>
    %34 = vector.extract_strided_slice %22 {offsets = [0, 160], sizes = [8, 32], strides = [1, 1]} : vector<8x192xf32> to vector<8x32xf32>
    %35 = tpu.concatenate %33, %34 in 1 : vector<8x32xf32>, vector<8x32xf32> -> vector<8x64xf32>
    %36 = arith.mulf %32, %9 : vector<8x64xf32>
    %37 = arith.mulf %29, %26 : vector<8x64xf32>
    %38 = arith.addf %36, %37 : vector<8x64xf32>
    %39 = math.tanh %38 : vector<8x64xf32>
    %40 = arith.mulf %35, %39 : vector<8x64xf32>
    %c8 = arith.constant 8 : index
    %c0_15 = arith.constant 0 : index
    %41 = vector.load %arg11[%c8, %c0_15] : memref<64x256xf32, #tpu.memory_space<vmem>>, vector<8x128xf32>
    %c48 = arith.constant 48 : index
    %c128_16 = arith.constant 128 : index
    %42 = vector.load %arg11[%c48, %c128_16] : memref<64x256xf32, #tpu.memory_space<vmem>>, vector<8x128xf32>
    %43 = tpu.concatenate %41, %42 in 1 : vector<8x128xf32>, vector<8x128xf32> -> vector<8x256xf32>
    %cst_17 = arith.constant dense<0.000000e+00> : vector<8x256xf32>
    %44 = tpu.matmul %40, %7, %cst_17 {dimension_numbers = #tpu.dot_dimension_numbers<[1], [0], [0], [1], [0, 0, 1, 1], [], []>} : vector<8x64xf32>, vector<64x256xf32>, vector<8x256xf32> -> vector<8x256xf32>
    %45 = arith.addf %43, %44 : vector<8x256xf32>
    %46 = vector.extract_strided_slice %45 {offsets = [0, 0], sizes = [8, 96], strides = [1, 1]} : vector<8x256xf32> to vector<8x96xf32>
    %47 = vector.extract_strided_slice %45 {offsets = [0, 128], sizes = [8, 96], strides = [1, 1]} : vector<8x256xf32> to vector<8x96xf32>
    %48 = tpu.concatenate %46, %47 in 1 : vector<8x96xf32>, vector<8x96xf32> -> vector<8x192xf32>
    %49 = arith.negf %48 : vector<8x192xf32>
    %50 = math.exp %49 : vector<8x192xf32>
    %cst_18 = arith.constant 1.000000e+00 : f32
    %51 = vector.broadcast %cst_18 : f32 to vector<8x192xf32>
    %52 = arith.addf %51, %50 : vector<8x192xf32>
    %53 = arith.divf %51, %52 : vector<8x192xf32>
    %54 = vector.extract_strided_slice %45 {offsets = [0, 96], sizes = [8, 32], strides = [1, 1]} : vector<8x256xf32> to vector<8x32xf32>
    %55 = vector.extract_strided_slice %45 {offsets = [0, 224], sizes = [8, 32], strides = [1, 1]} : vector<8x256xf32> to vector<8x32xf32>
    %56 = tpu.concatenate %54, %55 in 1 : vector<8x32xf32>, vector<8x32xf32> -> vector<8x64xf32>
    %57 = math.tanh %56 : vector<8x64xf32>
    %58 = vector.extract_strided_slice %53 {offsets = [0, 0], sizes = [8, 32], strides = [1, 1]} : vector<8x192xf32> to vector<8x32xf32>
    %59 = vector.extract_strided_slice %53 {offsets = [0, 96], sizes = [8, 32], strides = [1, 1]} : vector<8x192xf32> to vector<8x32xf32>
    %60 = tpu.concatenate %58, %59 in 1 : vector<8x32xf32>, vector<8x32xf32> -> vector<8x64xf32>
    %61 = vector.extract_strided_slice %53 {offsets = [0, 32], sizes = [8, 32], strides = [1, 1]} : vector<8x192xf32> to vector<8x32xf32>
    %62 = vector.extract_strided_slice %53 {offsets = [0, 128], sizes = [8, 32], strides = [1, 1]} : vector<8x192xf32> to vector<8x32xf32>
    %63 = tpu.concatenate %61, %62 in 1 : vector<8x32xf32>, vector<8x32xf32> -> vector<8x64xf32>
    %64 = vector.extract_strided_slice %53 {offsets = [0, 64], sizes = [8, 32], strides = [1, 1]} : vector<8x192xf32> to vector<8x32xf32>
    %65 = vector.extract_strided_slice %53 {offsets = [0, 160], sizes = [8, 32], strides = [1, 1]} : vector<8x192xf32> to vector<8x32xf32>
    %66 = tpu.concatenate %64, %65 in 1 : vector<8x32xf32>, vector<8x32xf32> -> vector<8x64xf32>
    %67 = arith.mulf %63, %38 : vector<8x64xf32>
    %68 = arith.mulf %60, %57 : vector<8x64xf32>
    %69 = arith.addf %67, %68 : vector<8x64xf32>
    %70 = math.tanh %69 : vector<8x64xf32>
    %71 = arith.mulf %66, %70 : vector<8x64xf32>
    %c16 = arith.constant 16 : index
    %c0_19 = arith.constant 0 : index
    %72 = vector.load %arg11[%c16, %c0_19] : memref<64x256xf32, #tpu.memory_space<vmem>>, vector<8x128xf32>
    %c40 = arith.constant 40 : index
    %c128_20 = arith.constant 128 : index
    %73 = vector.load %arg11[%c40, %c128_20] : memref<64x256xf32, #tpu.memory_space<vmem>>, vector<8x128xf32>
    %74 = tpu.concatenate %72, %73 in 1 : vector<8x128xf32>, vector<8x128xf32> -> vector<8x256xf32>
    %cst_21 = arith.constant dense<0.000000e+00> : vector<8x256xf32>
    %75 = tpu.matmul %71, %7, %cst_21 {dimension_numbers = #tpu.dot_dimension_numbers<[1], [0], [0], [1], [0, 0, 1, 1], [], []>} : vector<8x64xf32>, vector<64x256xf32>, vector<8x256xf32> -> vector<8x256xf32>
    %76 = arith.addf %74, %75 : vector<8x256xf32>
    %77 = vector.extract_strided_slice %76 {offsets = [0, 0], sizes = [8, 96], strides = [1, 1]} : vector<8x256xf32> to vector<8x96xf32>
    %78 = vector.extract_strided_slice %76 {offsets = [0, 128], sizes = [8, 96], strides = [1, 1]} : vector<8x256xf32> to vector<8x96xf32>
    %79 = tpu.concatenate %77, %78 in 1 : vector<8x96xf32>, vector<8x96xf32> -> vector<8x192xf32>
    %80 = arith.negf %79 : vector<8x192xf32>
    %81 = math.exp %80 : vector<8x192xf32>
    %cst_22 = arith.constant 1.000000e+00 : f32
    %82 = vector.broadcast %cst_22 : f32 to vector<8x192xf32>
    %83 = arith.addf %82, %81 : vector<8x192xf32>
    %84 = arith.divf %82, %83 : vector<8x192xf32>
    %85 = vector.extract_strided_slice %76 {offsets = [0, 96], sizes = [8, 32], strides = [1, 1]} : vector<8x256xf32> to vector<8x32xf32>
    %86 = vector.extract_strided_slice %76 {offsets = [0, 224], sizes = [8, 32], strides = [1, 1]} : vector<8x256xf32> to vector<8x32xf32>
    %87 = tpu.concatenate %85, %86 in 1 : vector<8x32xf32>, vector<8x32xf32> -> vector<8x64xf32>
    %88 = math.tanh %87 : vector<8x64xf32>
    %89 = vector.extract_strided_slice %84 {offsets = [0, 0], sizes = [8, 32], strides = [1, 1]} : vector<8x192xf32> to vector<8x32xf32>
    %90 = vector.extract_strided_slice %84 {offsets = [0, 96], sizes = [8, 32], strides = [1, 1]} : vector<8x192xf32> to vector<8x32xf32>
    %91 = tpu.concatenate %89, %90 in 1 : vector<8x32xf32>, vector<8x32xf32> -> vector<8x64xf32>
    %92 = vector.extract_strided_slice %84 {offsets = [0, 32], sizes = [8, 32], strides = [1, 1]} : vector<8x192xf32> to vector<8x32xf32>
    %93 = vector.extract_strided_slice %84 {offsets = [0, 128], sizes = [8, 32], strides = [1, 1]} : vector<8x192xf32> to vector<8x32xf32>
    %94 = tpu.concatenate %92, %93 in 1 : vector<8x32xf32>, vector<8x32xf32> -> vector<8x64xf32>
    %95 = vector.extract_strided_slice %84 {offsets = [0, 64], sizes = [8, 32], strides = [1, 1]} : vector<8x192xf32> to vector<8x32xf32>
    %96 = vector.extract_strided_slice %84 {offsets = [0, 160], sizes = [8, 32], strides = [1, 1]} : vector<8x192xf32> to vector<8x32xf32>
    %97 = tpu.concatenate %95, %96 in 1 : vector<8x32xf32>, vector<8x32xf32> -> vector<8x64xf32>
    %98 = arith.mulf %94, %69 : vector<8x64xf32>
    %99 = arith.mulf %91, %88 : vector<8x64xf32>
    %100 = arith.addf %98, %99 : vector<8x64xf32>
    %101 = math.tanh %100 : vector<8x64xf32>
    %102 = arith.mulf %97, %101 : vector<8x64xf32>
    %c24 = arith.constant 24 : index
    %c0_23 = arith.constant 0 : index
    %103 = vector.load %arg11[%c24, %c0_23] : memref<64x256xf32, #tpu.memory_space<vmem>>, vector<8x128xf32>
    %c32 = arith.constant 32 : index
    %c128_24 = arith.constant 128 : index
    %104 = vector.load %arg11[%c32, %c128_24] : memref<64x256xf32, #tpu.memory_space<vmem>>, vector<8x128xf32>
    %105 = tpu.concatenate %103, %104 in 1 : vector<8x128xf32>, vector<8x128xf32> -> vector<8x256xf32>
    %cst_25 = arith.constant dense<0.000000e+00> : vector<8x256xf32>
    %106 = tpu.matmul %102, %7, %cst_25 {dimension_numbers = #tpu.dot_dimension_numbers<[1], [0], [0], [1], [0, 0, 1, 1], [], []>} : vector<8x64xf32>, vector<64x256xf32>, vector<8x256xf32> -> vector<8x256xf32>
    %107 = arith.addf %105, %106 : vector<8x256xf32>
    %108 = vector.extract_strided_slice %107 {offsets = [0, 0], sizes = [8, 96], strides = [1, 1]} : vector<8x256xf32> to vector<8x96xf32>
    %109 = vector.extract_strided_slice %107 {offsets = [0, 128], sizes = [8, 96], strides = [1, 1]} : vector<8x256xf32> to vector<8x96xf32>
    %110 = tpu.concatenate %108, %109 in 1 : vector<8x96xf32>, vector<8x96xf32> -> vector<8x192xf32>
    %111 = arith.negf %110 : vector<8x192xf32>
    %112 = math.exp %111 : vector<8x192xf32>
    %cst_26 = arith.constant 1.000000e+00 : f32
    %113 = vector.broadcast %cst_26 : f32 to vector<8x192xf32>
    %114 = arith.addf %113, %112 : vector<8x192xf32>
    %115 = arith.divf %113, %114 : vector<8x192xf32>
    %116 = vector.extract_strided_slice %107 {offsets = [0, 96], sizes = [8, 32], strides = [1, 1]} : vector<8x256xf32> to vector<8x32xf32>
    %117 = vector.extract_strided_slice %107 {offsets = [0, 224], sizes = [8, 32], strides = [1, 1]} : vector<8x256xf32> to vector<8x32xf32>
    %118 = tpu.concatenate %116, %117 in 1 : vector<8x32xf32>, vector<8x32xf32> -> vector<8x64xf32>
    %119 = math.tanh %118 : vector<8x64xf32>
    %120 = vector.extract_strided_slice %115 {offsets = [0, 0], sizes = [8, 32], strides = [1, 1]} : vector<8x192xf32> to vector<8x32xf32>
    %121 = vector.extract_strided_slice %115 {offsets = [0, 96], sizes = [8, 32], strides = [1, 1]} : vector<8x192xf32> to vector<8x32xf32>
    %122 = tpu.concatenate %120, %121 in 1 : vector<8x32xf32>, vector<8x32xf32> -> vector<8x64xf32>
    %123 = vector.extract_strided_slice %115 {offsets = [0, 32], sizes = [8, 32], strides = [1, 1]} : vector<8x192xf32> to vector<8x32xf32>
    %124 = vector.extract_strided_slice %115 {offsets = [0, 128], sizes = [8, 32], strides = [1, 1]} : vector<8x192xf32> to vector<8x32xf32>
    %125 = tpu.concatenate %123, %124 in 1 : vector<8x32xf32>, vector<8x32xf32> -> vector<8x64xf32>
    %126 = vector.extract_strided_slice %115 {offsets = [0, 64], sizes = [8, 32], strides = [1, 1]} : vector<8x192xf32> to vector<8x32xf32>
    %127 = vector.extract_strided_slice %115 {offsets = [0, 160], sizes = [8, 32], strides = [1, 1]} : vector<8x192xf32> to vector<8x32xf32>
    %128 = tpu.concatenate %126, %127 in 1 : vector<8x32xf32>, vector<8x32xf32> -> vector<8x64xf32>
    %129 = arith.mulf %125, %100 : vector<8x64xf32>
    %130 = arith.mulf %122, %119 : vector<8x64xf32>
    %131 = arith.addf %129, %130 : vector<8x64xf32>
    %132 = math.tanh %131 : vector<8x64xf32>
    %133 = arith.mulf %128, %132 : vector<8x64xf32>
    %c32_27 = arith.constant 32 : index
    %c0_28 = arith.constant 0 : index
    %134 = vector.load %arg11[%c32_27, %c0_28] : memref<64x256xf32, #tpu.memory_space<vmem>>, vector<8x128xf32>
    %c24_29 = arith.constant 24 : index
    %c128_30 = arith.constant 128 : index
    %135 = vector.load %arg11[%c24_29, %c128_30] : memref<64x256xf32, #tpu.memory_space<vmem>>, vector<8x128xf32>
    %136 = tpu.concatenate %134, %135 in 1 : vector<8x128xf32>, vector<8x128xf32> -> vector<8x256xf32>
    %cst_31 = arith.constant dense<0.000000e+00> : vector<8x256xf32>
    %137 = tpu.matmul %133, %7, %cst_31 {dimension_numbers = #tpu.dot_dimension_numbers<[1], [0], [0], [1], [0, 0, 1, 1], [], []>} : vector<8x64xf32>, vector<64x256xf32>, vector<8x256xf32> -> vector<8x256xf32>
    %138 = arith.addf %136, %137 : vector<8x256xf32>
    %139 = vector.extract_strided_slice %138 {offsets = [0, 0], sizes = [8, 96], strides = [1, 1]} : vector<8x256xf32> to vector<8x96xf32>
    %140 = vector.extract_strided_slice %138 {offsets = [0, 128], sizes = [8, 96], strides = [1, 1]} : vector<8x256xf32> to vector<8x96xf32>
    %141 = tpu.concatenate %139, %140 in 1 : vector<8x96xf32>, vector<8x96xf32> -> vector<8x192xf32>
    %142 = arith.negf %141 : vector<8x192xf32>
    %143 = math.exp %142 : vector<8x192xf32>
    %cst_32 = arith.constant 1.000000e+00 : f32
    %144 = vector.broadcast %cst_32 : f32 to vector<8x192xf32>
    %145 = arith.addf %144, %143 : vector<8x192xf32>
    %146 = arith.divf %144, %145 : vector<8x192xf32>
    %147 = vector.extract_strided_slice %138 {offsets = [0, 96], sizes = [8, 32], strides = [1, 1]} : vector<8x256xf32> to vector<8x32xf32>
    %148 = vector.extract_strided_slice %138 {offsets = [0, 224], sizes = [8, 32], strides = [1, 1]} : vector<8x256xf32> to vector<8x32xf32>
    %149 = tpu.concatenate %147, %148 in 1 : vector<8x32xf32>, vector<8x32xf32> -> vector<8x64xf32>
    %150 = math.tanh %149 : vector<8x64xf32>
    %151 = vector.extract_strided_slice %146 {offsets = [0, 0], sizes = [8, 32], strides = [1, 1]} : vector<8x192xf32> to vector<8x32xf32>
    %152 = vector.extract_strided_slice %146 {offsets = [0, 96], sizes = [8, 32], strides = [1, 1]} : vector<8x192xf32> to vector<8x32xf32>
    %153 = tpu.concatenate %151, %152 in 1 : vector<8x32xf32>, vector<8x32xf32> -> vector<8x64xf32>
    %154 = vector.extract_strided_slice %146 {offsets = [0, 32], sizes = [8, 32], strides = [1, 1]} : vector<8x192xf32> to vector<8x32xf32>
    %155 = vector.extract_strided_slice %146 {offsets = [0, 128], sizes = [8, 32], strides = [1, 1]} : vector<8x192xf32> to vector<8x32xf32>
    %156 = tpu.concatenate %154, %155 in 1 : vector<8x32xf32>, vector<8x32xf32> -> vector<8x64xf32>
    %157 = vector.extract_strided_slice %146 {offsets = [0, 64], sizes = [8, 32], strides = [1, 1]} : vector<8x192xf32> to vector<8x32xf32>
    %158 = vector.extract_strided_slice %146 {offsets = [0, 160], sizes = [8, 32], strides = [1, 1]} : vector<8x192xf32> to vector<8x32xf32>
    %159 = tpu.concatenate %157, %158 in 1 : vector<8x32xf32>, vector<8x32xf32> -> vector<8x64xf32>
    %160 = arith.mulf %156, %131 : vector<8x64xf32>
    %161 = arith.mulf %153, %150 : vector<8x64xf32>
    %162 = arith.addf %160, %161 : vector<8x64xf32>
    %163 = math.tanh %162 : vector<8x64xf32>
    %164 = arith.mulf %159, %163 : vector<8x64xf32>
    %c40_33 = arith.constant 40 : index
    %c0_34 = arith.constant 0 : index
    %165 = vector.load %arg11[%c40_33, %c0_34] : memref<64x256xf32, #tpu.memory_space<vmem>>, vector<8x128xf32>
    %c16_35 = arith.constant 16 : index
    %c128_36 = arith.constant 128 : index
    %166 = vector.load %arg11[%c16_35, %c128_36] : memref<64x256xf32, #tpu.memory_space<vmem>>, vector<8x128xf32>
    %167 = tpu.concatenate %165, %166 in 1 : vector<8x128xf32>, vector<8x128xf32> -> vector<8x256xf32>
    %cst_37 = arith.constant dense<0.000000e+00> : vector<8x256xf32>
    %168 = tpu.matmul %164, %7, %cst_37 {dimension_numbers = #tpu.dot_dimension_numbers<[1], [0], [0], [1], [0, 0, 1, 1], [], []>} : vector<8x64xf32>, vector<64x256xf32>, vector<8x256xf32> -> vector<8x256xf32>
    %169 = arith.addf %167, %168 : vector<8x256xf32>
    %170 = vector.extract_strided_slice %169 {offsets = [0, 0], sizes = [8, 96], strides = [1, 1]} : vector<8x256xf32> to vector<8x96xf32>
    %171 = vector.extract_strided_slice %169 {offsets = [0, 128], sizes = [8, 96], strides = [1, 1]} : vector<8x256xf32> to vector<8x96xf32>
    %172 = tpu.concatenate %170, %171 in 1 : vector<8x96xf32>, vector<8x96xf32> -> vector<8x192xf32>
    %173 = arith.negf %172 : vector<8x192xf32>
    %174 = math.exp %173 : vector<8x192xf32>
    %cst_38 = arith.constant 1.000000e+00 : f32
    %175 = vector.broadcast %cst_38 : f32 to vector<8x192xf32>
    %176 = arith.addf %175, %174 : vector<8x192xf32>
    %177 = arith.divf %175, %176 : vector<8x192xf32>
    %178 = vector.extract_strided_slice %169 {offsets = [0, 96], sizes = [8, 32], strides = [1, 1]} : vector<8x256xf32> to vector<8x32xf32>
    %179 = vector.extract_strided_slice %169 {offsets = [0, 224], sizes = [8, 32], strides = [1, 1]} : vector<8x256xf32> to vector<8x32xf32>
    %180 = tpu.concatenate %178, %179 in 1 : vector<8x32xf32>, vector<8x32xf32> -> vector<8x64xf32>
    %181 = math.tanh %180 : vector<8x64xf32>
    %182 = vector.extract_strided_slice %177 {offsets = [0, 0], sizes = [8, 32], strides = [1, 1]} : vector<8x192xf32> to vector<8x32xf32>
    %183 = vector.extract_strided_slice %177 {offsets = [0, 96], sizes = [8, 32], strides = [1, 1]} : vector<8x192xf32> to vector<8x32xf32>
    %184 = tpu.concatenate %182, %183 in 1 : vector<8x32xf32>, vector<8x32xf32> -> vector<8x64xf32>
    %185 = vector.extract_strided_slice %177 {offsets = [0, 32], sizes = [8, 32], strides = [1, 1]} : vector<8x192xf32> to vector<8x32xf32>
    %186 = vector.extract_strided_slice %177 {offsets = [0, 128], sizes = [8, 32], strides = [1, 1]} : vector<8x192xf32> to vector<8x32xf32>
    %187 = tpu.concatenate %185, %186 in 1 : vector<8x32xf32>, vector<8x32xf32> -> vector<8x64xf32>
    %188 = vector.extract_strided_slice %177 {offsets = [0, 64], sizes = [8, 32], strides = [1, 1]} : vector<8x192xf32> to vector<8x32xf32>
    %189 = vector.extract_strided_slice %177 {offsets = [0, 160], sizes = [8, 32], strides = [1, 1]} : vector<8x192xf32> to vector<8x32xf32>
    %190 = tpu.concatenate %188, %189 in 1 : vector<8x32xf32>, vector<8x32xf32> -> vector<8x64xf32>
    %191 = arith.mulf %187, %162 : vector<8x64xf32>
    %192 = arith.mulf %184, %181 : vector<8x64xf32>
    %193 = arith.addf %191, %192 : vector<8x64xf32>
    %194 = math.tanh %193 : vector<8x64xf32>
    %195 = arith.mulf %190, %194 : vector<8x64xf32>
    %c48_39 = arith.constant 48 : index
    %c0_40 = arith.constant 0 : index
    %196 = vector.load %arg11[%c48_39, %c0_40] : memref<64x256xf32, #tpu.memory_space<vmem>>, vector<8x128xf32>
    %c8_41 = arith.constant 8 : index
    %c128_42 = arith.constant 128 : index
    %197 = vector.load %arg11[%c8_41, %c128_42] : memref<64x256xf32, #tpu.memory_space<vmem>>, vector<8x128xf32>
    %198 = tpu.concatenate %196, %197 in 1 : vector<8x128xf32>, vector<8x128xf32> -> vector<8x256xf32>
    %cst_43 = arith.constant dense<0.000000e+00> : vector<8x256xf32>
    %199 = tpu.matmul %195, %7, %cst_43 {dimension_numbers = #tpu.dot_dimension_numbers<[1], [0], [0], [1], [0, 0, 1, 1], [], []>} : vector<8x64xf32>, vector<64x256xf32>, vector<8x256xf32> -> vector<8x256xf32>
    %200 = arith.addf %198, %199 : vector<8x256xf32>
    %201 = vector.extract_strided_slice %200 {offsets = [0, 0], sizes = [8, 96], strides = [1, 1]} : vector<8x256xf32> to vector<8x96xf32>
    %202 = vector.extract_strided_slice %200 {offsets = [0, 128], sizes = [8, 96], strides = [1, 1]} : vector<8x256xf32> to vector<8x96xf32>
    %203 = tpu.concatenate %201, %202 in 1 : vector<8x96xf32>, vector<8x96xf32> -> vector<8x192xf32>
    %204 = arith.negf %203 : vector<8x192xf32>
    %205 = math.exp %204 : vector<8x192xf32>
    %cst_44 = arith.constant 1.000000e+00 : f32
    %206 = vector.broadcast %cst_44 : f32 to vector<8x192xf32>
    %207 = arith.addf %206, %205 : vector<8x192xf32>
    %208 = arith.divf %206, %207 : vector<8x192xf32>
    %209 = vector.extract_strided_slice %200 {offsets = [0, 96], sizes = [8, 32], strides = [1, 1]} : vector<8x256xf32> to vector<8x32xf32>
    %210 = vector.extract_strided_slice %200 {offsets = [0, 224], sizes = [8, 32], strides = [1, 1]} : vector<8x256xf32> to vector<8x32xf32>
    %211 = tpu.concatenate %209, %210 in 1 : vector<8x32xf32>, vector<8x32xf32> -> vector<8x64xf32>
    %212 = math.tanh %211 : vector<8x64xf32>
    %213 = vector.extract_strided_slice %208 {offsets = [0, 0], sizes = [8, 32], strides = [1, 1]} : vector<8x192xf32> to vector<8x32xf32>
    %214 = vector.extract_strided_slice %208 {offsets = [0, 96], sizes = [8, 32], strides = [1, 1]} : vector<8x192xf32> to vector<8x32xf32>
    %215 = tpu.concatenate %213, %214 in 1 : vector<8x32xf32>, vector<8x32xf32> -> vector<8x64xf32>
    %216 = vector.extract_strided_slice %208 {offsets = [0, 32], sizes = [8, 32], strides = [1, 1]} : vector<8x192xf32> to vector<8x32xf32>
    %217 = vector.extract_strided_slice %208 {offsets = [0, 128], sizes = [8, 32], strides = [1, 1]} : vector<8x192xf32> to vector<8x32xf32>
    %218 = tpu.concatenate %216, %217 in 1 : vector<8x32xf32>, vector<8x32xf32> -> vector<8x64xf32>
    %219 = vector.extract_strided_slice %208 {offsets = [0, 64], sizes = [8, 32], strides = [1, 1]} : vector<8x192xf32> to vector<8x32xf32>
    %220 = vector.extract_strided_slice %208 {offsets = [0, 160], sizes = [8, 32], strides = [1, 1]} : vector<8x192xf32> to vector<8x32xf32>
    %221 = tpu.concatenate %219, %220 in 1 : vector<8x32xf32>, vector<8x32xf32> -> vector<8x64xf32>
    %222 = arith.mulf %218, %193 : vector<8x64xf32>
    %223 = arith.mulf %215, %212 : vector<8x64xf32>
    %224 = arith.addf %222, %223 : vector<8x64xf32>
    %225 = math.tanh %224 : vector<8x64xf32>
    %226 = arith.mulf %221, %225 : vector<8x64xf32>
    %c56_45 = arith.constant 56 : index
    %c0_46 = arith.constant 0 : index
    %227 = vector.load %arg11[%c56_45, %c0_46] : memref<64x256xf32, #tpu.memory_space<vmem>>, vector<8x128xf32>
    %c0_47 = arith.constant 0 : index
    %c128_48 = arith.constant 128 : index
    %228 = vector.load %arg11[%c0_47, %c128_48] : memref<64x256xf32, #tpu.memory_space<vmem>>, vector<8x128xf32>
    %229 = tpu.concatenate %227, %228 in 1 : vector<8x128xf32>, vector<8x128xf32> -> vector<8x256xf32>
    %cst_49 = arith.constant dense<0.000000e+00> : vector<8x256xf32>
    %230 = tpu.matmul %226, %7, %cst_49 {dimension_numbers = #tpu.dot_dimension_numbers<[1], [0], [0], [1], [0, 0, 1, 1], [], []>} : vector<8x64xf32>, vector<64x256xf32>, vector<8x256xf32> -> vector<8x256xf32>
    %231 = arith.addf %229, %230 : vector<8x256xf32>
    %232 = vector.extract_strided_slice %231 {offsets = [0, 0], sizes = [8, 96], strides = [1, 1]} : vector<8x256xf32> to vector<8x96xf32>
    %233 = vector.extract_strided_slice %231 {offsets = [0, 128], sizes = [8, 96], strides = [1, 1]} : vector<8x256xf32> to vector<8x96xf32>
    %234 = tpu.concatenate %232, %233 in 1 : vector<8x96xf32>, vector<8x96xf32> -> vector<8x192xf32>
    %235 = arith.negf %234 : vector<8x192xf32>
    %236 = math.exp %235 : vector<8x192xf32>
    %cst_50 = arith.constant 1.000000e+00 : f32
    %237 = vector.broadcast %cst_50 : f32 to vector<8x192xf32>
    %238 = arith.addf %237, %236 : vector<8x192xf32>
    %239 = arith.divf %237, %238 : vector<8x192xf32>
    %240 = vector.extract_strided_slice %231 {offsets = [0, 96], sizes = [8, 32], strides = [1, 1]} : vector<8x256xf32> to vector<8x32xf32>
    %241 = vector.extract_strided_slice %231 {offsets = [0, 224], sizes = [8, 32], strides = [1, 1]} : vector<8x256xf32> to vector<8x32xf32>
    %242 = tpu.concatenate %240, %241 in 1 : vector<8x32xf32>, vector<8x32xf32> -> vector<8x64xf32>
    %243 = math.tanh %242 : vector<8x64xf32>
    %244 = vector.extract_strided_slice %239 {offsets = [0, 0], sizes = [8, 32], strides = [1, 1]} : vector<8x192xf32> to vector<8x32xf32>
    %245 = vector.extract_strided_slice %239 {offsets = [0, 96], sizes = [8, 32], strides = [1, 1]} : vector<8x192xf32> to vector<8x32xf32>
    %246 = tpu.concatenate %244, %245 in 1 : vector<8x32xf32>, vector<8x32xf32> -> vector<8x64xf32>
    %247 = vector.extract_strided_slice %239 {offsets = [0, 32], sizes = [8, 32], strides = [1, 1]} : vector<8x192xf32> to vector<8x32xf32>
    %248 = vector.extract_strided_slice %239 {offsets = [0, 128], sizes = [8, 32], strides = [1, 1]} : vector<8x192xf32> to vector<8x32xf32>
    %249 = tpu.concatenate %247, %248 in 1 : vector<8x32xf32>, vector<8x32xf32> -> vector<8x64xf32>
    %250 = vector.extract_strided_slice %239 {offsets = [0, 64], sizes = [8, 32], strides = [1, 1]} : vector<8x192xf32> to vector<8x32xf32>
    %251 = vector.extract_strided_slice %239 {offsets = [0, 160], sizes = [8, 32], strides = [1, 1]} : vector<8x192xf32> to vector<8x32xf32>
    %252 = tpu.concatenate %250, %251 in 1 : vector<8x32xf32>, vector<8x32xf32> -> vector<8x64xf32>
    %253 = arith.mulf %249, %224 : vector<8x64xf32>
    %254 = arith.mulf %246, %243 : vector<8x64xf32>
    %255 = arith.addf %253, %254 : vector<8x64xf32>
    %256 = math.tanh %255 : vector<8x64xf32>
    %257 = arith.mulf %252, %256 : vector<8x64xf32>
    %258 = vector.extract_strided_slice %40 {offsets = [0, 0], sizes = [8, 32], strides = [1, 1]} : vector<8x64xf32> to vector<8x32xf32>
    %259 = vector.extract_strided_slice %257 {offsets = [0, 32], sizes = [8, 32], strides = [1, 1]} : vector<8x64xf32> to vector<8x32xf32>
    %260 = tpu.concatenate %258, %259 in 1 : vector<8x32xf32>, vector<8x32xf32> -> vector<8x64xf32>
    %261 = vector.extract_strided_slice %71 {offsets = [0, 0], sizes = [8, 32], strides = [1, 1]} : vector<8x64xf32> to vector<8x32xf32>
    %262 = vector.extract_strided_slice %226 {offsets = [0, 32], sizes = [8, 32], strides = [1, 1]} : vector<8x64xf32> to vector<8x32xf32>
    %263 = tpu.concatenate %261, %262 in 1 : vector<8x32xf32>, vector<8x32xf32> -> vector<8x64xf32>
    %264 = vector.extract_strided_slice %102 {offsets = [0, 0], sizes = [8, 32], strides = [1, 1]} : vector<8x64xf32> to vector<8x32xf32>
    %265 = vector.extract_strided_slice %195 {offsets = [0, 32], sizes = [8, 32], strides = [1, 1]} : vector<8x64xf32> to vector<8x32xf32>
    %266 = tpu.concatenate %264, %265 in 1 : vector<8x32xf32>, vector<8x32xf32> -> vector<8x64xf32>
    %267 = vector.extract_strided_slice %133 {offsets = [0, 0], sizes = [8, 32], strides = [1, 1]} : vector<8x64xf32> to vector<8x32xf32>
    %268 = vector.extract_strided_slice %164 {offsets = [0, 32], sizes = [8, 32], strides = [1, 1]} : vector<8x64xf32> to vector<8x32xf32>
    %269 = tpu.concatenate %267, %268 in 1 : vector<8x32xf32>, vector<8x32xf32> -> vector<8x64xf32>
    %270 = vector.extract_strided_slice %164 {offsets = [0, 0], sizes = [8, 32], strides = [1, 1]} : vector<8x64xf32> to vector<8x32xf32>
    %271 = vector.extract_strided_slice %133 {offsets = [0, 32], sizes = [8, 32], strides = [1, 1]} : vector<8x64xf32> to vector<8x32xf32>
    %272 = tpu.concatenate %270, %271 in 1 : vector<8x32xf32>, vector<8x32xf32> -> vector<8x64xf32>
    %273 = vector.extract_strided_slice %195 {offsets = [0, 0], sizes = [8, 32], strides = [1, 1]} : vector<8x64xf32> to vector<8x32xf32>
    %274 = vector.extract_strided_slice %102 {offsets = [0, 32], sizes = [8, 32], strides = [1, 1]} : vector<8x64xf32> to vector<8x32xf32>
    %275 = tpu.concatenate %273, %274 in 1 : vector<8x32xf32>, vector<8x32xf32> -> vector<8x64xf32>
    %276 = vector.extract_strided_slice %226 {offsets = [0, 0], sizes = [8, 32], strides = [1, 1]} : vector<8x64xf32> to vector<8x32xf32>
    %277 = vector.extract_strided_slice %71 {offsets = [0, 32], sizes = [8, 32], strides = [1, 1]} : vector<8x64xf32> to vector<8x32xf32>
    %278 = tpu.concatenate %276, %277 in 1 : vector<8x32xf32>, vector<8x32xf32> -> vector<8x64xf32>
    %279 = vector.extract_strided_slice %257 {offsets = [0, 0], sizes = [8, 32], strides = [1, 1]} : vector<8x64xf32> to vector<8x32xf32>
    %280 = vector.extract_strided_slice %40 {offsets = [0, 32], sizes = [8, 32], strides = [1, 1]} : vector<8x64xf32> to vector<8x32xf32>
    %281 = tpu.concatenate %279, %280 in 1 : vector<8x32xf32>, vector<8x32xf32> -> vector<8x64xf32>
    %282 = tpu.concatenate %260, %263, %266, %269, %272, %275, %278, %281 in 0 : vector<8x64xf32>, vector<8x64xf32>, vector<8x64xf32>, vector<8x64xf32>, vector<8x64xf32>, vector<8x64xf32>, vector<8x64xf32>, vector<8x64xf32> -> vector<64x64xf32>
    %c0_51 = arith.constant 0 : index
    %c0_52 = arith.constant 0 : index
    %283 = vector.load %arg5[%c0_51, %c0_52] : memref<64x256xf32, #tpu.memory_space<vmem>>, vector<64x256xf32>
    %cst_53 = arith.constant dense<0.000000e+00> : vector<64x256xf32>
    %284 = tpu.matmul %282, %283, %cst_53 {dimension_numbers = #tpu.dot_dimension_numbers<[1], [0], [0], [1], [0, 0, 1, 1], [], []>} : vector<64x64xf32>, vector<64x256xf32>, vector<64x256xf32> -> vector<64x256xf32>
    %c0_54 = arith.constant 0 : index
    %c0_55 = arith.constant 0 : index
    %285 = vector.load %arg7[%c0_54, %c0_55] : memref<1x256xf32, #tpu.memory_space<vmem>>, vector<1x256xf32>
    %286 = vector.broadcast %285 : vector<1x256xf32> to vector<64x256xf32>
    %287 = arith.addf %284, %286 : vector<64x256xf32>
    %c0_56 = arith.constant 0 : index
    %c0_57 = arith.constant 0 : index
    %288 = vector.load %arg11[%c0_56, %c0_57] : memref<64x256xf32, #tpu.memory_space<vmem>>, vector<64x256xf32>
    tpu.vector_store %arg11[%c0_56, %c0_57], %287 {strides = array<i32>} : memref<64x256xf32, #tpu.memory_space<vmem>>, vector<64x256xf32>,
    %c0_58 = arith.constant 0 : index
    %c0_59 = arith.constant 0 : index
    %289 = vector.load %arg6[%c0_58, %c0_59] : memref<64x256xf32, #tpu.memory_space<vmem>>, vector<64x256xf32>
    %cst_60 = arith.constant 0.000000e+00 : f32
    %290 = vector.broadcast %cst_60 : f32 to vector<8x64xf32>
    %cst_61 = arith.constant 0.000000e+00 : f32
    %291 = vector.broadcast %cst_61 : f32 to vector<8x64xf32>
    %c0_62 = arith.constant 0 : index
    %c0_63 = arith.constant 0 : index
    %292 = vector.load %arg11[%c0_62, %c0_63] : memref<64x256xf32, #tpu.memory_space<vmem>>, vector<8x128xf32>
    %c56_64 = arith.constant 56 : index
    %c128_65 = arith.constant 128 : index
    %293 = vector.load %arg11[%c56_64, %c128_65] : memref<64x256xf32, #tpu.memory_space<vmem>>, vector<8x128xf32>
    %294 = tpu.concatenate %292, %293 in 1 : vector<8x128xf32>, vector<8x128xf32> -> vector<8x256xf32>
    %cst_66 = arith.constant dense<0.000000e+00> : vector<8x256xf32>
    %295 = tpu.matmul %290, %289, %cst_66 {dimension_numbers = #tpu.dot_dimension_numbers<[1], [0], [0], [1], [0, 0, 1, 1], [], []>} : vector<8x64xf32>, vector<64x256xf32>, vector<8x256xf32> -> vector<8x256xf32>
    %296 = arith.addf %294, %295 : vector<8x256xf32>
    %297 = vector.extract_strided_slice %296 {offsets = [0, 0], sizes = [8, 96], strides = [1, 1]} : vector<8x256xf32> to vector<8x96xf32>
    %298 = vector.extract_strided_slice %296 {offsets = [0, 128], sizes = [8, 96], strides = [1, 1]} : vector<8x256xf32> to vector<8x96xf32>
    %299 = tpu.concatenate %297, %298 in 1 : vector<8x96xf32>, vector<8x96xf32> -> vector<8x192xf32>
    %300 = arith.negf %299 : vector<8x192xf32>
    %301 = math.exp %300 : vector<8x192xf32>
    %cst_67 = arith.constant 1.000000e+00 : f32
    %302 = vector.broadcast %cst_67 : f32 to vector<8x192xf32>
    %303 = arith.addf %302, %301 : vector<8x192xf32>
    %304 = arith.divf %302, %303 : vector<8x192xf32>
    %305 = vector.extract_strided_slice %296 {offsets = [0, 96], sizes = [8, 32], strides = [1, 1]} : vector<8x256xf32> to vector<8x32xf32>
    %306 = vector.extract_strided_slice %296 {offsets = [0, 224], sizes = [8, 32], strides = [1, 1]} : vector<8x256xf32> to vector<8x32xf32>
    %307 = tpu.concatenate %305, %306 in 1 : vector<8x32xf32>, vector<8x32xf32> -> vector<8x64xf32>
    %308 = math.tanh %307 : vector<8x64xf32>
    %309 = vector.extract_strided_slice %304 {offsets = [0, 0], sizes = [8, 32], strides = [1, 1]} : vector<8x192xf32> to vector<8x32xf32>
    %310 = vector.extract_strided_slice %304 {offsets = [0, 96], sizes = [8, 32], strides = [1, 1]} : vector<8x192xf32> to vector<8x32xf32>
    %311 = tpu.concatenate %309, %310 in 1 : vector<8x32xf32>, vector<8x32xf32> -> vector<8x64xf32>
    %312 = vector.extract_strided_slice %304 {offsets = [0, 32], sizes = [8, 32], strides = [1, 1]} : vector<8x192xf32> to vector<8x32xf32>
    %313 = vector.extract_strided_slice %304 {offsets = [0, 128], sizes = [8, 32], strides = [1, 1]} : vector<8x192xf32> to vector<8x32xf32>
    %314 = tpu.concatenate %312, %313 in 1 : vector<8x32xf32>, vector<8x32xf32> -> vector<8x64xf32>
    %315 = vector.extract_strided_slice %304 {offsets = [0, 64], sizes = [8, 32], strides = [1, 1]} : vector<8x192xf32> to vector<8x32xf32>
    %316 = vector.extract_strided_slice %304 {offsets = [0, 160], sizes = [8, 32], strides = [1, 1]} : vector<8x192xf32> to vector<8x32xf32>
    %317 = tpu.concatenate %315, %316 in 1 : vector<8x32xf32>, vector<8x32xf32> -> vector<8x64xf32>
    %318 = arith.mulf %314, %291 : vector<8x64xf32>
    %319 = arith.mulf %311, %308 : vector<8x64xf32>
    %320 = arith.addf %318, %319 : vector<8x64xf32>
    %321 = math.tanh %320 : vector<8x64xf32>
    %322 = arith.mulf %317, %321 : vector<8x64xf32>
    %c8_68 = arith.constant 8 : index
    %c0_69 = arith.constant 0 : index
    %323 = vector.load %arg11[%c8_68, %c0_69] : memref<64x256xf32, #tpu.memory_space<vmem>>, vector<8x128xf32>
    %c48_70 = arith.constant 48 : index
    %c128_71 = arith.constant 128 : index
    %324 = vector.load %arg11[%c48_70, %c128_71] : memref<64x256xf32, #tpu.memory_space<vmem>>, vector<8x128xf32>
    %325 = tpu.concatenate %323, %324 in 1 : vector<8x128xf32>, vector<8x128xf32> -> vector<8x256xf32>
    %cst_72 = arith.constant dense<0.000000e+00> : vector<8x256xf32>
    %326 = tpu.matmul %322, %289, %cst_72 {dimension_numbers = #tpu.dot_dimension_numbers<[1], [0], [0], [1], [0, 0, 1, 1], [], []>} : vector<8x64xf32>, vector<64x256xf32>, vector<8x256xf32> -> vector<8x256xf32>
    %327 = arith.addf %325, %326 : vector<8x256xf32>
    %328 = vector.extract_strided_slice %327 {offsets = [0, 0], sizes = [8, 96], strides = [1, 1]} : vector<8x256xf32> to vector<8x96xf32>
    %329 = vector.extract_strided_slice %327 {offsets = [0, 128], sizes = [8, 96], strides = [1, 1]} : vector<8x256xf32> to vector<8x96xf32>
    %330 = tpu.concatenate %328, %329 in 1 : vector<8x96xf32>, vector<8x96xf32> -> vector<8x192xf32>
    %331 = arith.negf %330 : vector<8x192xf32>
    %332 = math.exp %331 : vector<8x192xf32>
    %cst_73 = arith.constant 1.000000e+00 : f32
    %333 = vector.broadcast %cst_73 : f32 to vector<8x192xf32>
    %334 = arith.addf %333, %332 : vector<8x192xf32>
    %335 = arith.divf %333, %334 : vector<8x192xf32>
    %336 = vector.extract_strided_slice %327 {offsets = [0, 96], sizes = [8, 32], strides = [1, 1]} : vector<8x256xf32> to vector<8x32xf32>
    %337 = vector.extract_strided_slice %327 {offsets = [0, 224], sizes = [8, 32], strides = [1, 1]} : vector<8x256xf32> to vector<8x32xf32>
    %338 = tpu.concatenate %336, %337 in 1 : vector<8x32xf32>, vector<8x32xf32> -> vector<8x64xf32>
    %339 = math.tanh %338 : vector<8x64xf32>
    %340 = vector.extract_strided_slice %335 {offsets = [0, 0], sizes = [8, 32], strides = [1, 1]} : vector<8x192xf32> to vector<8x32xf32>
    %341 = vector.extract_strided_slice %335 {offsets = [0, 96], sizes = [8, 32], strides = [1, 1]} : vector<8x192xf32> to vector<8x32xf32>
    %342 = tpu.concatenate %340, %341 in 1 : vector<8x32xf32>, vector<8x32xf32> -> vector<8x64xf32>
    %343 = vector.extract_strided_slice %335 {offsets = [0, 32], sizes = [8, 32], strides = [1, 1]} : vector<8x192xf32> to vector<8x32xf32>
    %344 = vector.extract_strided_slice %335 {offsets = [0, 128], sizes = [8, 32], strides = [1, 1]} : vector<8x192xf32> to vector<8x32xf32>
    %345 = tpu.concatenate %343, %344 in 1 : vector<8x32xf32>, vector<8x32xf32> -> vector<8x64xf32>
    %346 = vector.extract_strided_slice %335 {offsets = [0, 64], sizes = [8, 32], strides = [1, 1]} : vector<8x192xf32> to vector<8x32xf32>
    %347 = vector.extract_strided_slice %335 {offsets = [0, 160], sizes = [8, 32], strides = [1, 1]} : vector<8x192xf32> to vector<8x32xf32>
    %348 = tpu.concatenate %346, %347 in 1 : vector<8x32xf32>, vector<8x32xf32> -> vector<8x64xf32>
    %349 = arith.mulf %345, %320 : vector<8x64xf32>
    %350 = arith.mulf %342, %339 : vector<8x64xf32>
    %351 = arith.addf %349, %350 : vector<8x64xf32>
    %352 = math.tanh %351 : vector<8x64xf32>
    %353 = arith.mulf %348, %352 : vector<8x64xf32>
    %c16_74 = arith.constant 16 : index
    %c0_75 = arith.constant 0 : index
    %354 = vector.load %arg11[%c16_74, %c0_75] : memref<64x256xf32, #tpu.memory_space<vmem>>, vector<8x128xf32>
    %c40_76 = arith.constant 40 : index
    %c128_77 = arith.constant 128 : index
    %355 = vector.load %arg11[%c40_76, %c128_77] : memref<64x256xf32, #tpu.memory_space<vmem>>, vector<8x128xf32>
    %356 = tpu.concatenate %354, %355 in 1 : vector<8x128xf32>, vector<8x128xf32> -> vector<8x256xf32>
    %cst_78 = arith.constant dense<0.000000e+00> : vector<8x256xf32>
    %357 = tpu.matmul %353, %289, %cst_78 {dimension_numbers = #tpu.dot_dimension_numbers<[1], [0], [0], [1], [0, 0, 1, 1], [], []>} : vector<8x64xf32>, vector<64x256xf32>, vector<8x256xf32> -> vector<8x256xf32>
    %358 = arith.addf %356, %357 : vector<8x256xf32>
    %359 = vector.extract_strided_slice %358 {offsets = [0, 0], sizes = [8, 96], strides = [1, 1]} : vector<8x256xf32> to vector<8x96xf32>
    %360 = vector.extract_strided_slice %358 {offsets = [0, 128], sizes = [8, 96], strides = [1, 1]} : vector<8x256xf32> to vector<8x96xf32>
    %361 = tpu.concatenate %359, %360 in 1 : vector<8x96xf32>, vector<8x96xf32> -> vector<8x192xf32>
    %362 = arith.negf %361 : vector<8x192xf32>
    %363 = math.exp %362 : vector<8x192xf32>
    %cst_79 = arith.constant 1.000000e+00 : f32
    %364 = vector.broadcast %cst_79 : f32 to vector<8x192xf32>
    %365 = arith.addf %364, %363 : vector<8x192xf32>
    %366 = arith.divf %364, %365 : vector<8x192xf32>
    %367 = vector.extract_strided_slice %358 {offsets = [0, 96], sizes = [8, 32], strides = [1, 1]} : vector<8x256xf32> to vector<8x32xf32>
    %368 = vector.extract_strided_slice %358 {offsets = [0, 224], sizes = [8, 32], strides = [1, 1]} : vector<8x256xf32> to vector<8x32xf32>
    %369 = tpu.concatenate %367, %368 in 1 : vector<8x32xf32>, vector<8x32xf32> -> vector<8x64xf32>
    %370 = math.tanh %369 : vector<8x64xf32>
    %371 = vector.extract_strided_slice %366 {offsets = [0, 0], sizes = [8, 32], strides = [1, 1]} : vector<8x192xf32> to vector<8x32xf32>
    %372 = vector.extract_strided_slice %366 {offsets = [0, 96], sizes = [8, 32], strides = [1, 1]} : vector<8x192xf32> to vector<8x32xf32>
    %373 = tpu.concatenate %371, %372 in 1 : vector<8x32xf32>, vector<8x32xf32> -> vector<8x64xf32>
    %374 = vector.extract_strided_slice %366 {offsets = [0, 32], sizes = [8, 32], strides = [1, 1]} : vector<8x192xf32> to vector<8x32xf32>
    %375 = vector.extract_strided_slice %366 {offsets = [0, 128], sizes = [8, 32], strides = [1, 1]} : vector<8x192xf32> to vector<8x32xf32>
    %376 = tpu.concatenate %374, %375 in 1 : vector<8x32xf32>, vector<8x32xf32> -> vector<8x64xf32>
    %377 = vector.extract_strided_slice %366 {offsets = [0, 64], sizes = [8, 32], strides = [1, 1]} : vector<8x192xf32> to vector<8x32xf32>
    %378 = vector.extract_strided_slice %366 {offsets = [0, 160], sizes = [8, 32], strides = [1, 1]} : vector<8x192xf32> to vector<8x32xf32>
    %379 = tpu.concatenate %377, %378 in 1 : vector<8x32xf32>, vector<8x32xf32> -> vector<8x64xf32>
    %380 = arith.mulf %376, %351 : vector<8x64xf32>
    %381 = arith.mulf %373, %370 : vector<8x64xf32>
    %382 = arith.addf %380, %381 : vector<8x64xf32>
    %383 = math.tanh %382 : vector<8x64xf32>
    %384 = arith.mulf %379, %383 : vector<8x64xf32>
    %c24_80 = arith.constant 24 : index
    %c0_81 = arith.constant 0 : index
    %385 = vector.load %arg11[%c24_80, %c0_81] : memref<64x256xf32, #tpu.memory_space<vmem>>, vector<8x128xf32>
    %c32_82 = arith.constant 32 : index
    %c128_83 = arith.constant 128 : index
    %386 = vector.load %arg11[%c32_82, %c128_83] : memref<64x256xf32, #tpu.memory_space<vmem>>, vector<8x128xf32>
    %387 = tpu.concatenate %385, %386 in 1 : vector<8x128xf32>, vector<8x128xf32> -> vector<8x256xf32>
    %cst_84 = arith.constant dense<0.000000e+00> : vector<8x256xf32>
    %388 = tpu.matmul %384, %289, %cst_84 {dimension_numbers = #tpu.dot_dimension_numbers<[1], [0], [0], [1], [0, 0, 1, 1], [], []>} : vector<8x64xf32>, vector<64x256xf32>, vector<8x256xf32> -> vector<8x256xf32>
    %389 = arith.addf %387, %388 : vector<8x256xf32>
    %390 = vector.extract_strided_slice %389 {offsets = [0, 0], sizes = [8, 96], strides = [1, 1]} : vector<8x256xf32> to vector<8x96xf32>
    %391 = vector.extract_strided_slice %389 {offsets = [0, 128], sizes = [8, 96], strides = [1, 1]} : vector<8x256xf32> to vector<8x96xf32>
    %392 = tpu.concatenate %390, %391 in 1 : vector<8x96xf32>, vector<8x96xf32> -> vector<8x192xf32>
    %393 = arith.negf %392 : vector<8x192xf32>
    %394 = math.exp %393 : vector<8x192xf32>
    %cst_85 = arith.constant 1.000000e+00 : f32
    %395 = vector.broadcast %cst_85 : f32 to vector<8x192xf32>
    %396 = arith.addf %395, %394 : vector<8x192xf32>
    %397 = arith.divf %395, %396 : vector<8x192xf32>
    %398 = vector.extract_strided_slice %389 {offsets = [0, 96], sizes = [8, 32], strides = [1, 1]} : vector<8x256xf32> to vector<8x32xf32>
    %399 = vector.extract_strided_slice %389 {offsets = [0, 224], sizes = [8, 32], strides = [1, 1]} : vector<8x256xf32> to vector<8x32xf32>
    %400 = tpu.concatenate %398, %399 in 1 : vector<8x32xf32>, vector<8x32xf32> -> vector<8x64xf32>
    %401 = math.tanh %400 : vector<8x64xf32>
    %402 = vector.extract_strided_slice %397 {offsets = [0, 0], sizes = [8, 32], strides = [1, 1]} : vector<8x192xf32> to vector<8x32xf32>
    %403 = vector.extract_strided_slice %397 {offsets = [0, 96], sizes = [8, 32], strides = [1, 1]} : vector<8x192xf32> to vector<8x32xf32>
    %404 = tpu.concatenate %402, %403 in 1 : vector<8x32xf32>, vector<8x32xf32> -> vector<8x64xf32>
    %405 = vector.extract_strided_slice %397 {offsets = [0, 32], sizes = [8, 32], strides = [1, 1]} : vector<8x192xf32> to vector<8x32xf32>
    %406 = vector.extract_strided_slice %397 {offsets = [0, 128], sizes = [8, 32], strides = [1, 1]} : vector<8x192xf32> to vector<8x32xf32>
    %407 = tpu.concatenate %405, %406 in 1 : vector<8x32xf32>, vector<8x32xf32> -> vector<8x64xf32>
    %408 = vector.extract_strided_slice %397 {offsets = [0, 64], sizes = [8, 32], strides = [1, 1]} : vector<8x192xf32> to vector<8x32xf32>
    %409 = vector.extract_strided_slice %397 {offsets = [0, 160], sizes = [8, 32], strides = [1, 1]} : vector<8x192xf32> to vector<8x32xf32>
    %410 = tpu.concatenate %408, %409 in 1 : vector<8x32xf32>, vector<8x32xf32> -> vector<8x64xf32>
    %411 = arith.mulf %407, %382 : vector<8x64xf32>
    %412 = arith.mulf %404, %401 : vector<8x64xf32>
    %413 = arith.addf %411, %412 : vector<8x64xf32>
    %414 = math.tanh %413 : vector<8x64xf32>
    %415 = arith.mulf %410, %414 : vector<8x64xf32>
    %c32_86 = arith.constant 32 : index
    %c0_87 = arith.constant 0 : index
    %416 = vector.load %arg11[%c32_86, %c0_87] : memref<64x256xf32, #tpu.memory_space<vmem>>, vector<8x128xf32>
    %c24_88 = arith.constant 24 : index
    %c128_89 = arith.constant 128 : index
    %417 = vector.load %arg11[%c24_88, %c128_89] : memref<64x256xf32, #tpu.memory_space<vmem>>, vector<8x128xf32>
    %418 = tpu.concatenate %416, %417 in 1 : vector<8x128xf32>, vector<8x128xf32> -> vector<8x256xf32>
    %cst_90 = arith.constant dense<0.000000e+00> : vector<8x256xf32>
    %419 = tpu.matmul %415, %289, %cst_90 {dimension_numbers = #tpu.dot_dimension_numbers<[1], [0], [0], [1], [0, 0, 1, 1], [], []>} : vector<8x64xf32>, vector<64x256xf32>, vector<8x256xf32> -> vector<8x256xf32>
    %420 = arith.addf %418, %419 : vector<8x256xf32>
    %421 = vector.extract_strided_slice %420 {offsets = [0, 0], sizes = [8, 96], strides = [1, 1]} : vector<8x256xf32> to vector<8x96xf32>
    %422 = vector.extract_strided_slice %420 {offsets = [0, 128], sizes = [8, 96], strides = [1, 1]} : vector<8x256xf32> to vector<8x96xf32>
    %423 = tpu.concatenate %421, %422 in 1 : vector<8x96xf32>, vector<8x96xf32> -> vector<8x192xf32>
    %424 = arith.negf %423 : vector<8x192xf32>
    %425 = math.exp %424 : vector<8x192xf32>
    %cst_91 = arith.constant 1.000000e+00 : f32
    %426 = vector.broadcast %cst_91 : f32 to vector<8x192xf32>
    %427 = arith.addf %426, %425 : vector<8x192xf32>
    %428 = arith.divf %426, %427 : vector<8x192xf32>
    %429 = vector.extract_strided_slice %420 {offsets = [0, 96], sizes = [8, 32], strides = [1, 1]} : vector<8x256xf32> to vector<8x32xf32>
    %430 = vector.extract_strided_slice %420 {offsets = [0, 224], sizes = [8, 32], strides = [1, 1]} : vector<8x256xf32> to vector<8x32xf32>
    %431 = tpu.concatenate %429, %430 in 1 : vector<8x32xf32>, vector<8x32xf32> -> vector<8x64xf32>
    %432 = math.tanh %431 : vector<8x64xf32>
    %433 = vector.extract_strided_slice %428 {offsets = [0, 0], sizes = [8, 32], strides = [1, 1]} : vector<8x192xf32> to vector<8x32xf32>
    %434 = vector.extract_strided_slice %428 {offsets = [0, 96], sizes = [8, 32], strides = [1, 1]} : vector<8x192xf32> to vector<8x32xf32>
    %435 = tpu.concatenate %433, %434 in 1 : vector<8x32xf32>, vector<8x32xf32> -> vector<8x64xf32>
    %436 = vector.extract_strided_slice %428 {offsets = [0, 32], sizes = [8, 32], strides = [1, 1]} : vector<8x192xf32> to vector<8x32xf32>
    %437 = vector.extract_strided_slice %428 {offsets = [0, 128], sizes = [8, 32], strides = [1, 1]} : vector<8x192xf32> to vector<8x32xf32>
    %438 = tpu.concatenate %436, %437 in 1 : vector<8x32xf32>, vector<8x32xf32> -> vector<8x64xf32>
    %439 = vector.extract_strided_slice %428 {offsets = [0, 64], sizes = [8, 32], strides = [1, 1]} : vector<8x192xf32> to vector<8x32xf32>
    %440 = vector.extract_strided_slice %428 {offsets = [0, 160], sizes = [8, 32], strides = [1, 1]} : vector<8x192xf32> to vector<8x32xf32>
    %441 = tpu.concatenate %439, %440 in 1 : vector<8x32xf32>, vector<8x32xf32> -> vector<8x64xf32>
    %442 = arith.mulf %438, %413 : vector<8x64xf32>
    %443 = arith.mulf %435, %432 : vector<8x64xf32>
    %444 = arith.addf %442, %443 : vector<8x64xf32>
    %445 = math.tanh %444 : vector<8x64xf32>
    %446 = arith.mulf %441, %445 : vector<8x64xf32>
    %c40_92 = arith.constant 40 : index
    %c0_93 = arith.constant 0 : index
    %447 = vector.load %arg11[%c40_92, %c0_93] : memref<64x256xf32, #tpu.memory_space<vmem>>, vector<8x128xf32>
    %c16_94 = arith.constant 16 : index
    %c128_95 = arith.constant 128 : index
    %448 = vector.load %arg11[%c16_94, %c128_95] : memref<64x256xf32, #tpu.memory_space<vmem>>, vector<8x128xf32>
    %449 = tpu.concatenate %447, %448 in 1 : vector<8x128xf32>, vector<8x128xf32> -> vector<8x256xf32>
    %cst_96 = arith.constant dense<0.000000e+00> : vector<8x256xf32>
    %450 = tpu.matmul %446, %289, %cst_96 {dimension_numbers = #tpu.dot_dimension_numbers<[1], [0], [0], [1], [0, 0, 1, 1], [], []>} : vector<8x64xf32>, vector<64x256xf32>, vector<8x256xf32> -> vector<8x256xf32>
    %451 = arith.addf %449, %450 : vector<8x256xf32>
    %452 = vector.extract_strided_slice %451 {offsets = [0, 0], sizes = [8, 96], strides = [1, 1]} : vector<8x256xf32> to vector<8x96xf32>
    %453 = vector.extract_strided_slice %451 {offsets = [0, 128], sizes = [8, 96], strides = [1, 1]} : vector<8x256xf32> to vector<8x96xf32>
    %454 = tpu.concatenate %452, %453 in 1 : vector<8x96xf32>, vector<8x96xf32> -> vector<8x192xf32>
    %455 = arith.negf %454 : vector<8x192xf32>
    %456 = math.exp %455 : vector<8x192xf32>
    %cst_97 = arith.constant 1.000000e+00 : f32
    %457 = vector.broadcast %cst_97 : f32 to vector<8x192xf32>
    %458 = arith.addf %457, %456 : vector<8x192xf32>
    %459 = arith.divf %457, %458 : vector<8x192xf32>
    %460 = vector.extract_strided_slice %451 {offsets = [0, 96], sizes = [8, 32], strides = [1, 1]} : vector<8x256xf32> to vector<8x32xf32>
    %461 = vector.extract_strided_slice %451 {offsets = [0, 224], sizes = [8, 32], strides = [1, 1]} : vector<8x256xf32> to vector<8x32xf32>
    %462 = tpu.concatenate %460, %461 in 1 : vector<8x32xf32>, vector<8x32xf32> -> vector<8x64xf32>
    %463 = math.tanh %462 : vector<8x64xf32>
    %464 = vector.extract_strided_slice %459 {offsets = [0, 0], sizes = [8, 32], strides = [1, 1]} : vector<8x192xf32> to vector<8x32xf32>
    %465 = vector.extract_strided_slice %459 {offsets = [0, 96], sizes = [8, 32], strides = [1, 1]} : vector<8x192xf32> to vector<8x32xf32>
    %466 = tpu.concatenate %464, %465 in 1 : vector<8x32xf32>, vector<8x32xf32> -> vector<8x64xf32>
    %467 = vector.extract_strided_slice %459 {offsets = [0, 32], sizes = [8, 32], strides = [1, 1]} : vector<8x192xf32> to vector<8x32xf32>
    %468 = vector.extract_strided_slice %459 {offsets = [0, 128], sizes = [8, 32], strides = [1, 1]} : vector<8x192xf32> to vector<8x32xf32>
    %469 = tpu.concatenate %467, %468 in 1 : vector<8x32xf32>, vector<8x32xf32> -> vector<8x64xf32>
    %470 = vector.extract_strided_slice %459 {offsets = [0, 64], sizes = [8, 32], strides = [1, 1]} : vector<8x192xf32> to vector<8x32xf32>
    %471 = vector.extract_strided_slice %459 {offsets = [0, 160], sizes = [8, 32], strides = [1, 1]} : vector<8x192xf32> to vector<8x32xf32>
    %472 = tpu.concatenate %470, %471 in 1 : vector<8x32xf32>, vector<8x32xf32> -> vector<8x64xf32>
    %473 = arith.mulf %469, %444 : vector<8x64xf32>
    %474 = arith.mulf %466, %463 : vector<8x64xf32>
    %475 = arith.addf %473, %474 : vector<8x64xf32>
    %476 = math.tanh %475 : vector<8x64xf32>
    %477 = arith.mulf %472, %476 : vector<8x64xf32>
    %c48_98 = arith.constant 48 : index
    %c0_99 = arith.constant 0 : index
    %478 = vector.load %arg11[%c48_98, %c0_99] : memref<64x256xf32, #tpu.memory_space<vmem>>, vector<8x128xf32>
    %c8_100 = arith.constant 8 : index
    %c128_101 = arith.constant 128 : index
    %479 = vector.load %arg11[%c8_100, %c128_101] : memref<64x256xf32, #tpu.memory_space<vmem>>, vector<8x128xf32>
    %480 = tpu.concatenate %478, %479 in 1 : vector<8x128xf32>, vector<8x128xf32> -> vector<8x256xf32>
    %cst_102 = arith.constant dense<0.000000e+00> : vector<8x256xf32>
    %481 = tpu.matmul %477, %289, %cst_102 {dimension_numbers = #tpu.dot_dimension_numbers<[1], [0], [0], [1], [0, 0, 1, 1], [], []>} : vector<8x64xf32>, vector<64x256xf32>, vector<8x256xf32> -> vector<8x256xf32>
    %482 = arith.addf %480, %481 : vector<8x256xf32>
    %483 = vector.extract_strided_slice %482 {offsets = [0, 0], sizes = [8, 96], strides = [1, 1]} : vector<8x256xf32> to vector<8x96xf32>
    %484 = vector.extract_strided_slice %482 {offsets = [0, 128], sizes = [8, 96], strides = [1, 1]} : vector<8x256xf32> to vector<8x96xf32>
    %485 = tpu.concatenate %483, %484 in 1 : vector<8x96xf32>, vector<8x96xf32> -> vector<8x192xf32>
    %486 = arith.negf %485 : vector<8x192xf32>
    %487 = math.exp %486 : vector<8x192xf32>
    %cst_103 = arith.constant 1.000000e+00 : f32
    %488 = vector.broadcast %cst_103 : f32 to vector<8x192xf32>
    %489 = arith.addf %488, %487 : vector<8x192xf32>
    %490 = arith.divf %488, %489 : vector<8x192xf32>
    %491 = vector.extract_strided_slice %482 {offsets = [0, 96], sizes = [8, 32], strides = [1, 1]} : vector<8x256xf32> to vector<8x32xf32>
    %492 = vector.extract_strided_slice %482 {offsets = [0, 224], sizes = [8, 32], strides = [1, 1]} : vector<8x256xf32> to vector<8x32xf32>
    %493 = tpu.concatenate %491, %492 in 1 : vector<8x32xf32>, vector<8x32xf32> -> vector<8x64xf32>
    %494 = math.tanh %493 : vector<8x64xf32>
    %495 = vector.extract_strided_slice %490 {offsets = [0, 0], sizes = [8, 32], strides = [1, 1]} : vector<8x192xf32> to vector<8x32xf32>
    %496 = vector.extract_strided_slice %490 {offsets = [0, 96], sizes = [8, 32], strides = [1, 1]} : vector<8x192xf32> to vector<8x32xf32>
    %497 = tpu.concatenate %495, %496 in 1 : vector<8x32xf32>, vector<8x32xf32> -> vector<8x64xf32>
    %498 = vector.extract_strided_slice %490 {offsets = [0, 32], sizes = [8, 32], strides = [1, 1]} : vector<8x192xf32> to vector<8x32xf32>
    %499 = vector.extract_strided_slice %490 {offsets = [0, 128], sizes = [8, 32], strides = [1, 1]} : vector<8x192xf32> to vector<8x32xf32>
    %500 = tpu.concatenate %498, %499 in 1 : vector<8x32xf32>, vector<8x32xf32> -> vector<8x64xf32>
    %501 = vector.extract_strided_slice %490 {offsets = [0, 64], sizes = [8, 32], strides = [1, 1]} : vector<8x192xf32> to vector<8x32xf32>
    %502 = vector.extract_strided_slice %490 {offsets = [0, 160], sizes = [8, 32], strides = [1, 1]} : vector<8x192xf32> to vector<8x32xf32>
    %503 = tpu.concatenate %501, %502 in 1 : vector<8x32xf32>, vector<8x32xf32> -> vector<8x64xf32>
    %504 = arith.mulf %500, %475 : vector<8x64xf32>
    %505 = arith.mulf %497, %494 : vector<8x64xf32>
    %506 = arith.addf %504, %505 : vector<8x64xf32>
    %507 = math.tanh %506 : vector<8x64xf32>
    %508 = arith.mulf %503, %507 : vector<8x64xf32>
    %c56_104 = arith.constant 56 : index
    %c0_105 = arith.constant 0 : index
    %509 = vector.load %arg11[%c56_104, %c0_105] : memref<64x256xf32, #tpu.memory_space<vmem>>, vector<8x128xf32>
    %c0_106 = arith.constant 0 : index
    %c128_107 = arith.constant 128 : index
    %510 = vector.load %arg11[%c0_106, %c128_107] : memref<64x256xf32, #tpu.memory_space<vmem>>, vector<8x128xf32>
    %511 = tpu.concatenate %509, %510 in 1 : vector<8x128xf32>, vector<8x128xf32> -> vector<8x256xf32>
    %cst_108 = arith.constant dense<0.000000e+00> : vector<8x256xf32>
    %512 = tpu.matmul %508, %289, %cst_108 {dimension_numbers = #tpu.dot_dimension_numbers<[1], [0], [0], [1], [0, 0, 1, 1], [], []>} : vector<8x64xf32>, vector<64x256xf32>, vector<8x256xf32> -> vector<8x256xf32>
    %513 = arith.addf %511, %512 : vector<8x256xf32>
    %514 = vector.extract_strided_slice %513 {offsets = [0, 0], sizes = [8, 96], strides = [1, 1]} : vector<8x256xf32> to vector<8x96xf32>
    %515 = vector.extract_strided_slice %513 {offsets = [0, 128], sizes = [8, 96], strides = [1, 1]} : vector<8x256xf32> to vector<8x96xf32>
    %516 = tpu.concatenate %514, %515 in 1 : vector<8x96xf32>, vector<8x96xf32> -> vector<8x192xf32>
    %517 = arith.negf %516 : vector<8x192xf32>
    %518 = math.exp %517 : vector<8x192xf32>
    %cst_109 = arith.constant 1.000000e+00 : f32
    %519 = vector.broadcast %cst_109 : f32 to vector<8x192xf32>
    %520 = arith.addf %519, %518 : vector<8x192xf32>
    %521 = arith.divf %519, %520 : vector<8x192xf32>
    %522 = vector.extract_strided_slice %513 {offsets = [0, 96], sizes = [8, 32], strides = [1, 1]} : vector<8x256xf32> to vector<8x32xf32>
    %523 = vector.extract_strided_slice %513 {offsets = [0, 224], sizes = [8, 32], strides = [1, 1]} : vector<8x256xf32> to vector<8x32xf32>
    %524 = tpu.concatenate %522, %523 in 1 : vector<8x32xf32>, vector<8x32xf32> -> vector<8x64xf32>
    %525 = math.tanh %524 : vector<8x64xf32>
    %526 = vector.extract_strided_slice %521 {offsets = [0, 0], sizes = [8, 32], strides = [1, 1]} : vector<8x192xf32> to vector<8x32xf32>
    %527 = vector.extract_strided_slice %521 {offsets = [0, 96], sizes = [8, 32], strides = [1, 1]} : vector<8x192xf32> to vector<8x32xf32>
    %528 = tpu.concatenate %526, %527 in 1 : vector<8x32xf32>, vector<8x32xf32> -> vector<8x64xf32>
    %529 = vector.extract_strided_slice %521 {offsets = [0, 32], sizes = [8, 32], strides = [1, 1]} : vector<8x192xf32> to vector<8x32xf32>
    %530 = vector.extract_strided_slice %521 {offsets = [0, 128], sizes = [8, 32], strides = [1, 1]} : vector<8x192xf32> to vector<8x32xf32>
    %531 = tpu.concatenate %529, %530 in 1 : vector<8x32xf32>, vector<8x32xf32> -> vector<8x64xf32>
    %532 = vector.extract_strided_slice %521 {offsets = [0, 64], sizes = [8, 32], strides = [1, 1]} : vector<8x192xf32> to vector<8x32xf32>
    %533 = vector.extract_strided_slice %521 {offsets = [0, 160], sizes = [8, 32], strides = [1, 1]} : vector<8x192xf32> to vector<8x32xf32>
    %534 = tpu.concatenate %532, %533 in 1 : vector<8x32xf32>, vector<8x32xf32> -> vector<8x64xf32>
    %535 = arith.mulf %531, %506 : vector<8x64xf32>
    %536 = arith.mulf %528, %525 : vector<8x64xf32>
    %537 = arith.addf %535, %536 : vector<8x64xf32>
    %538 = math.tanh %537 : vector<8x64xf32>
    %539 = arith.mulf %534, %538 : vector<8x64xf32>
    %540 = vector.extract_strided_slice %539 {offsets = [0, 0], sizes = [8, 32], strides = [1, 1]} : vector<8x64xf32> to vector<8x32xf32>
    %541 = vector.extract_strided_slice %322 {offsets = [0, 32], sizes = [8, 32], strides = [1, 1]} : vector<8x64xf32> to vector<8x32xf32>
    %542 = tpu.concatenate %540, %541 in 1 : vector<8x32xf32>, vector<8x32xf32> -> vector<8x64xf32>
    %c0_110 = arith.constant 0 : index
    %c0_111 = arith.constant 0 : index
    %543 = vector.load %arg8[%c0_110, %c0_111] : memref<64x10xf32, #tpu.memory_space<vmem>>, vector<64x10xf32>
    %cst_112 = arith.constant dense<0.000000e+00> : vector<8x10xf32>
    %544 = tpu.matmul %542, %543, %cst_112 {dimension_numbers = #tpu.dot_dimension_numbers<[1], [0], [0], [1], [0, 0, 1, 1], [], []>} : vector<8x64xf32>, vector<64x10xf32>, vector<8x10xf32> -> vector<8x10xf32>
    %c0_113 = arith.constant 0 : index
    %c0_114 = arith.constant 0 : index
    %545 = vector.load %arg9[%c0_113, %c0_114] : memref<1x10xf32, #tpu.memory_space<vmem>>, vector<1x10xf32>
    %546 = vector.broadcast %545 : vector<1x10xf32> to vector<8x10xf32>
    %547 = arith.addf %544, %546 : vector<8x10xf32>
    %c0_115 = arith.constant 0 : index
    %c0_116 = arith.constant 0 : index
    %548 = vector.load %arg10[%c0_115, %c0_116] : memref<8x10xf32, #tpu.memory_space<vmem>>, vector<8x10xf32>
    tpu.vector_store %arg10[%c0_115, %c0_116], %547 {strides = array<i32>} : memref<8x10xf32, #tpu.memory_space<vmem>>, vector<8x10xf32>,
    return
  }
  func.func @transform_0(%arg0: i32) -> (i32, i32) {
    %c0_i32 = arith.constant 0 : i32
    %c0_i32_0 = arith.constant 0 : i32
    %c0_i32_1 = arith.constant 0 : i32
    return %c0_i32, %c0_i32_0 : i32, i32
  }
  func.func @transform_1(%arg0: i32) -> (i32, i32) {
    %c0_i32 = arith.constant 0 : i32
    %c0_i32_0 = arith.constant 0 : i32
    %c0_i32_1 = arith.constant 0 : i32
    return %c0_i32, %c0_i32_0 : i32, i32
  }
  func.func @transform_2(%arg0: i32) -> (i32, i32) {
    %c0_i32 = arith.constant 0 : i32
    %c0_i32_0 = arith.constant 0 : i32
    %c0_i32_1 = arith.constant 0 : i32
    return %c0_i32, %c0_i32_0 : i32, i32
  }
  func.func @transform_3(%arg0: i32) -> (i32, i32) {
    %c0_i32 = arith.constant 0 : i32
    %c0_i32_0 = arith.constant 0 : i32
    %c0_i32_1 = arith.constant 0 : i32
    return %c0_i32, %c0_i32_0 : i32, i32
  }
  func.func @transform_4(%arg0: i32) -> (i32, i32) {
    %c0_i32 = arith.constant 0 : i32
    %c0_i32_0 = arith.constant 0 : i32
    %c0_i32_1 = arith.constant 0 : i32
    return %c0_i32, %c0_i32_0 : i32, i32
  }
  func.func @transform_5(%arg0: i32) -> (i32, i32) {
    %c0_i32 = arith.constant 0 : i32
    %c0_i32_0 = arith.constant 0 : i32
    %c0_i32_1 = arith.constant 0 : i32
    return %c0_i32, %c0_i32_0 : i32, i32
  }
  func.func @transform_6(%arg0: i32) -> (i32, i32) {
    %c0_i32 = arith.constant 0 : i32
    %c0_i32_0 = arith.constant 0 : i32
    %c0_i32_1 = arith.constant 0 : i32
    return %c0_i32, %c0_i32_0 : i32, i32
  }
  func.func @transform_7(%arg0: i32) -> (i32, i32) {
    %c0_i32 = arith.constant 0 : i32
    %c0_i32_0 = arith.constant 0 : i32
    %c0_i32_1 = arith.constant 0 : i32
    return %c0_i32, %c0_i32_0 : i32, i32
  }
  func.func @transform_8(%arg0: i32) -> (i32, i32) {
    %c0_i32 = arith.constant 0 : i32
    %c0_i32_0 = arith.constant 0 : i32
    %c0_i32_1 = arith.constant 0 : i32
    return %c0_i32, %c0_i32_0 : i32, i32
  }
  func.func @transform_9(%arg0: i32) -> (i32, i32) {
    %c0_i32 = arith.constant 0 : i32
    %c0_i32_0 = arith.constant 0 : i32
    %c0_i32_1 = arith.constant 0 : i32
    return %c0_i32, %c0_i32_0 : i32, i32
  }
}

</mosaic_0001>

<llo_original>
// kernel: brnn_forward.1
$region0: #{brnn_forward.1}
  #allocation0 [shape = 'u32[]', space=smem, size = 0x4, offset = 0x4, fixed_abs, tag = 'smem constant byte address 0x4 - core index']
  #allocation1 [shape = 'u32[144,128]{1,0:T(1,128)}', space=vmem, size = 0x12000, scoped, tag = 'internal scratch']
  #allocation2 [shape = 'f32[64,256]{1,0:T(8,128)}', space=vmem, size = 0x10000, scoped, tag = 'scratch operand']
  %s0 = inlined_call_operand.vmem [shape: f32[64,28], index: 0, kind: input, shape index: {}]
  %s1 = inlined_call_operand.vmem [shape: f32[28,256], index: 1, kind: input, shape index: {}]
  %s2 = inlined_call_operand.vmem [shape: f32[64,256], index: 2, kind: input, shape index: {}]
  %s3 = inlined_call_operand.vmem [shape: f32[1,256], index: 3, kind: input, shape index: {}]
  %s4 = inlined_call_operand.hbm [shape: f32[64,256], index: 4, kind: input, shape index: {}]
  %s5 = inlined_call_operand.hbm [shape: f32[64,256], index: 5, kind: input, shape index: {}]
  %s6 = inlined_call_operand.vmem [shape: f32[1,256], index: 6, kind: input, shape index: {}]
  %s7 = inlined_call_operand.vmem [shape: f32[64,10], index: 7, kind: input, shape index: {}]
  %s8 = inlined_call_operand.hbm [shape: f32[1,10], index: 8, kind: input, shape index: {}]
  %s9 = inlined_call_operand.vmem [shape: f32[8,10], index: 9, kind: output, shape index: {}]
  %s10 = sld [smem:[#allocation0]]
  $region58: #{brnn_forward.1} parent=0
    _
  %s12 = ssub.s32 1, %s10
  %s13 = scalar_select 0, %s12, %s10
  $region1: #{brnn_forward.1} parent=0
    #allocation3 [shape = 'u8[65536]{0}', space=vmem, size = 0x10000, scoped, tag = 'input window, operand 4, single buffered']
    #allocation4 [shape = 's32[1]{0}', space=sflag, size = 0x4, scoped, tag = 'scoped memory for brnn_forward.1']
    #allocation5 [shape = 'u8[65536]{0}', space=vmem, size = 0x10000, scoped, tag = 'input window, operand 5, single buffered']
    #allocation6 [shape = 's32[1]{0}', space=sflag, size = 0x4, scoped, tag = 'scoped memory for brnn_forward.1']
    #allocation7 [shape = 'u8[512]{0}', space=vmem, size = 0x400, scoped, tag = 'input window, operand 8, single buffered']
    %14 = vsyncpa [#allocation4], 0
    %15 = vsyncpa [#allocation6], 0
    // Predicated region
    $region2: #{brnn_forward.1} parent=1 // pred_check
      _
    $region3: #{brnn_forward.1} parent=1 // pred_check_branch
      %17 = sbr.rel (0) target = $region5
    $region4: #{brnn_forward.1} parent=1 // pred_region
      _
    $region5: #{brnn_forward.1} parent=1 // pred_fallthru
      _
    // Predicated region
    $region6: #{brnn_forward.1} parent=1 // pred_check
      _
    $region7: #{brnn_forward.1} parent=1 // pred_check_branch
      %19 = sbr.rel (0) target = $region9
    $region8: #{brnn_forward.1} parent=1 // pred_region
      _
    $region9: #{brnn_forward.1} parent=1 // pred_fallthru
      _
    // Predicated region
    $region10: #{brnn_forward.1} parent=1 // pred_check
      _
    $region11: #{brnn_forward.1} parent=1 // pred_check_branch
      %21 = sbr.rel (0) target = $region13
    $region12: #{brnn_forward.1} parent=1 // pred_region
      _
    $region13: #{brnn_forward.1} parent=1 // pred_fallthru
      _
    // Predicated region
    $region14: #{brnn_forward.1} parent=1 // pred_check
      _
    $region15: #{brnn_forward.1} parent=1 // pred_check_branch
      %23 = sbr.rel (0) target = $region17
    $region16: #{brnn_forward.1} parent=1 // pred_region
      _
    $region17: #{brnn_forward.1} parent=1 // pred_fallthru
      _
    // Predicated region
    $region18: #{brnn_forward.1} parent=1 // pred_check
      _
    $region19: #{brnn_forward.1} parent=1 // pred_check_branch
      %25 = sbr.rel (0) target = $region21
    $region20: #{brnn_forward.1} parent=1 // pred_region
      %s27 = ssub.s32 2048, 2048
      %28 = vsyncadd [#allocation4], %s27
      %s29 = sshll.u32 [#allocation3], 4
      %s30 = int_to_ptr.vmem [resolvable:$true] %s29
      %35 = dma.hbm_to_vmem [thread:$0]  %s4, 2048, %s30, [#allocation4], 256, 256, 16
    $region21: #{brnn_forward.1} parent=1 // pred_fallthru
      _
    // Predicated region
    $region22: #{brnn_forward.1} parent=1 // pred_check
      _
    $region23: #{brnn_forward.1} parent=1 // pred_check_branch
      %37 = sbr.rel (0) target = $region25
    $region24: #{brnn_forward.1} parent=1 // pred_region
      %s39 = ssub.s32 2048, 2048
      %40 = vsyncadd [#allocation6], %s39
      %s41 = sshll.u32 [#allocation5], 4
      %s42 = int_to_ptr.vmem [resolvable:$true] %s41
      %47 = dma.hbm_to_vmem [thread:$0]  %s5, 2048, %s42, [#allocation6], 256, 256, 16
    $region25: #{brnn_forward.1} parent=1 // pred_fallthru
      _
    // Predicated region
    $region26: #{brnn_forward.1} parent=1 // pred_check
      _
    $region27: #{brnn_forward.1} parent=1 // pred_check_branch
      %49 = sbr.rel (0) target = $region29
    $region28: #{brnn_forward.1} parent=1 // pred_region
      _
    $region29: #{brnn_forward.1} parent=1 // pred_fallthru
      _
    // Predicated region
    $region30: #{brnn_forward.1} parent=1 // pred_check
      _
    $region31: #{brnn_forward.1} parent=1 // pred_check_branch
      %51 = sbr.rel (0) target = $region33
    $region32: #{brnn_forward.1} parent=1 // pred_region
      _
    $region33: #{brnn_forward.1} parent=1 // pred_fallthru
      _
    // Predicated region
    $region34: #{brnn_forward.1} parent=1 // pred_check
      _
    $region35: #{brnn_forward.1} parent=1 // pred_check_branch
      %53 = sbr.rel (0) target = $region37
    $region36: #{brnn_forward.1} parent=1 // pred_region
      %s55 = ssub.s32 16, 16
      %56 = vsyncadd [#allocation6], %s55
      %s58 = sshll.u32 [#allocation7], 4
      %s59 = int_to_ptr.vmem [resolvable:$true] %s58
      %61 = dma.hbm_to_vmem [thread:$0]  %s8, 16, %s59, [#allocation6]
    $region37: #{brnn_forward.1} parent=1 // pred_fallthru
      _
    // Predicated region
    $region38: #{brnn_forward.1} parent=1 // pred_check
      _
    $region39: #{brnn_forward.1} parent=1 // pred_check_branch
      %63 = sbr.rel (0) target = $region41
    $region40: #{brnn_forward.1} parent=1 // pred_region
      %64 = dma.done [#allocation4], 2048
    $region41: #{brnn_forward.1} parent=1 // pred_fallthru
      _
    // Predicated region
    $region42: #{brnn_forward.1} parent=1 // pred_check
      _
    $region43: #{brnn_forward.1} parent=1 // pred_check_branch
      %66 = sbr.rel (0) target = $region45
    $region44: #{brnn_forward.1} parent=1 // pred_region
      %67 = dma.done [#allocation6], 2048
    $region45: #{brnn_forward.1} parent=1 // pred_fallthru
      _
    // Predicated region
    $region46: #{brnn_forward.1} parent=1 // pred_check
      _
    $region47: #{brnn_forward.1} parent=1 // pred_check_branch
      %69 = sbr.rel (0) target = $region49
    $region48: #{brnn_forward.1} parent=1 // pred_region
      %70 = dma.done [#allocation6], 16
    $region49: #{brnn_forward.1} parent=1 // pred_fallthru
      _
    %v71 = vld [vmem:[%s0] sm:$0xff]
    %v72 = vld [vmem:[%s0 + $0x8] sm:$0xff]
    %v73 = vld [vmem:[%s0 + $0x10] sm:$0xff]
    %v74 = vld [vmem:[%s0 + $0x18] sm:$0xff]
    %v75 = vld [vmem:[%s0 + $0x20] sm:$0xff]
    %v76 = vld [vmem:[%s0 + $0x28] sm:$0xff]
    %v77 = vld [vmem:[%s0 + $0x30] sm:$0xff]
    %v78 = vld [vmem:[%s0 + $0x38] sm:$0xff]
    %v79 = vld [vmem:[%s1] sm:$0xff]
    %v80 = vld [vmem:[%s1 + $0x8] sm:$0xff]
    %v81 = vld [vmem:[%s1 + $0x10] sm:$0xff]
    %v82 = vld [vmem:[%s1 + $0x18] sm:$0xff]
    %v83 = vld [vmem:[%s1 + $0x20] sm:$0xff]
    %v84 = vld [vmem:[%s1 + $0x28] sm:$0xff]
    %v85 = vld [vmem:[%s1 + $0x30] sm:$0xf]
    %v86 = vld [vmem:[%s1 + $0x38] sm:$0xf]
    %v87 = vld [vmem:[%s3] sm:$0x3]
    %v89 = vlaneseq
    %v90 = vshrl.u32 %v89, 7
    %v91 = vsub.s32 0, %v90
    %v92 = vrot.slane %v87, %v91
    %v93 = vlaneseq
    %v94 = vshrl.u32 %v93, 7
    %v95 = vsub.s32 1, %v94
    %v96 = vrot.slane %v87, %v95
    %vm99 = vcmask 228352
    %v101 = vsel %vm99, %v71, 0
    %v104 = vsel %vm99, %v72, 0
    %v107 = vsel %vm99, %v73, 0
    %v110 = vsel %vm99, %v74, 0
    %v113 = vsel %vm99, %v75, 0
    %v116 = vsel %vm99, %v76, 0
    %v119 = vsel %vm99, %v77, 0
    %v122 = vsel %vm99, %v78, 0
    %vm124 = vcmask 1043456
    %v126 = vsel %vm124, %v85, 0
    %v129 = vsel %vm124, %v86, 0
    %131 = vmatprep.subr.mxu0 %v80
    %132 = vmatpush1.msra.mxu0 %v79
    %133 = vmatprep.subr.mxu0 %v82
    %134 = vmatpush1.msra.mxu0 %v81
    %135 = vmatprep.subr.mxu0 %v84
    %136 = vmatpush1.msra.mxu0 %v83
    %137 = vmatprep.subr.mxu0 %v129
    %138 = vmatpush1.msra.mxu0 %v126
    %139 = vmatprep.subr.mxu0 0.0
    %140 = vmatpush1.msra.mxu0 0.0
    %141 = vmatprep.subr.mxu0 0.0
    %142 = vmatpush1.msra.mxu0 0.0
    %143 = vmatprep.subr.mxu0 0.0
    %144 = vmatpush1.msra.mxu0 0.0
    %145 = vmatprep.subr.mxu0 0.0
    %146 = vmatpush1.msra.mxu0 0.0
    %147 = vmatprep.subr.mxu0 0.0
    %148 = vmatpush1.msra.mxu0 0.0
    %149 = vmatprep.subr.mxu0 0.0
    %150 = vmatpush1.msra.mxu0 0.0
    %151 = vmatprep.subr.mxu0 0.0
    %152 = vmatpush1.msra.mxu0 0.0
    %153 = vmatprep.subr.mxu0 0.0
    %154 = vmatpush1.msra.mxu0 0.0
    %155 = vmatprep.subr.mxu0 0.0
    %156 = vmatpush1.msra.mxu0 0.0
    %157 = vmatprep.subr.mxu0 0.0
    %158 = vmatpush1.msra.mxu0 0.0
    %159 = vmatprep.subr.mxu0 0.0
    %160 = vmatpush1.msra.mxu0 0.0
    %161 = vmatprep.subr.mxu0 0.0
    %162 = vmatpush1.msra.mxu0 0.0
    %163 = vmatprep.subr.mxu0 0.0
    %164 = vmatpush1.msra.mxu0 0.0
    %165 = vmatprep.subr.mxu0 0.0
    %166 = vmatpush1.msra.mxu0 0.0
    %167 = vmatprep.subr.mxu0 0.0
    %168 = vmatpush1.msra.mxu0 0.0
    %169 = vmatprep.subr.mxu0 0.0
    %170 = vmatpush1.msra.mxu0 0.0
    %171 = vmatprep.subr.mxu0 0.0
    %172 = vmatpush1.msra.mxu0 0.0
    %173 = vmatprep.subr.mxu0 0.0
    %174 = vmatpush1.msra.mxu0 0.0
    %175 = vmatprep.subr.mxu0 0.0
    %176 = vmatpush1.msra.mxu0 0.0
    %177 = vmatprep.subr.mxu0 0.0
    %178 = vmatpush1.msra.mxu0 0.0
    %179 = vmatprep.subr.mxu0 0.0
    %180 = vmatpush1.msra.mxu0 0.0
    %181 = vmatprep.subr.mxu0 0.0
    %182 = vmatpush1.msra.mxu0 0.0
    %183 = vmatprep.subr.mxu0 0.0
    %184 = vmatpush1.msra.mxu0 0.0
    %185 = vmatprep.subr.mxu0 0.0
    %186 = vmatpush1.msra.mxu0 0.0
    %187 = vmatprep.subr.mxu0 0.0
    %188 = vmatpush1.msra.mxu0 0.0
    %189 = vmatprep.subr.mxu0 0.0
    %190 = vmatpush1.msra.mxu0 0.0
    %191 = vmatprep.subr.mxu0 0.0
    %192 = vmatpush1.msra.mxu0 0.0
    %193 = vmatprep.subr.mxu0 0.0
    %194 = vmatpush1.msra.mxu0 0.0
    %195 = vmatprep.mubr.f32.mxu0 0.0
    %196 = vmatmul.mubr.f32.gmra.mrb[0].mxu0 %v101
    %v197 = vpop.f32.mrb[0].mxu0
    %v198 = vadd.f32 %v92, %v197
    %v199 = vpop.f32.mrb[0].mxu0
    %v200 = vadd.f32 %v96, %v199
    %201 = vmatprep.mubr.f32.mxu0 0.0
    %202 = vmatmul.mubr.f32.gmra.mrb[0].mxu0 %v104
    %v203 = vpop.f32.mrb[0].mxu0
    %v204 = vadd.f32 %v92, %v203
    %v205 = vpop.f32.mrb[0].mxu0
    %v206 = vadd.f32 %v96, %v205
    %207 = vmatprep.mubr.f32.mxu0 0.0
    %208 = vmatmul.mubr.f32.gmra.mrb[0].mxu0 %v107
    %v209 = vpop.f32.mrb[0].mxu0
    %v210 = vadd.f32 %v92, %v209
    %v211 = vpop.f32.mrb[0].mxu0
    %v212 = vadd.f32 %v96, %v211
    %213 = vmatprep.mubr.f32.mxu0 0.0
    %214 = vmatmul.mubr.f32.gmra.mrb[0].mxu0 %v110
    %v215 = vpop.f32.mrb[0].mxu0
    %v216 = vadd.f32 %v92, %v215
    %v217 = vpop.f32.mrb[0].mxu0
    %v218 = vadd.f32 %v96, %v217
    %219 = vmatprep.mubr.f32.mxu0 0.0
    %220 = vmatmul.mubr.f32.gmra.mrb[0].mxu0 %v113
    %v221 = vpop.f32.mrb[0].mxu0
    %v222 = vadd.f32 %v92, %v221
    %v223 = vpop.f32.mrb[0].mxu0
    %v224 = vadd.f32 %v96, %v223
    %225 = vmatprep.mubr.f32.mxu0 0.0
    %226 = vmatmul.mubr.f32.gmra.mrb[0].mxu0 %v116
    %v227 = vpop.f32.mrb[0].mxu0
    %v228 = vadd.f32 %v92, %v227
    %v229 = vpop.f32.mrb[0].mxu0
    %v230 = vadd.f32 %v96, %v229
    %231 = vmatprep.mubr.f32.mxu0 0.0
    %232 = vmatmul.mubr.f32.gmra.mrb[0].mxu0 %v119
    %v233 = vpop.f32.mrb[0].mxu0
    %v234 = vadd.f32 %v92, %v233
    %v235 = vpop.f32.mrb[0].mxu0
    %v236 = vadd.f32 %v96, %v235
    %237 = vmatprep.mubr.f32.mxu0 0.0
    %238 = vmatmul.mubr.f32.gmra.mrb[0].mxu0 %v122
    %v239 = vpop.f32.mrb[0].mxu0
    %v240 = vadd.f32 %v92, %v239
    %v241 = vpop.f32.mrb[0].mxu0
    %v242 = vadd.f32 %v96, %v241
    %243 = vdwg.mxu0
    %244 = vst [vmem:[#allocation2] sm:$0xff] %v198
    %245 = vst [vmem:[#allocation2 + $0x8] sm:$0xff] %v200
    %246 = vst [vmem:[#allocation2 + $0x10] sm:$0xff] %v204
    %247 = vst [vmem:[#allocation2 + $0x18] sm:$0xff] %v206
    %248 = vst [vmem:[#allocation2 + $0x20] sm:$0xff] %v210
    %249 = vst [vmem:[#allocation2 + $0x28] sm:$0xff] %v212
    %250 = vst [vmem:[#allocation2 + $0x30] sm:$0xff] %v216
    %251 = vst [vmem:[#allocation2 + $0x38] sm:$0xff] %v218
    %252 = vst [vmem:[#allocation2 + $0x40] sm:$0xff] %v222
    %253 = vst [vmem:[#allocation2 + $0x48] sm:$0xff] %v224
    %254 = vst [vmem:[#allocation2 + $0x50] sm:$0xff] %v228
    %255 = vst [vmem:[#allocation2 + $0x58] sm:$0xff] %v230
    %256 = vst [vmem:[#allocation2 + $0x60] sm:$0xff] %v234
    %257 = vst [vmem:[#allocation2 + $0x68] sm:$0xff] %v236
    %258 = vst [vmem:[#allocation2 + $0x70] sm:$0xff] %v240
    %259 = vst [vmem:[#allocation2 + $0x78] sm:$0xff] %v242
    %v260 = vld [vmem:[%s2] sm:$0xff]
    %v261 = vld [vmem:[%s2 + $0x8] sm:$0xff]
    %v262 = vld [vmem:[%s2 + $0x10] sm:$0xff]
    %v263 = vld [vmem:[%s2 + $0x18] sm:$0xff]
    %v264 = vld [vmem:[%s2 + $0x20] sm:$0xff]
    %v265 = vld [vmem:[%s2 + $0x28] sm:$0xff]
    %v266 = vld [vmem:[%s2 + $0x30] sm:$0xff]
    %v267 = vld [vmem:[%s2 + $0x38] sm:$0xff]
    %v268 = vld [vmem:[%s2 + $0x40] sm:$0xff]
    %v269 = vld [vmem:[%s2 + $0x48] sm:$0xff]
    %v270 = vld [vmem:[%s2 + $0x50] sm:$0xff]
    %v271 = vld [vmem:[%s2 + $0x58] sm:$0xff]
    %v272 = vld [vmem:[%s2 + $0x60] sm:$0xff]
    %v273 = vld [vmem:[%s2 + $0x68] sm:$0xff]
    %v274 = vld [vmem:[%s2 + $0x70] sm:$0xff]
    %v275 = vld [vmem:[%s2 + $0x78] sm:$0xff]
    %v276 = vld [vmem:[#allocation2] sm:$0xff]
    %v277 = vld [vmem:[#allocation2 + $0x78] sm:$0xff]
    %vm278 = vcmask 523264
    %v280 = vsel %vm278, 0.0, 0
    %282 = vmatprep.subr.mxu0 %v261
    %283 = vmatpush1.msra.mxu0 %v260
    %284 = vmatprep.subr.mxu0 %v263
    %285 = vmatpush1.msra.mxu0 %v262
    %286 = vmatprep.subr.mxu0 %v265
    %287 = vmatpush1.msra.mxu0 %v264
    %288 = vmatprep.subr.mxu0 %v267
    %289 = vmatpush1.msra.mxu0 %v266
    %290 = vmatprep.subr.mxu0 %v269
    %291 = vmatpush1.msra.mxu0 %v268
    %292 = vmatprep.subr.mxu0 %v271
    %293 = vmatpush1.msra.mxu0 %v270
    %294 = vmatprep.subr.mxu0 %v273
    %295 = vmatpush1.msra.mxu0 %v272
    %296 = vmatprep.subr.mxu0 %v275
    %297 = vmatpush1.msra.mxu0 %v274
    %298 = vmatprep.subr.mxu0 0.0
    %299 = vmatpush1.msra.mxu0 0.0
    %300 = vmatprep.subr.mxu0 0.0
    %301 = vmatpush1.msra.mxu0 0.0
    %302 = vmatprep.subr.mxu0 0.0
    %303 = vmatpush1.msra.mxu0 0.0
    %304 = vmatprep.subr.mxu0 0.0
    %305 = vmatpush1.msra.mxu0 0.0
    %306 = vmatprep.subr.mxu0 0.0
    %307 = vmatpush1.msra.mxu0 0.0
    %308 = vmatprep.subr.mxu0 0.0
    %309 = vmatpush1.msra.mxu0 0.0
    %310 = vmatprep.subr.mxu0 0.0
    %311 = vmatpush1.msra.mxu0 0.0
    %312 = vmatprep.subr.mxu0 0.0
    %313 = vmatpush1.msra.mxu0 0.0
    %314 = vmatprep.subr.mxu0 0.0
    %315 = vmatpush1.msra.mxu0 0.0
    %316 = vmatprep.subr.mxu0 0.0
    %317 = vmatpush1.msra.mxu0 0.0
    %318 = vmatprep.subr.mxu0 0.0
    %319 = vmatpush1.msra.mxu0 0.0
    %320 = vmatprep.subr.mxu0 0.0
    %321 = vmatpush1.msra.mxu0 0.0
    %322 = vmatprep.subr.mxu0 0.0
    %323 = vmatpush1.msra.mxu0 0.0
    %324 = vmatprep.subr.mxu0 0.0
    %325 = vmatpush1.msra.mxu0 0.0
    %326 = vmatprep.subr.mxu0 0.0
    %327 = vmatpush1.msra.mxu0 0.0
    %328 = vmatprep.subr.mxu0 0.0
    %329 = vmatpush1.msra.mxu0 0.0
    %330 = vmatprep.subr.mxu0 0.0
    %331 = vmatpush1.msra.mxu0 0.0
    %332 = vmatprep.subr.mxu0 0.0
    %333 = vmatpush1.msra.mxu0 0.0
    %334 = vmatprep.subr.mxu0 0.0
    %335 = vmatpush1.msra.mxu0 0.0
    %336 = vmatprep.subr.mxu0 0.0
    %337 = vmatpush1.msra.mxu0 0.0
    %338 = vmatprep.subr.mxu0 0.0
    %339 = vmatpush1.msra.mxu0 0.0
    %340 = vmatprep.subr.mxu0 0.0
    %341 = vmatpush1.msra.mxu0 0.0
    %342 = vmatprep.subr.mxu0 0.0
    %343 = vmatpush1.msra.mxu0 0.0
    %344 = vmatprep.subr.mxu0 0.0
    %345 = vmatpush1.msra.mxu0 0.0
    %346 = vmatprep.mubr.f32.mxu0 0.0
    %347 = vmatmul.mubr.f32.gmra.mrb[0].mxu0 %v280
    %v348 = vpop.f32.mrb[0].mxu0
    %v349 = vadd.f32 0.0, %v348
    %v350 = vpop.f32.mrb[0].mxu0
    %v351 = vadd.f32 0.0, %v350
    %352 = vdwg.mxu0
    %v353 = vadd.f32 %v276, %v349
    %v354 = vadd.f32 %v277, %v351
    %356 = vrot.lane.b32.xlu0 %v354, 96
    %v357 = vpop.permute.xlu0 %356
    %vm359 = vcmask 785408
    %v360 = vsel %vm359, %v353, %v357
    %v361 = vxor.u32 %v360, 2147483648
    %v362 = vxor.u32 %v357, 2147483648
    %v363 = vmul.f32 %v361, 1.442695
    %v364 = vpow.pop %v363
    %v365 = vmul.f32 %v362, 1.442695
    %v366 = vpow.pop %v365
    %v367 = vadd.f32 %v364, 1.0
    %v368 = vadd.f32 %v366, 1.0
    %v369 = vrcp.pop %v367
    %v370 = vmul.f32 1.0, %v369
    %v371 = vrcp.pop %v368
    %v372 = vmul.f32 1.0, %v371
    %374 = vrot.lane.b32.xlu0 %v353, 32
    %v375 = vpop.permute.xlu0 %374
    %377 = vrot.lane.b32.xlu0 %v354, 64
    %v378 = vpop.permute.xlu0 %377
    %vm380 = vcmask 261120
    %v381 = vsel %vm380, %v375, %v378
    %v382 = vtanh.pop %v381
    %384 = vrot.lane.b32.xlu0 %v370, 64
    %v385 = vpop.permute.xlu0 %384
    %v387 = vsel %vm380, %v370, %v385
    %388 = vrot.lane.b32.xlu0 %v370, 96
    %v389 = vpop.permute.xlu0 %388
    %392 = vrot.lane.b32.xlu0 %v372, 32
    %v393 = vpop.permute.xlu0 %392
    %v395 = vsel %vm380, %v389, %v393
    %v396 = vsel %vm380, %v385, %v372
    %v397 = vmul.f32 %v395, 0.0
    %v398 = vmul.f32 %v387, %v382
    %v399 = vadd.f32 %v397, %v398
    %v400 = vtanh.pop %v399
    %v401 = vmul.f32 %v396, %v400
    %v402 = vld [vmem:[#allocation2 + $0x10] sm:$0xff]
    %v403 = vld [vmem:[#allocation2 + $0x68] sm:$0xff]
    %v405 = vsel %vm278, %v401, 0
    %407 = vmatprep.subr.mxu0 %v261
    %408 = vmatpush1.msra.mxu0 %v260
    %409 = vmatprep.subr.mxu0 %v263
    %410 = vmatpush1.msra.mxu0 %v262
    %411 = vmatprep.subr.mxu0 %v265
    %412 = vmatpush1.msra.mxu0 %v264
    %413 = vmatprep.subr.mxu0 %v267
    %414 = vmatpush1.msra.mxu0 %v266
    %415 = vmatprep.subr.mxu0 %v269
    %416 = vmatpush1.msra.mxu0 %v268
    %417 = vmatprep.subr.mxu0 %v271
    %418 = vmatpush1.msra.mxu0 %v270
    %419 = vmatprep.subr.mxu0 %v273
    %420 = vmatpush1.msra.mxu0 %v272
    %421 = vmatprep.subr.mxu0 %v275
    %422 = vmatpush1.msra.mxu0 %v274
    %423 = vmatprep.subr.mxu0 0.0
    %424 = vmatpush1.msra.mxu0 0.0
    %425 = vmatprep.subr.mxu0 0.0
    %426 = vmatpush1.msra.mxu0 0.0
    %427 = vmatprep.subr.mxu0 0.0
    %428 = vmatpush1.msra.mxu0 0.0
    %429 = vmatprep.subr.mxu0 0.0
    %430 = vmatpush1.msra.mxu0 0.0
    %431 = vmatprep.subr.mxu0 0.0
    %432 = vmatpush1.msra.mxu0 0.0
    %433 = vmatprep.subr.mxu0 0.0
    %434 = vmatpush1.msra.mxu0 0.0
    %435 = vmatprep.subr.mxu0 0.0
    %436 = vmatpush1.msra.mxu0 0.0
    %437 = vmatprep.subr.mxu0 0.0
    %438 = vmatpush1.msra.mxu0 0.0
    %439 = vmatprep.subr.mxu0 0.0
    %440 = vmatpush1.msra.mxu0 0.0
    %441 = vmatprep.subr.mxu0 0.0
    %442 = vmatpush1.msra.mxu0 0.0
    %443 = vmatprep.subr.mxu0 0.0
    %444 = vmatpush1.msra.mxu0 0.0
    %445 = vmatprep.subr.mxu0 0.0
    %446 = vmatpush1.msra.mxu0 0.0
    %447 = vmatprep.subr.mxu0 0.0
    %448 = vmatpush1.msra.mxu0 0.0
    %449 = vmatprep.subr.mxu0 0.0
    %450 = vmatpush1.msra.mxu0 0.0
    %451 = vmatprep.subr.mxu0 0.0
    %452 = vmatpush1.msra.mxu0 0.0
    %453 = vmatprep.subr.mxu0 0.0
    %454 = vmatpush1.msra.mxu0 0.0
    %455 = vmatprep.subr.mxu0 0.0
    %456 = vmatpush1.msra.mxu0 0.0
    %457 = vmatprep.subr.mxu0 0.0
    %458 = vmatpush1.msra.mxu0 0.0
    %459 = vmatprep.subr.mxu0 0.0
    %460 = vmatpush1.msra.mxu0 0.0
    %461 = vmatprep.subr.mxu0 0.0
    %462 = vmatpush1.msra.mxu0 0.0
    %463 = vmatprep.subr.mxu0 0.0
    %464 = vmatpush1.msra.mxu0 0.0
    %465 = vmatprep.subr.mxu0 0.0
    %466 = vmatpush1.msra.mxu0 0.0
    %467 = vmatprep.subr.mxu0 0.0
    %468 = vmatpush1.msra.mxu0 0.0
    %469 = vmatprep.subr.mxu0 0.0
    %470 = vmatpush1.msra.mxu0 0.0
    %471 = vmatprep.mubr.f32.mxu0 0.0
    %472 = vmatmul.mubr.f32.gmra.mrb[0].mxu0 %v405
    %v473 = vpop.f32.mrb[0].mxu0
    %v474 = vadd.f32 0.0, %v473
    %v475 = vpop.f32.mrb[0].mxu0
    %v476 = vadd.f32 0.0, %v475
    %477 = vdwg.mxu0
    %v478 = vadd.f32 %v402, %v474
    %v479 = vadd.f32 %v403, %v476
    %481 = vrot.lane.b32.xlu0 %v479, 96
    %v482 = vpop.permute.xlu0 %481
    %v484 = vsel %vm359, %v478, %v482
    %v485 = vxor.u32 %v484, 2147483648
    %v486 = vxor.u32 %v482, 2147483648
    %v487 = vmul.f32 %v485, 1.442695
    %v488 = vpow.pop %v487
    %v489 = vmul.f32 %v486, 1.442695
    %v490 = vpow.pop %v489
    %v491 = vadd.f32 %v488, 1.0
    %v492 = vadd.f32 %v490, 1.0
    %v493 = vrcp.pop %v491
    %v494 = vmul.f32 1.0, %v493
    %v495 = vrcp.pop %v492
    %v496 = vmul.f32 1.0, %v495
    %498 = vrot.lane.b32.xlu0 %v478, 32
    %v499 = vpop.permute.xlu0 %498
    %501 = vrot.lane.b32.xlu0 %v479, 64
    %v502 = vpop.permute.xlu0 %501
    %v504 = vsel %vm380, %v499, %v502
    %v505 = vtanh.pop %v504
    %507 = vrot.lane.b32.xlu0 %v494, 64
    %v508 = vpop.permute.xlu0 %507
    %v510 = vsel %vm380, %v494, %v508
    %511 = vrot.lane.b32.xlu0 %v494, 96
    %v512 = vpop.permute.xlu0 %511
    %515 = vrot.lane.b32.xlu0 %v496, 32
    %v516 = vpop.permute.xlu0 %515
    %v518 = vsel %vm380, %v512, %v516
    %v519 = vsel %vm380, %v508, %v496
    %v520 = vmul.f32 %v518, %v399
    %v521 = vmul.f32 %v510, %v505
    %v522 = vadd.f32 %v520, %v521
    %v523 = vtanh.pop %v522
    %v524 = vmul.f32 %v519, %v523
    %v525 = vld [vmem:[#allocation2 + $0x20] sm:$0xff]
    %v526 = vld [vmem:[#allocation2 + $0x58] sm:$0xff]
    %v528 = vsel %vm278, %v524, 0
    %530 = vmatprep.subr.mxu0 %v261
    %531 = vmatpush1.msra.mxu0 %v260
    %532 = vmatprep.subr.mxu0 %v263
    %533 = vmatpush1.msra.mxu0 %v262
    %534 = vmatprep.subr.mxu0 %v265
    %535 = vmatpush1.msra.mxu0 %v264
    %536 = vmatprep.subr.mxu0 %v267
    %537 = vmatpush1.msra.mxu0 %v266
    %538 = vmatprep.subr.mxu0 %v269
    %539 = vmatpush1.msra.mxu0 %v268
    %540 = vmatprep.subr.mxu0 %v271
    %541 = vmatpush1.msra.mxu0 %v270
    %542 = vmatprep.subr.mxu0 %v273
    %543 = vmatpush1.msra.mxu0 %v272
    %544 = vmatprep.subr.mxu0 %v275
    %545 = vmatpush1.msra.mxu0 %v274
    %546 = vmatprep.subr.mxu0 0.0
    %547 = vmatpush1.msra.mxu0 0.0
    %548 = vmatprep.subr.mxu0 0.0
    %549 = vmatpush1.msra.mxu0 0.0
    %550 = vmatprep.subr.mxu0 0.0
    %551 = vmatpush1.msra.mxu0 0.0
    %552 = vmatprep.subr.mxu0 0.0
    %553 = vmatpush1.msra.mxu0 0.0
    %554 = vmatprep.subr.mxu0 0.0
    %555 = vmatpush1.msra.mxu0 0.0
    %556 = vmatprep.subr.mxu0 0.0
    %557 = vmatpush1.msra.mxu0 0.0
    %558 = vmatprep.subr.mxu0 0.0
    %559 = vmatpush1.msra.mxu0 0.0
    %560 = vmatprep.subr.mxu0 0.0
    %561 = vmatpush1.msra.mxu0 0.0
    %562 = vmatprep.subr.mxu0 0.0
    %563 = vmatpush1.msra.mxu0 0.0
    %564 = vmatprep.subr.mxu0 0.0
    %565 = vmatpush1.msra.mxu0 0.0
    %566 = vmatprep.subr.mxu0 0.0
    %567 = vmatpush1.msra.mxu0 0.0
    %568 = vmatprep.subr.mxu0 0.0
    %569 = vmatpush1.msra.mxu0 0.0
    %570 = vmatprep.subr.mxu0 0.0
    %571 = vmatpush1.msra.mxu0 0.0
    %572 = vmatprep.subr.mxu0 0.0
    %573 = vmatpush1.msra.mxu0 0.0
    %574 = vmatprep.subr.mxu0 0.0
    %575 = vmatpush1.msra.mxu0 0.0
    %576 = vmatprep.subr.mxu0 0.0
    %577 = vmatpush1.msra.mxu0 0.0
    %578 = vmatprep.subr.mxu0 0.0
    %579 = vmatpush1.msra.mxu0 0.0
    %580 = vmatprep.subr.mxu0 0.0
    %581 = vmatpush1.msra.mxu0 0.0
    %582 = vmatprep.subr.mxu0 0.0
    %583 = vmatpush1.msra.mxu0 0.0
    %584 = vmatprep.subr.mxu0 0.0
    %585 = vmatpush1.msra.mxu0 0.0
    %586 = vmatprep.subr.mxu0 0.0
    %587 = vmatpush1.msra.mxu0 0.0
    %588 = vmatprep.subr.mxu0 0.0
    %589 = vmatpush1.msra.mxu0 0.0
    %590 = vmatprep.subr.mxu0 0.0
    %591 = vmatpush1.msra.mxu0 0.0
    %592 = vmatprep.subr.mxu0 0.0
    %593 = vmatpush1.msra.mxu0 0.0
    %594 = vmatprep.mubr.f32.mxu0 0.0
    %595 = vmatmul.mubr.f32.gmra.mrb[0].mxu0 %v528
    %v596 = vpop.f32.mrb[0].mxu0
    %v597 = vadd.f32 0.0, %v596
    %v598 = vpop.f32.mrb[0].mxu0
    %v599 = vadd.f32 0.0, %v598
    %600 = vdwg.mxu0
    %v601 = vadd.f32 %v525, %v597
    %v602 = vadd.f32 %v526, %v599
    %604 = vrot.lane.b32.xlu0 %v602, 96
    %v605 = vpop.permute.xlu0 %604
    %v607 = vsel %vm359, %v601, %v605
    %v608 = vxor.u32 %v607, 2147483648
    %v609 = vxor.u32 %v605, 2147483648
    %v610 = vmul.f32 %v608, 1.442695
    %v611 = vpow.pop %v610
    %v612 = vmul.f32 %v609, 1.442695
    %v613 = vpow.pop %v612
    %v614 = vadd.f32 %v611, 1.0
    %v615 = vadd.f32 %v613, 1.0
    %v616 = vrcp.pop %v614
    %v617 = vmul.f32 1.0, %v616
    %v618 = vrcp.pop %v615
    %v619 = vmul.f32 1.0, %v618
    %621 = vrot.lane.b32.xlu0 %v601, 32
    %v622 = vpop.permute.xlu0 %621
    %624 = vrot.lane.b32.xlu0 %v602, 64
    %v625 = vpop.permute.xlu0 %624
    %v627 = vsel %vm380, %v622, %v625
    %v628 = vtanh.pop %v627
    %630 = vrot.lane.b32.xlu0 %v617, 64
    %v631 = vpop.permute.xlu0 %630
    %v633 = vsel %vm380, %v617, %v631
    %634 = vrot.lane.b32.xlu0 %v617, 96
    %v635 = vpop.permute.xlu0 %634
    %638 = vrot.lane.b32.xlu0 %v619, 32
    %v639 = vpop.permute.xlu0 %638
    %v641 = vsel %vm380, %v635, %v639
    %v642 = vsel %vm380, %v631, %v619
    %v643 = vmul.f32 %v641, %v522
    %v644 = vmul.f32 %v633, %v628
    %v645 = vadd.f32 %v643, %v644
    %v646 = vtanh.pop %v645
    %v647 = vmul.f32 %v642, %v646
    %v648 = vld [vmem:[#allocation2 + $0x30] sm:$0xff]
    %v649 = vld [vmem:[#allocation2 + $0x48] sm:$0xff]
    %v651 = vsel %vm278, %v647, 0
    %653 = vmatprep.subr.mxu0 %v261
    %654 = vmatpush1.msra.mxu0 %v260
    %655 = vmatprep.subr.mxu0 %v263
    %656 = vmatpush1.msra.mxu0 %v262
    %657 = vmatprep.subr.mxu0 %v265
    %658 = vmatpush1.msra.mxu0 %v264
    %659 = vmatprep.subr.mxu0 %v267
    %660 = vmatpush1.msra.mxu0 %v266
    %661 = vmatprep.subr.mxu0 %v269
    %662 = vmatpush1.msra.mxu0 %v268
    %663 = vmatprep.subr.mxu0 %v271
    %664 = vmatpush1.msra.mxu0 %v270
    %665 = vmatprep.subr.mxu0 %v273
    %666 = vmatpush1.msra.mxu0 %v272
    %667 = vmatprep.subr.mxu0 %v275
    %668 = vmatpush1.msra.mxu0 %v274
    %669 = vmatprep.subr.mxu0 0.0
    %670 = vmatpush1.msra.mxu0 0.0
    %671 = vmatprep.subr.mxu0 0.0
    %672 = vmatpush1.msra.mxu0 0.0
    %673 = vmatprep.subr.mxu0 0.0
    %674 = vmatpush1.msra.mxu0 0.0
    %675 = vmatprep.subr.mxu0 0.0
    %676 = vmatpush1.msra.mxu0 0.0
    %677 = vmatprep.subr.mxu0 0.0
    %678 = vmatpush1.msra.mxu0 0.0
    %679 = vmatprep.subr.mxu0 0.0
    %680 = vmatpush1.msra.mxu0 0.0
    %681 = vmatprep.subr.mxu0 0.0
    %682 = vmatpush1.msra.mxu0 0.0
    %683 = vmatprep.subr.mxu0 0.0
    %684 = vmatpush1.msra.mxu0 0.0
    %685 = vmatprep.subr.mxu0 0.0
    %686 = vmatpush1.msra.mxu0 0.0
    %687 = vmatprep.subr.mxu0 0.0
    %688 = vmatpush1.msra.mxu0 0.0
    %689 = vmatprep.subr.mxu0 0.0
    %690 = vmatpush1.msra.mxu0 0.0
    %691 = vmatprep.subr.mxu0 0.0
    %692 = vmatpush1.msra.mxu0 0.0
    %693 = vmatprep.subr.mxu0 0.0
    %694 = vmatpush1.msra.mxu0 0.0
    %695 = vmatprep.subr.mxu0 0.0
    %696 = vmatpush1.msra.mxu0 0.0
    %697 = vmatprep.subr.mxu0 0.0
    %698 = vmatpush1.msra.mxu0 0.0
    %699 = vmatprep.subr.mxu0 0.0
    %700 = vmatpush1.msra.mxu0 0.0
    %701 = vmatprep.subr.mxu0 0.0
    %702 = vmatpush1.msra.mxu0 0.0
    %703 = vmatprep.subr.mxu0 0.0
    %704 = vmatpush1.msra.mxu0 0.0
    %705 = vmatprep.subr.mxu0 0.0
    %706 = vmatpush1.msra.mxu0 0.0
    %707 = vmatprep.subr.mxu0 0.0
    %708 = vmatpush1.msra.mxu0 0.0
    %709 = vmatprep.subr.mxu0 0.0
    %710 = vmatpush1.msra.mxu0 0.0
    %711 = vmatprep.subr.mxu0 0.0
    %712 = vmatpush1.msra.mxu0 0.0
    %713 = vmatprep.subr.mxu0 0.0
    %714 = vmatpush1.msra.mxu0 0.0
    %715 = vmatprep.subr.mxu0 0.0
    %716 = vmatpush1.msra.mxu0 0.0
    %717 = vmatprep.mubr.f32.mxu0 0.0
    %718 = vmatmul.mubr.f32.gmra.mrb[0].mxu0 %v651
    %v719 = vpop.f32.mrb[0].mxu0
    %v720 = vadd.f32 0.0, %v719
    %v721 = vpop.f32.mrb[0].mxu0
    %v722 = vadd.f32 0.0, %v721
    %723 = vdwg.mxu0
    %v724 = vadd.f32 %v648, %v720
    %v725 = vadd.f32 %v649, %v722
    %727 = vrot.lane.b32.xlu0 %v725, 96
    %v728 = vpop.permute.xlu0 %727
    %v730 = vsel %vm359, %v724, %v728
    %v731 = vxor.u32 %v730, 2147483648
    %v732 = vxor.u32 %v728, 2147483648
    %v733 = vmul.f32 %v731, 1.442695
    %v734 = vpow.pop %v733
    %v735 = vmul.f32 %v732, 1.442695
    %v736 = vpow.pop %v735
    %v737 = vadd.f32 %v734, 1.0
    %v738 = vadd.f32 %v736, 1.0
    %v739 = vrcp.pop %v737
    %v740 = vmul.f32 1.0, %v739
    %v741 = vrcp.pop %v738
    %v742 = vmul.f32 1.0, %v741
    %744 = vrot.lane.b32.xlu0 %v724, 32
    %v745 = vpop.permute.xlu0 %744
    %747 = vrot.lane.b32.xlu0 %v725, 64
    %v748 = vpop.permute.xlu0 %747
    %v750 = vsel %vm380, %v745, %v748
    %v751 = vtanh.pop %v750
    %753 = vrot.lane.b32.xlu0 %v740, 64
    %v754 = vpop.permute.xlu0 %753
    %v756 = vsel %vm380, %v740, %v754
    %757 = vrot.lane.b32.xlu0 %v740, 96
    %v758 = vpop.permute.xlu0 %757
    %761 = vrot.lane.b32.xlu0 %v742, 32
    %v762 = vpop.permute.xlu0 %761
    %v764 = vsel %vm380, %v758, %v762
    %v765 = vsel %vm380, %v754, %v742
    %v766 = vmul.f32 %v764, %v645
    %v767 = vmul.f32 %v756, %v751
    %v768 = vadd.f32 %v766, %v767
    %v769 = vtanh.pop %v768
    %v770 = vmul.f32 %v765, %v769
    %v771 = vld [vmem:[#allocation2 + $0x40] sm:$0xff]
    %v772 = vld [vmem:[#allocation2 + $0x38] sm:$0xff]
    %v774 = vsel %vm278, %v770, 0
    %776 = vmatprep.subr.mxu0 %v261
    %777 = vmatpush1.msra.mxu0 %v260
    %778 = vmatprep.subr.mxu0 %v263
    %779 = vmatpush1.msra.mxu0 %v262
    %780 = vmatprep.subr.mxu0 %v265
    %781 = vmatpush1.msra.mxu0 %v264
    %782 = vmatprep.subr.mxu0 %v267
    %783 = vmatpush1.msra.mxu0 %v266
    %784 = vmatprep.subr.mxu0 %v269
    %785 = vmatpush1.msra.mxu0 %v268
    %786 = vmatprep.subr.mxu0 %v271
    %787 = vmatpush1.msra.mxu0 %v270
    %788 = vmatprep.subr.mxu0 %v273
    %789 = vmatpush1.msra.mxu0 %v272
    %790 = vmatprep.subr.mxu0 %v275
    %791 = vmatpush1.msra.mxu0 %v274
    %792 = vmatprep.subr.mxu0 0.0
    %793 = vmatpush1.msra.mxu0 0.0
    %794 = vmatprep.subr.mxu0 0.0
    %795 = vmatpush1.msra.mxu0 0.0
    %796 = vmatprep.subr.mxu0 0.0
    %797 = vmatpush1.msra.mxu0 0.0
    %798 = vmatprep.subr.mxu0 0.0
    %799 = vmatpush1.msra.mxu0 0.0
    %800 = vmatprep.subr.mxu0 0.0
    %801 = vmatpush1.msra.mxu0 0.0
    %802 = vmatprep.subr.mxu0 0.0
    %803 = vmatpush1.msra.mxu0 0.0
    %804 = vmatprep.subr.mxu0 0.0
    %805 = vmatpush1.msra.mxu0 0.0
    %806 = vmatprep.subr.mxu0 0.0
    %807 = vmatpush1.msra.mxu0 0.0
    %808 = vmatprep.subr.mxu0 0.0
    %809 = vmatpush1.msra.mxu0 0.0
    %810 = vmatprep.subr.mxu0 0.0
    %811 = vmatpush1.msra.mxu0 0.0
    %812 = vmatprep.subr.mxu0 0.0
    %813 = vmatpush1.msra.mxu0 0.0
    %814 = vmatprep.subr.mxu0 0.0
    %815 = vmatpush1.msra.mxu0 0.0
    %816 = vmatprep.subr.mxu0 0.0
    %817 = vmatpush1.msra.mxu0 0.0
    %818 = vmatprep.subr.mxu0 0.0
    %819 = vmatpush1.msra.mxu0 0.0
    %820 = vmatprep.subr.mxu0 0.0
    %821 = vmatpush1.msra.mxu0 0.0
    %822 = vmatprep.subr.mxu0 0.0
    %823 = vmatpush1.msra.mxu0 0.0
    %824 = vmatprep.subr.mxu0 0.0
    %825 = vmatpush1.msra.mxu0 0.0
    %826 = vmatprep.subr.mxu0 0.0
    %827 = vmatpush1.msra.mxu0 0.0
    %828 = vmatprep.subr.mxu0 0.0
    %829 = vmatpush1.msra.mxu0 0.0
    %830 = vmatprep.subr.mxu0 0.0
    %831 = vmatpush1.msra.mxu0 0.0
    %832 = vmatprep.subr.mxu0 0.0
    %833 = vmatpush1.msra.mxu0 0.0
    %834 = vmatprep.subr.mxu0 0.0
    %835 = vmatpush1.msra.mxu0 0.0
    %836 = vmatprep.subr.mxu0 0.0
    %837 = vmatpush1.msra.mxu0 0.0
    %838 = vmatprep.subr.mxu0 0.0
    %839 = vmatpush1.msra.mxu0 0.0
    %840 = vmatprep.mubr.f32.mxu0 0.0
    %841 = vmatmul.mubr.f32.gmra.mrb[0].mxu0 %v774
    %v842 = vpop.f32.mrb[0].mxu0
    %v843 = vadd.f32 0.0, %v842
    %v844 = vpop.f32.mrb[0].mxu0
    %v845 = vadd.f32 0.0, %v844
    %846 = vdwg.mxu0
    %v847 = vadd.f32 %v771, %v843
    %v848 = vadd.f32 %v772, %v845
    %850 = vrot.lane.b32.xlu0 %v848, 96
    %v851 = vpop.permute.xlu0 %850
    %v853 = vsel %vm359, %v847, %v851
    %v854 = vxor.u32 %v853, 2147483648
    %v855 = vxor.u32 %v851, 2147483648
    %v856 = vmul.f32 %v854, 1.442695
    %v857 = vpow.pop %v856
    %v858 = vmul.f32 %v855, 1.442695
    %v859 = vpow.pop %v858
    %v860 = vadd.f32 %v857, 1.0
    %v861 = vadd.f32 %v859, 1.0
    %v862 = vrcp.pop %v860
    %v863 = vmul.f32 1.0, %v862
    %v864 = vrcp.pop %v861
    %v865 = vmul.f32 1.0, %v864
    %867 = vrot.lane.b32.xlu0 %v847, 32
    %v868 = vpop.permute.xlu0 %867
    %870 = vrot.lane.b32.xlu0 %v848, 64
    %v871 = vpop.permute.xlu0 %870
    %v873 = vsel %vm380, %v868, %v871
    %v874 = vtanh.pop %v873
    %876 = vrot.lane.b32.xlu0 %v863, 64
    %v877 = vpop.permute.xlu0 %876
    %v879 = vsel %vm380, %v863, %v877
    %880 = vrot.lane.b32.xlu0 %v863, 96
    %v881 = vpop.permute.xlu0 %880
    %884 = vrot.lane.b32.xlu0 %v865, 32
    %v885 = vpop.permute.xlu0 %884
    %v887 = vsel %vm380, %v881, %v885
    %v888 = vsel %vm380, %v877, %v865
    %v889 = vmul.f32 %v887, %v768
    %v890 = vmul.f32 %v879, %v874
    %v891 = vadd.f32 %v889, %v890
    %v892 = vtanh.pop %v891
    %v893 = vmul.f32 %v888, %v892
    %v894 = vld [vmem:[#allocation2 + $0x50] sm:$0xff]
    %v895 = vld [vmem:[#allocation2 + $0x28] sm:$0xff]
    %v897 = vsel %vm278, %v893, 0
    %899 = vmatprep.subr.mxu0 %v261
    %900 = vmatpush1.msra.mxu0 %v260
    %901 = vmatprep.subr.mxu0 %v263
    %902 = vmatpush1.msra.mxu0 %v262
    %903 = vmatprep.subr.mxu0 %v265
    %904 = vmatpush1.msra.mxu0 %v264
    %905 = vmatprep.subr.mxu0 %v267
    %906 = vmatpush1.msra.mxu0 %v266
    %907 = vmatprep.subr.mxu0 %v269
    %908 = vmatpush1.msra.mxu0 %v268
    %909 = vmatprep.subr.mxu0 %v271
    %910 = vmatpush1.msra.mxu0 %v270
    %911 = vmatprep.subr.mxu0 %v273
    %912 = vmatpush1.msra.mxu0 %v272
    %913 = vmatprep.subr.mxu0 %v275
    %914 = vmatpush1.msra.mxu0 %v274
    %915 = vmatprep.subr.mxu0 0.0
    %916 = vmatpush1.msra.mxu0 0.0
    %917 = vmatprep.subr.mxu0 0.0
    %918 = vmatpush1.msra.mxu0 0.0
    %919 = vmatprep.subr.mxu0 0.0
    %920 = vmatpush1.msra.mxu0 0.0
    %921 = vmatprep.subr.mxu0 0.0
    %922 = vmatpush1.msra.mxu0 0.0
    %923 = vmatprep.subr.mxu0 0.0
    %924 = vmatpush1.msra.mxu0 0.0
    %925 = vmatprep.subr.mxu0 0.0
    %926 = vmatpush1.msra.mxu0 0.0
    %927 = vmatprep.subr.mxu0 0.0
    %928 = vmatpush1.msra.mxu0 0.0
    %929 = vmatprep.subr.mxu0 0.0
    %930 = vmatpush1.msra.mxu0 0.0
    %931 = vmatprep.subr.mxu0 0.0
    %932 = vmatpush1.msra.mxu0 0.0
    %933 = vmatprep.subr.mxu0 0.0
    %934 = vmatpush1.msra.mxu0 0.0
    %935 = vmatprep.subr.mxu0 0.0
    %936 = vmatpush1.msra.mxu0 0.0
    %937 = vmatprep.subr.mxu0 0.0
    %938 = vmatpush1.msra.mxu0 0.0
    %939 = vmatprep.subr.mxu0 0.0
    %940 = vmatpush1.msra.mxu0 0.0
    %941 = vmatprep.subr.mxu0 0.0
    %942 = vmatpush1.msra.mxu0 0.0
    %943 = vmatprep.subr.mxu0 0.0
    %944 = vmatpush1.msra.mxu0 0.0
    %945 = vmatprep.subr.mxu0 0.0
    %946 = vmatpush1.msra.mxu0 0.0
    %947 = vmatprep.subr.mxu0 0.0
    %948 = vmatpush1.msra.mxu0 0.0
    %949 = vmatprep.subr.mxu0 0.0
    %950 = vmatpush1.msra.mxu0 0.0
    %951 = vmatprep.subr.mxu0 0.0
    %952 = vmatpush1.msra.mxu0 0.0
    %953 = vmatprep.subr.mxu0 0.0
    %954 = vmatpush1.msra.mxu0 0.0
    %955 = vmatprep.subr.mxu0 0.0
    %956 = vmatpush1.msra.mxu0 0.0
    %957 = vmatprep.subr.mxu0 0.0
    %958 = vmatpush1.msra.mxu0 0.0
    %959 = vmatprep.subr.mxu0 0.0
    %960 = vmatpush1.msra.mxu0 0.0
    %961 = vmatprep.subr.mxu0 0.0
    %962 = vmatpush1.msra.mxu0 0.0
    %963 = vmatprep.mubr.f32.mxu0 0.0
    %964 = vmatmul.mubr.f32.gmra.mrb[0].mxu0 %v897
    %v965 = vpop.f32.mrb[0].mxu0
    %v966 = vadd.f32 0.0, %v965
    %v967 = vpop.f32.mrb[0].mxu0
    %v968 = vadd.f32 0.0, %v967
    %969 = vdwg.mxu0
    %v970 = vadd.f32 %v894, %v966
    %v971 = vadd.f32 %v895, %v968
    %973 = vrot.lane.b32.xlu0 %v971, 96
    %v974 = vpop.permute.xlu0 %973
    %v976 = vsel %vm359, %v970, %v974
    %v977 = vxor.u32 %v976, 2147483648
    %v978 = vxor.u32 %v974, 2147483648
    %v979 = vmul.f32 %v977, 1.442695
    %v980 = vpow.pop %v979
    %v981 = vmul.f32 %v978, 1.442695
    %v982 = vpow.pop %v981
    %v983 = vadd.f32 %v980, 1.0
    %v984 = vadd.f32 %v982, 1.0
    %v985 = vrcp.pop %v983
    %v986 = vmul.f32 1.0, %v985
    %v987 = vrcp.pop %v984
    %v988 = vmul.f32 1.0, %v987
    %990 = vrot.lane.b32.xlu0 %v970, 32
    %v991 = vpop.permute.xlu0 %990
    %993 = vrot.lane.b32.xlu0 %v971, 64
    %v994 = vpop.permute.xlu0 %993
    %v996 = vsel %vm380, %v991, %v994
    %v997 = vtanh.pop %v996
    %999 = vrot.lane.b32.xlu0 %v986, 64
    %v1000 = vpop.permute.xlu0 %999
    %v1002 = vsel %vm380, %v986, %v1000
    %1003 = vrot.lane.b32.xlu0 %v986, 96
    %v1004 = vpop.permute.xlu0 %1003
    %1007 = vrot.lane.b32.xlu0 %v988, 32
    %v1008 = vpop.permute.xlu0 %1007
    %v1010 = vsel %vm380, %v1004, %v1008
    %v1011 = vsel %vm380, %v1000, %v988
    %v1012 = vmul.f32 %v1010, %v891
    %v1013 = vmul.f32 %v1002, %v997
    %v1014 = vadd.f32 %v1012, %v1013
    %v1015 = vtanh.pop %v1014
    %v1016 = vmul.f32 %v1011, %v1015
    %v1017 = vld [vmem:[#allocation2 + $0x60] sm:$0xff]
    %v1018 = vld [vmem:[#allocation2 + $0x18] sm:$0xff]
    %v1020 = vsel %vm278, %v1016, 0
    %1022 = vmatprep.subr.mxu0 %v261
    %1023 = vmatpush1.msra.mxu0 %v260
    %1024 = vmatprep.subr.mxu0 %v263
    %1025 = vmatpush1.msra.mxu0 %v262
    %1026 = vmatprep.subr.mxu0 %v265
    %1027 = vmatpush1.msra.mxu0 %v264
    %1028 = vmatprep.subr.mxu0 %v267
    %1029 = vmatpush1.msra.mxu0 %v266
    %1030 = vmatprep.subr.mxu0 %v269
    %1031 = vmatpush1.msra.mxu0 %v268
    %1032 = vmatprep.subr.mxu0 %v271
    %1033 = vmatpush1.msra.mxu0 %v270
    %1034 = vmatprep.subr.mxu0 %v273
    %1035 = vmatpush1.msra.mxu0 %v272
    %1036 = vmatprep.subr.mxu0 %v275
    %1037 = vmatpush1.msra.mxu0 %v274
    %1038 = vmatprep.subr.mxu0 0.0
    %1039 = vmatpush1.msra.mxu0 0.0
    %1040 = vmatprep.subr.mxu0 0.0
    %1041 = vmatpush1.msra.mxu0 0.0
    %1042 = vmatprep.subr.mxu0 0.0
    %1043 = vmatpush1.msra.mxu0 0.0
    %1044 = vmatprep.subr.mxu0 0.0
    %1045 = vmatpush1.msra.mxu0 0.0
    %1046 = vmatprep.subr.mxu0 0.0
    %1047 = vmatpush1.msra.mxu0 0.0
    %1048 = vmatprep.subr.mxu0 0.0
    %1049 = vmatpush1.msra.mxu0 0.0
    %1050 = vmatprep.subr.mxu0 0.0
    %1051 = vmatpush1.msra.mxu0 0.0
    %1052 = vmatprep.subr.mxu0 0.0
    %1053 = vmatpush1.msra.mxu0 0.0
    %1054 = vmatprep.subr.mxu0 0.0
    %1055 = vmatpush1.msra.mxu0 0.0
    %1056 = vmatprep.subr.mxu0 0.0
    %1057 = vmatpush1.msra.mxu0 0.0
    %1058 = vmatprep.subr.mxu0 0.0
    %1059 = vmatpush1.msra.mxu0 0.0
    %1060 = vmatprep.subr.mxu0 0.0
    %1061 = vmatpush1.msra.mxu0 0.0
    %1062 = vmatprep.subr.mxu0 0.0
    %1063 = vmatpush1.msra.mxu0 0.0
    %1064 = vmatprep.subr.mxu0 0.0
    %1065 = vmatpush1.msra.mxu0 0.0
    %1066 = vmatprep.subr.mxu0 0.0
    %1067 = vmatpush1.msra.mxu0 0.0
    %1068 = vmatprep.subr.mxu0 0.0
    %1069 = vmatpush1.msra.mxu0 0.0
    %1070 = vmatprep.subr.mxu0 0.0
    %1071 = vmatpush1.msra.mxu0 0.0
    %1072 = vmatprep.subr.mxu0 0.0
    %1073 = vmatpush1.msra.mxu0 0.0
    %1074 = vmatprep.subr.mxu0 0.0
    %1075 = vmatpush1.msra.mxu0 0.0
    %1076 = vmatprep.subr.mxu0 0.0
    %1077 = vmatpush1.msra.mxu0 0.0
    %1078 = vmatprep.subr.mxu0 0.0
    %1079 = vmatpush1.msra.mxu0 0.0
    %1080 = vmatprep.subr.mxu0 0.0
    %1081 = vmatpush1.msra.mxu0 0.0
    %1082 = vmatprep.subr.mxu0 0.0
    %1083 = vmatpush1.msra.mxu0 0.0
    %1084 = vmatprep.subr.mxu0 0.0
    %1085 = vmatpush1.msra.mxu0 0.0
    %1086 = vmatprep.mubr.f32.mxu0 0.0
    %1087 = vmatmul.mubr.f32.gmra.mrb[0].mxu0 %v1020
    %v1088 = vpop.f32.mrb[0].mxu0
    %v1089 = vadd.f32 0.0, %v1088
    %v1090 = vpop.f32.mrb[0].mxu0
    %v1091 = vadd.f32 0.0, %v1090
    %1092 = vdwg.mxu0
    %v1093 = vadd.f32 %v1017, %v1089
    %v1094 = vadd.f32 %v1018, %v1091
    %1096 = vrot.lane.b32.xlu0 %v1094, 96
    %v1097 = vpop.permute.xlu0 %1096
    %v1099 = vsel %vm359, %v1093, %v1097
    %v1100 = vxor.u32 %v1099, 2147483648
    %v1101 = vxor.u32 %v1097, 2147483648
    %v1102 = vmul.f32 %v1100, 1.442695
    %v1103 = vpow.pop %v1102
    %v1104 = vmul.f32 %v1101, 1.442695
    %v1105 = vpow.pop %v1104
    %v1106 = vadd.f32 %v1103, 1.0
    %v1107 = vadd.f32 %v1105, 1.0
    %v1108 = vrcp.pop %v1106
    %v1109 = vmul.f32 1.0, %v1108
    %v1110 = vrcp.pop %v1107
    %v1111 = vmul.f32 1.0, %v1110
    %1113 = vrot.lane.b32.xlu0 %v1093, 32
    %v1114 = vpop.permute.xlu0 %1113
    %1116 = vrot.lane.b32.xlu0 %v1094, 64
    %v1117 = vpop.permute.xlu0 %1116
    %v1119 = vsel %vm380, %v1114, %v1117
    %v1120 = vtanh.pop %v1119
    %1122 = vrot.lane.b32.xlu0 %v1109, 64
    %v1123 = vpop.permute.xlu0 %1122
    %v1125 = vsel %vm380, %v1109, %v1123
    %1126 = vrot.lane.b32.xlu0 %v1109, 96
    %v1127 = vpop.permute.xlu0 %1126
    %1130 = vrot.lane.b32.xlu0 %v1111, 32
    %v1131 = vpop.permute.xlu0 %1130
    %v1133 = vsel %vm380, %v1127, %v1131
    %v1134 = vsel %vm380, %v1123, %v1111
    %v1135 = vmul.f32 %v1133, %v1014
    %v1136 = vmul.f32 %v1125, %v1120
    %v1137 = vadd.f32 %v1135, %v1136
    %v1138 = vtanh.pop %v1137
    %v1139 = vmul.f32 %v1134, %v1138
    %v1140 = vld [vmem:[#allocation2 + $0x70] sm:$0xff]
    %v1141 = vld [vmem:[#allocation2 + $0x8] sm:$0xff]
    %v1143 = vsel %vm278, %v1139, 0
    %1145 = vmatprep.subr.mxu0 %v261
    %1146 = vmatpush1.msra.mxu0 %v260
    %1147 = vmatprep.subr.mxu0 %v263
    %1148 = vmatpush1.msra.mxu0 %v262
    %1149 = vmatprep.subr.mxu0 %v265
    %1150 = vmatpush1.msra.mxu0 %v264
    %1151 = vmatprep.subr.mxu0 %v267
    %1152 = vmatpush1.msra.mxu0 %v266
    %1153 = vmatprep.subr.mxu0 %v269
    %1154 = vmatpush1.msra.mxu0 %v268
    %1155 = vmatprep.subr.mxu0 %v271
    %1156 = vmatpush1.msra.mxu0 %v270
    %1157 = vmatprep.subr.mxu0 %v273
    %1158 = vmatpush1.msra.mxu0 %v272
    %1159 = vmatprep.subr.mxu0 %v275
    %1160 = vmatpush1.msra.mxu0 %v274
    %1161 = vmatprep.subr.mxu0 0.0
    %1162 = vmatpush1.msra.mxu0 0.0
    %1163 = vmatprep.subr.mxu0 0.0
    %1164 = vmatpush1.msra.mxu0 0.0
    %1165 = vmatprep.subr.mxu0 0.0
    %1166 = vmatpush1.msra.mxu0 0.0
    %1167 = vmatprep.subr.mxu0 0.0
    %1168 = vmatpush1.msra.mxu0 0.0
    %1169 = vmatprep.subr.mxu0 0.0
    %1170 = vmatpush1.msra.mxu0 0.0
    %1171 = vmatprep.subr.mxu0 0.0
    %1172 = vmatpush1.msra.mxu0 0.0
    %1173 = vmatprep.subr.mxu0 0.0
    %1174 = vmatpush1.msra.mxu0 0.0
    %1175 = vmatprep.subr.mxu0 0.0
    %1176 = vmatpush1.msra.mxu0 0.0
    %1177 = vmatprep.subr.mxu0 0.0
    %1178 = vmatpush1.msra.mxu0 0.0
    %1179 = vmatprep.subr.mxu0 0.0
    %1180 = vmatpush1.msra.mxu0 0.0
    %1181 = vmatprep.subr.mxu0 0.0
    %1182 = vmatpush1.msra.mxu0 0.0
    %1183 = vmatprep.subr.mxu0 0.0
    %1184 = vmatpush1.msra.mxu0 0.0
    %1185 = vmatprep.subr.mxu0 0.0
    %1186 = vmatpush1.msra.mxu0 0.0
    %1187 = vmatprep.subr.mxu0 0.0
    %1188 = vmatpush1.msra.mxu0 0.0
    %1189 = vmatprep.subr.mxu0 0.0
    %1190 = vmatpush1.msra.mxu0 0.0
    %1191 = vmatprep.subr.mxu0 0.0
    %1192 = vmatpush1.msra.mxu0 0.0
    %1193 = vmatprep.subr.mxu0 0.0
    %1194 = vmatpush1.msra.mxu0 0.0
    %1195 = vmatprep.subr.mxu0 0.0
    %1196 = vmatpush1.msra.mxu0 0.0
    %1197 = vmatprep.subr.mxu0 0.0
    %1198 = vmatpush1.msra.mxu0 0.0
    %1199 = vmatprep.subr.mxu0 0.0
    %1200 = vmatpush1.msra.mxu0 0.0
    %1201 = vmatprep.subr.mxu0 0.0
    %1202 = vmatpush1.msra.mxu0 0.0
    %1203 = vmatprep.subr.mxu0 0.0
    %1204 = vmatpush1.msra.mxu0 0.0
    %1205 = vmatprep.subr.mxu0 0.0
    %1206 = vmatpush1.msra.mxu0 0.0
    %1207 = vmatprep.subr.mxu0 0.0
    %1208 = vmatpush1.msra.mxu0 0.0
    %1209 = vmatprep.mubr.f32.mxu0 0.0
    %1210 = vmatmul.mubr.f32.gmra.mrb[0].mxu0 %v1143
    %v1211 = vpop.f32.mrb[0].mxu0
    %v1212 = vadd.f32 0.0, %v1211
    %v1213 = vpop.f32.mrb[0].mxu0
    %v1214 = vadd.f32 0.0, %v1213
    %1215 = vdwg.mxu0
    %v1216 = vadd.f32 %v1140, %v1212
    %v1217 = vadd.f32 %v1141, %v1214
    %1219 = vrot.lane.b32.xlu0 %v1217, 96
    %v1220 = vpop.permute.xlu0 %1219
    %v1222 = vsel %vm359, %v1216, %v1220
    %v1223 = vxor.u32 %v1222, 2147483648
    %v1224 = vxor.u32 %v1220, 2147483648
    %v1225 = vmul.f32 %v1223, 1.442695
    %v1226 = vpow.pop %v1225
    %v1227 = vmul.f32 %v1224, 1.442695
    %v1228 = vpow.pop %v1227
    %v1229 = vadd.f32 %v1226, 1.0
    %v1230 = vadd.f32 %v1228, 1.0
    %v1231 = vrcp.pop %v1229
    %v1232 = vmul.f32 1.0, %v1231
    %v1233 = vrcp.pop %v1230
    %v1234 = vmul.f32 1.0, %v1233
    %1236 = vrot.lane.b32.xlu0 %v1216, 32
    %v1237 = vpop.permute.xlu0 %1236
    %1239 = vrot.lane.b32.xlu0 %v1217, 64
    %v1240 = vpop.permute.xlu0 %1239
    %v1242 = vsel %vm380, %v1237, %v1240
    %v1243 = vtanh.pop %v1242
    %1245 = vrot.lane.b32.xlu0 %v1232, 64
    %v1246 = vpop.permute.xlu0 %1245
    %v1248 = vsel %vm380, %v1232, %v1246
    %1249 = vrot.lane.b32.xlu0 %v1232, 96
    %v1250 = vpop.permute.xlu0 %1249
    %1253 = vrot.lane.b32.xlu0 %v1234, 32
    %v1254 = vpop.permute.xlu0 %1253
    %v1256 = vsel %vm380, %v1250, %v1254
    %v1257 = vsel %vm380, %v1246, %v1234
    %v1258 = vmul.f32 %v1256, %v1137
    %v1259 = vmul.f32 %v1248, %v1243
    %v1260 = vadd.f32 %v1258, %v1259
    %v1261 = vtanh.pop %v1260
    %v1262 = vmul.f32 %v1257, %v1261
    %v1263 = vsel %vm380, %v401, %v1262
    %v1264 = vsel %vm380, %v524, %v1139
    %v1265 = vsel %vm380, %v647, %v1016
    %v1266 = vsel %vm380, %v770, %v893
    %v1267 = vsel %vm380, %v893, %v770
    %v1268 = vsel %vm380, %v1016, %v647
    %v1269 = vsel %vm380, %v1139, %v524
    %v1270 = vsel %vm380, %v1262, %v401
    %v1271 = vld [vmem:[#allocation3] sm:$0xff]
    %v1272 = vld [vmem:[#allocation3 + $0x8] sm:$0xff]
    %v1273 = vld [vmem:[#allocation3 + $0x10] sm:$0xff]
    %v1274 = vld [vmem:[#allocation3 + $0x18] sm:$0xff]
    %v1275 = vld [vmem:[#allocation3 + $0x20] sm:$0xff]
    %v1276 = vld [vmem:[#allocation3 + $0x28] sm:$0xff]
    %v1277 = vld [vmem:[#allocation3 + $0x30] sm:$0xff]
    %v1278 = vld [vmem:[#allocation3 + $0x38] sm:$0xff]
    %v1279 = vld [vmem:[#allocation3 + $0x40] sm:$0xff]
    %v1280 = vld [vmem:[#allocation3 + $0x48] sm:$0xff]
    %v1281 = vld [vmem:[#allocation3 + $0x50] sm:$0xff]
    %v1282 = vld [vmem:[#allocation3 + $0x58] sm:$0xff]
    %v1283 = vld [vmem:[#allocation3 + $0x60] sm:$0xff]
    %v1284 = vld [vmem:[#allocation3 + $0x68] sm:$0xff]
    %v1285 = vld [vmem:[#allocation3 + $0x70] sm:$0xff]
    %v1286 = vld [vmem:[#allocation3 + $0x78] sm:$0xff]
    %v1287 = vld [vmem:[%s6] sm:$0x3]
    %v1289 = vlaneseq
    %v1290 = vshrl.u32 %v1289, 7
    %v1291 = vsub.s32 0, %v1290
    %v1292 = vrot.slane %v1287, %v1291
    %v1293 = vlaneseq
    %v1294 = vshrl.u32 %v1293, 7
    %v1295 = vsub.s32 1, %v1294
    %v1296 = vrot.slane %v1287, %v1295
    %v1300 = vsel %vm278, %v1263, 0
    %v1303 = vsel %vm278, %v1264, 0
    %v1306 = vsel %vm278, %v1265, 0
    %v1309 = vsel %vm278, %v1266, 0
    %v1312 = vsel %vm278, %v1267, 0
    %v1315 = vsel %vm278, %v1268, 0
    %v1318 = vsel %vm278, %v1269, 0
    %v1321 = vsel %vm278, %v1270, 0
    %1323 = vmatprep.subr.mxu0 %v1272
    %1324 = vmatpush1.msra.mxu0 %v1271
    %1325 = vmatprep.subr.mxu0 %v1274
    %1326 = vmatpush1.msra.mxu0 %v1273
    %1327 = vmatprep.subr.mxu0 %v1276
    %1328 = vmatpush1.msra.mxu0 %v1275
    %1329 = vmatprep.subr.mxu0 %v1278
    %1330 = vmatpush1.msra.mxu0 %v1277
    %1331 = vmatprep.subr.mxu0 %v1280
    %1332 = vmatpush1.msra.mxu0 %v1279
    %1333 = vmatprep.subr.mxu0 %v1282
    %1334 = vmatpush1.msra.mxu0 %v1281
    %1335 = vmatprep.subr.mxu0 %v1284
    %1336 = vmatpush1.msra.mxu0 %v1283
    %1337 = vmatprep.subr.mxu0 %v1286
    %1338 = vmatpush1.msra.mxu0 %v1285
    %1339 = vmatprep.subr.mxu0 0.0
    %1340 = vmatpush1.msra.mxu0 0.0
    %1341 = vmatprep.subr.mxu0 0.0
    %1342 = vmatpush1.msra.mxu0 0.0
    %1343 = vmatprep.subr.mxu0 0.0
    %1344 = vmatpush1.msra.mxu0 0.0
    %1345 = vmatprep.subr.mxu0 0.0
    %1346 = vmatpush1.msra.mxu0 0.0
    %1347 = vmatprep.subr.mxu0 0.0
    %1348 = vmatpush1.msra.mxu0 0.0
    %1349 = vmatprep.subr.mxu0 0.0
    %1350 = vmatpush1.msra.mxu0 0.0
    %1351 = vmatprep.subr.mxu0 0.0
    %1352 = vmatpush1.msra.mxu0 0.0
    %1353 = vmatprep.subr.mxu0 0.0
    %1354 = vmatpush1.msra.mxu0 0.0
    %1355 = vmatprep.subr.mxu0 0.0
    %1356 = vmatpush1.msra.mxu0 0.0
    %1357 = vmatprep.subr.mxu0 0.0
    %1358 = vmatpush1.msra.mxu0 0.0
    %1359 = vmatprep.subr.mxu0 0.0
    %1360 = vmatpush1.msra.mxu0 0.0
    %1361 = vmatprep.subr.mxu0 0.0
    %1362 = vmatpush1.msra.mxu0 0.0
    %1363 = vmatprep.subr.mxu0 0.0
    %1364 = vmatpush1.msra.mxu0 0.0
    %1365 = vmatprep.subr.mxu0 0.0
    %1366 = vmatpush1.msra.mxu0 0.0
    %1367 = vmatprep.subr.mxu0 0.0
    %1368 = vmatpush1.msra.mxu0 0.0
    %1369 = vmatprep.subr.mxu0 0.0
    %1370 = vmatpush1.msra.mxu0 0.0
    %1371 = vmatprep.subr.mxu0 0.0
    %1372 = vmatpush1.msra.mxu0 0.0
    %1373 = vmatprep.subr.mxu0 0.0
    %1374 = vmatpush1.msra.mxu0 0.0
    %1375 = vmatprep.subr.mxu0 0.0
    %1376 = vmatpush1.msra.mxu0 0.0
    %1377 = vmatprep.subr.mxu0 0.0
    %1378 = vmatpush1.msra.mxu0 0.0
    %1379 = vmatprep.subr.mxu0 0.0
    %1380 = vmatpush1.msra.mxu0 0.0
    %1381 = vmatprep.subr.mxu0 0.0
    %1382 = vmatpush1.msra.mxu0 0.0
    %1383 = vmatprep.subr.mxu0 0.0
    %1384 = vmatpush1.msra.mxu0 0.0
    %1385 = vmatprep.subr.mxu0 0.0
    %1386 = vmatpush1.msra.mxu0 0.0
    %1387 = vmatprep.mubr.f32.mxu0 0.0
    %1388 = vmatmul.mubr.f32.gmra.mrb[0].mxu0 %v1300
    %v1389 = vpop.f32.mrb[0].mxu0
    %v1390 = vadd.f32 %v1292, %v1389
    %v1391 = vpop.f32.mrb[0].mxu0
    %v1392 = vadd.f32 %v1296, %v1391
    %1393 = vmatprep.mubr.f32.mxu0 0.0
    %1394 = vmatmul.mubr.f32.gmra.mrb[0].mxu0 %v1303
    %v1395 = vpop.f32.mrb[0].mxu0
    %v1396 = vadd.f32 %v1292, %v1395
    %v1397 = vpop.f32.mrb[0].mxu0
    %v1398 = vadd.f32 %v1296, %v1397
    %1399 = vmatprep.mubr.f32.mxu0 0.0
    %1400 = vmatmul.mubr.f32.gmra.mrb[0].mxu0 %v1306
    %v1401 = vpop.f32.mrb[0].mxu0
    %v1402 = vadd.f32 %v1292, %v1401
    %v1403 = vpop.f32.mrb[0].mxu0
    %v1404 = vadd.f32 %v1296, %v1403
    %1405 = vmatprep.mubr.f32.mxu0 0.0
    %1406 = vmatmul.mubr.f32.gmra.mrb[0].mxu0 %v1309
    %v1407 = vpop.f32.mrb[0].mxu0
    %v1408 = vadd.f32 %v1292, %v1407
    %v1409 = vpop.f32.mrb[0].mxu0
    %v1410 = vadd.f32 %v1296, %v1409
    %1411 = vmatprep.mubr.f32.mxu0 0.0
    %1412 = vmatmul.mubr.f32.gmra.mrb[0].mxu0 %v1312
    %v1413 = vpop.f32.mrb[0].mxu0
    %v1414 = vadd.f32 %v1292, %v1413
    %v1415 = vpop.f32.mrb[0].mxu0
    %v1416 = vadd.f32 %v1296, %v1415
    %1417 = vmatprep.mubr.f32.mxu0 0.0
    %1418 = vmatmul.mubr.f32.gmra.mrb[0].mxu0 %v1315
    %v1419 = vpop.f32.mrb[0].mxu0
    %v1420 = vadd.f32 %v1292, %v1419
    %v1421 = vpop.f32.mrb[0].mxu0
    %v1422 = vadd.f32 %v1296, %v1421
    %1423 = vmatprep.mubr.f32.mxu0 0.0
    %1424 = vmatmul.mubr.f32.gmra.mrb[0].mxu0 %v1318
    %v1425 = vpop.f32.mrb[0].mxu0
    %v1426 = vadd.f32 %v1292, %v1425
    %v1427 = vpop.f32.mrb[0].mxu0
    %v1428 = vadd.f32 %v1296, %v1427
    %1429 = vmatprep.mubr.f32.mxu0 0.0
    %1430 = vmatmul.mubr.f32.gmra.mrb[0].mxu0 %v1321
    %v1431 = vpop.f32.mrb[0].mxu0
    %v1432 = vadd.f32 %v1292, %v1431
    %v1433 = vpop.f32.mrb[0].mxu0
    %v1434 = vadd.f32 %v1296, %v1433
    %1435 = vdwg.mxu0
    %1436 = vst [vmem:[#allocation2] sm:$0xff] %v1390
    %1437 = vst [vmem:[#allocation2 + $0x8] sm:$0xff] %v1392
    %1438 = vst [vmem:[#allocation2 + $0x10] sm:$0xff] %v1396
    %1439 = vst [vmem:[#allocation2 + $0x18] sm:$0xff] %v1398
    %1440 = vst [vmem:[#allocation2 + $0x20] sm:$0xff] %v1402
    %1441 = vst [vmem:[#allocation2 + $0x28] sm:$0xff] %v1404
    %1442 = vst [vmem:[#allocation2 + $0x30] sm:$0xff] %v1408
    %1443 = vst [vmem:[#allocation2 + $0x38] sm:$0xff] %v1410
    %1444 = vst [vmem:[#allocation2 + $0x40] sm:$0xff] %v1414
    %1445 = vst [vmem:[#allocation2 + $0x48] sm:$0xff] %v1416
    %1446 = vst [vmem:[#allocation2 + $0x50] sm:$0xff] %v1420
    %1447 = vst [vmem:[#allocation2 + $0x58] sm:$0xff] %v1422
    %1448 = vst [vmem:[#allocation2 + $0x60] sm:$0xff] %v1426
    %1449 = vst [vmem:[#allocation2 + $0x68] sm:$0xff] %v1428
    %1450 = vst [vmem:[#allocation2 + $0x70] sm:$0xff] %v1432
    %1451 = vst [vmem:[#allocation2 + $0x78] sm:$0xff] %v1434
    %v1452 = vld [vmem:[#allocation5] sm:$0xff]
    %v1453 = vld [vmem:[#allocation5 + $0x8] sm:$0xff]
    %v1454 = vld [vmem:[#allocation5 + $0x10] sm:$0xff]
    %v1455 = vld [vmem:[#allocation5 + $0x18] sm:$0xff]
    %v1456 = vld [vmem:[#allocation5 + $0x20] sm:$0xff]
    %v1457 = vld [vmem:[#allocation5 + $0x28] sm:$0xff]
    %v1458 = vld [vmem:[#allocation5 + $0x30] sm:$0xff]
    %v1459 = vld [vmem:[#allocation5 + $0x38] sm:$0xff]
    %v1460 = vld [vmem:[#allocation5 + $0x40] sm:$0xff]
    %v1461 = vld [vmem:[#allocation5 + $0x48] sm:$0xff]
    %v1462 = vld [vmem:[#allocation5 + $0x50] sm:$0xff]
    %v1463 = vld [vmem:[#allocation5 + $0x58] sm:$0xff]
    %v1464 = vld [vmem:[#allocation5 + $0x60] sm:$0xff]
    %v1465 = vld [vmem:[#allocation5 + $0x68] sm:$0xff]
    %v1466 = vld [vmem:[#allocation5 + $0x70] sm:$0xff]
    %v1467 = vld [vmem:[#allocation5 + $0x78] sm:$0xff]
    %v1468 = vld [vmem:[#allocation2] sm:$0xff]
    %v1469 = vld [vmem:[#allocation2 + $0x78] sm:$0xff]
    %1470 = vmatprep.subr.mxu0 %v1453
    %1471 = vmatpush1.msra.mxu0 %v1452
    %1472 = vmatprep.subr.mxu0 %v1455
    %1473 = vmatpush1.msra.mxu0 %v1454
    %1474 = vmatprep.subr.mxu0 %v1457
    %1475 = vmatpush1.msra.mxu0 %v1456
    %1476 = vmatprep.subr.mxu0 %v1459
    %1477 = vmatpush1.msra.mxu0 %v1458
    %1478 = vmatprep.subr.mxu0 %v1461
    %1479 = vmatpush1.msra.mxu0 %v1460
    %1480 = vmatprep.subr.mxu0 %v1463
    %1481 = vmatpush1.msra.mxu0 %v1462
    %1482 = vmatprep.subr.mxu0 %v1465
    %1483 = vmatpush1.msra.mxu0 %v1464
    %1484 = vmatprep.subr.mxu0 %v1467
    %1485 = vmatpush1.msra.mxu0 %v1466
    %1486 = vmatprep.subr.mxu0 0.0
    %1487 = vmatpush1.msra.mxu0 0.0
    %1488 = vmatprep.subr.mxu0 0.0
    %1489 = vmatpush1.msra.mxu0 0.0
    %1490 = vmatprep.subr.mxu0 0.0
    %1491 = vmatpush1.msra.mxu0 0.0
    %1492 = vmatprep.subr.mxu0 0.0
    %1493 = vmatpush1.msra.mxu0 0.0
    %1494 = vmatprep.subr.mxu0 0.0
    %1495 = vmatpush1.msra.mxu0 0.0
    %1496 = vmatprep.subr.mxu0 0.0
    %1497 = vmatpush1.msra.mxu0 0.0
    %1498 = vmatprep.subr.mxu0 0.0
    %1499 = vmatpush1.msra.mxu0 0.0
    %1500 = vmatprep.subr.mxu0 0.0
    %1501 = vmatpush1.msra.mxu0 0.0
    %1502 = vmatprep.subr.mxu0 0.0
    %1503 = vmatpush1.msra.mxu0 0.0
    %1504 = vmatprep.subr.mxu0 0.0
    %1505 = vmatpush1.msra.mxu0 0.0
    %1506 = vmatprep.subr.mxu0 0.0
    %1507 = vmatpush1.msra.mxu0 0.0
    %1508 = vmatprep.subr.mxu0 0.0
    %1509 = vmatpush1.msra.mxu0 0.0
    %1510 = vmatprep.subr.mxu0 0.0
    %1511 = vmatpush1.msra.mxu0 0.0
    %1512 = vmatprep.subr.mxu0 0.0
    %1513 = vmatpush1.msra.mxu0 0.0
    %1514 = vmatprep.subr.mxu0 0.0
    %1515 = vmatpush1.msra.mxu0 0.0
    %1516 = vmatprep.subr.mxu0 0.0
    %1517 = vmatpush1.msra.mxu0 0.0
    %1518 = vmatprep.subr.mxu0 0.0
    %1519 = vmatpush1.msra.mxu0 0.0
    %1520 = vmatprep.subr.mxu0 0.0
    %1521 = vmatpush1.msra.mxu0 0.0
    %1522 = vmatprep.subr.mxu0 0.0
    %1523 = vmatpush1.msra.mxu0 0.0
    %1524 = vmatprep.subr.mxu0 0.0
    %1525 = vmatpush1.msra.mxu0 0.0
    %1526 = vmatprep.subr.mxu0 0.0
    %1527 = vmatpush1.msra.mxu0 0.0
    %1528 = vmatprep.subr.mxu0 0.0
    %1529 = vmatpush1.msra.mxu0 0.0
    %1530 = vmatprep.subr.mxu0 0.0
    %1531 = vmatpush1.msra.mxu0 0.0
    %1532 = vmatprep.subr.mxu0 0.0
    %1533 = vmatpush1.msra.mxu0 0.0
    %1534 = vmatprep.mubr.f32.mxu0 0.0
    %1535 = vmatmul.mubr.f32.gmra.mrb[0].mxu0 %v280
    %v1536 = vpop.f32.mrb[0].mxu0
    %v1537 = vadd.f32 0.0, %v1536
    %v1538 = vpop.f32.mrb[0].mxu0
    %v1539 = vadd.f32 0.0, %v1538
    %1540 = vdwg.mxu0
    %v1541 = vadd.f32 %v1468, %v1537
    %v1542 = vadd.f32 %v1469, %v1539
    %1544 = vrot.lane.b32.xlu0 %v1542, 96
    %v1545 = vpop.permute.xlu0 %1544
    %v1547 = vsel %vm359, %v1541, %v1545
    %v1548 = vxor.u32 %v1547, 2147483648
    %v1549 = vxor.u32 %v1545, 2147483648
    %v1550 = vmul.f32 %v1548, 1.442695
    %v1551 = vpow.pop %v1550
    %v1552 = vmul.f32 %v1549, 1.442695
    %v1553 = vpow.pop %v1552
    %v1554 = vadd.f32 %v1551, 1.0
    %v1555 = vadd.f32 %v1553, 1.0
    %v1556 = vrcp.pop %v1554
    %v1557 = vmul.f32 1.0, %v1556
    %v1558 = vrcp.pop %v1555
    %v1559 = vmul.f32 1.0, %v1558
    %1561 = vrot.lane.b32.xlu0 %v1541, 32
    %v1562 = vpop.permute.xlu0 %1561
    %1564 = vrot.lane.b32.xlu0 %v1542, 64
    %v1565 = vpop.permute.xlu0 %1564
    %v1567 = vsel %vm380, %v1562, %v1565
    %v1568 = vtanh.pop %v1567
    %1570 = vrot.lane.b32.xlu0 %v1557, 64
    %v1571 = vpop.permute.xlu0 %1570
    %v1573 = vsel %vm380, %v1557, %v1571
    %1574 = vrot.lane.b32.xlu0 %v1557, 96
    %v1575 = vpop.permute.xlu0 %1574
    %1578 = vrot.lane.b32.xlu0 %v1559, 32
    %v1579 = vpop.permute.xlu0 %1578
    %v1581 = vsel %vm380, %v1575, %v1579
    %v1582 = vsel %vm380, %v1571, %v1559
    %v1583 = vmul.f32 %v1581, 0.0
    %v1584 = vmul.f32 %v1573, %v1568
    %v1585 = vadd.f32 %v1583, %v1584
    %v1586 = vtanh.pop %v1585
    %v1587 = vmul.f32 %v1582, %v1586
    %v1588 = vld [vmem:[#allocation2 + $0x10] sm:$0xff]
    %v1589 = vld [vmem:[#allocation2 + $0x68] sm:$0xff]
    %v1591 = vsel %vm278, %v1587, 0
    %1593 = vmatprep.subr.mxu0 %v1453
    %1594 = vmatpush1.msra.mxu0 %v1452
    %1595 = vmatprep.subr.mxu0 %v1455
    %1596 = vmatpush1.msra.mxu0 %v1454
    %1597 = vmatprep.subr.mxu0 %v1457
    %1598 = vmatpush1.msra.mxu0 %v1456
    %1599 = vmatprep.subr.mxu0 %v1459
    %1600 = vmatpush1.msra.mxu0 %v1458
    %1601 = vmatprep.subr.mxu0 %v1461
    %1602 = vmatpush1.msra.mxu0 %v1460
    %1603 = vmatprep.subr.mxu0 %v1463
    %1604 = vmatpush1.msra.mxu0 %v1462
    %1605 = vmatprep.subr.mxu0 %v1465
    %1606 = vmatpush1.msra.mxu0 %v1464
    %1607 = vmatprep.subr.mxu0 %v1467
    %1608 = vmatpush1.msra.mxu0 %v1466
    %1609 = vmatprep.subr.mxu0 0.0
    %1610 = vmatpush1.msra.mxu0 0.0
    %1611 = vmatprep.subr.mxu0 0.0
    %1612 = vmatpush1.msra.mxu0 0.0
    %1613 = vmatprep.subr.mxu0 0.0
    %1614 = vmatpush1.msra.mxu0 0.0
    %1615 = vmatprep.subr.mxu0 0.0
    %1616 = vmatpush1.msra.mxu0 0.0
    %1617 = vmatprep.subr.mxu0 0.0
    %1618 = vmatpush1.msra.mxu0 0.0
    %1619 = vmatprep.subr.mxu0 0.0
    %1620 = vmatpush1.msra.mxu0 0.0
    %1621 = vmatprep.subr.mxu0 0.0
    %1622 = vmatpush1.msra.mxu0 0.0
    %1623 = vmatprep.subr.mxu0 0.0
    %1624 = vmatpush1.msra.mxu0 0.0
    %1625 = vmatprep.subr.mxu0 0.0
    %1626 = vmatpush1.msra.mxu0 0.0
    %1627 = vmatprep.subr.mxu0 0.0
    %1628 = vmatpush1.msra.mxu0 0.0
    %1629 = vmatprep.subr.mxu0 0.0
    %1630 = vmatpush1.msra.mxu0 0.0
    %1631 = vmatprep.subr.mxu0 0.0
    %1632 = vmatpush1.msra.mxu0 0.0
    %1633 = vmatprep.subr.mxu0 0.0
    %1634 = vmatpush1.msra.mxu0 0.0
    %1635 = vmatprep.subr.mxu0 0.0
    %1636 = vmatpush1.msra.mxu0 0.0
    %1637 = vmatprep.subr.mxu0 0.0
    %1638 = vmatpush1.msra.mxu0 0.0
    %1639 = vmatprep.subr.mxu0 0.0
    %1640 = vmatpush1.msra.mxu0 0.0
    %1641 = vmatprep.subr.mxu0 0.0
    %1642 = vmatpush1.msra.mxu0 0.0
    %1643 = vmatprep.subr.mxu0 0.0
    %1644 = vmatpush1.msra.mxu0 0.0
    %1645 = vmatprep.subr.mxu0 0.0
    %1646 = vmatpush1.msra.mxu0 0.0
    %1647 = vmatprep.subr.mxu0 0.0
    %1648 = vmatpush1.msra.mxu0 0.0
    %1649 = vmatprep.subr.mxu0 0.0
    %1650 = vmatpush1.msra.mxu0 0.0
    %1651 = vmatprep.subr.mxu0 0.0
    %1652 = vmatpush1.msra.mxu0 0.0
    %1653 = vmatprep.subr.mxu0 0.0
    %1654 = vmatpush1.msra.mxu0 0.0
    %1655 = vmatprep.subr.mxu0 0.0
    %1656 = vmatpush1.msra.mxu0 0.0
    %1657 = vmatprep.mubr.f32.mxu0 0.0
    %1658 = vmatmul.mubr.f32.gmra.mrb[0].mxu0 %v1591
    %v1659 = vpop.f32.mrb[0].mxu0
    %v1660 = vadd.f32 0.0, %v1659
    %v1661 = vpop.f32.mrb[0].mxu0
    %v1662 = vadd.f32 0.0, %v1661
    %1663 = vdwg.mxu0
    %v1664 = vadd.f32 %v1588, %v1660
    %v1665 = vadd.f32 %v1589, %v1662
    %1667 = vrot.lane.b32.xlu0 %v1665, 96
    %v1668 = vpop.permute.xlu0 %1667
    %v1670 = vsel %vm359, %v1664, %v1668
    %v1671 = vxor.u32 %v1670, 2147483648
    %v1672 = vxor.u32 %v1668, 2147483648
    %v1673 = vmul.f32 %v1671, 1.442695
    %v1674 = vpow.pop %v1673
    %v1675 = vmul.f32 %v1672, 1.442695
    %v1676 = vpow.pop %v1675
    %v1677 = vadd.f32 %v1674, 1.0
    %v1678 = vadd.f32 %v1676, 1.0
    %v1679 = vrcp.pop %v1677
    %v1680 = vmul.f32 1.0, %v1679
    %v1681 = vrcp.pop %v1678
    %v1682 = vmul.f32 1.0, %v1681
    %1684 = vrot.lane.b32.xlu0 %v1664, 32
    %v1685 = vpop.permute.xlu0 %1684
    %1687 = vrot.lane.b32.xlu0 %v1665, 64
    %v1688 = vpop.permute.xlu0 %1687
    %v1690 = vsel %vm380, %v1685, %v1688
    %v1691 = vtanh.pop %v1690
    %1693 = vrot.lane.b32.xlu0 %v1680, 64
    %v1694 = vpop.permute.xlu0 %1693
    %v1696 = vsel %vm380, %v1680, %v1694
    %1697 = vrot.lane.b32.xlu0 %v1680, 96
    %v1698 = vpop.permute.xlu0 %1697
    %1701 = vrot.lane.b32.xlu0 %v1682, 32
    %v1702 = vpop.permute.xlu0 %1701
    %v1704 = vsel %vm380, %v1698, %v1702
    %v1705 = vsel %vm380, %v1694, %v1682
    %v1706 = vmul.f32 %v1704, %v1585
    %v1707 = vmul.f32 %v1696, %v1691
    %v1708 = vadd.f32 %v1706, %v1707
    %v1709 = vtanh.pop %v1708
    %v1710 = vmul.f32 %v1705, %v1709
    %v1711 = vld [vmem:[#allocation2 + $0x20] sm:$0xff]
    %v1712 = vld [vmem:[#allocation2 + $0x58] sm:$0xff]
    %v1714 = vsel %vm278, %v1710, 0
    %1716 = vmatprep.subr.mxu0 %v1453
    %1717 = vmatpush1.msra.mxu0 %v1452
    %1718 = vmatprep.subr.mxu0 %v1455
    %1719 = vmatpush1.msra.mxu0 %v1454
    %1720 = vmatprep.subr.mxu0 %v1457
    %1721 = vmatpush1.msra.mxu0 %v1456
    %1722 = vmatprep.subr.mxu0 %v1459
    %1723 = vmatpush1.msra.mxu0 %v1458
    %1724 = vmatprep.subr.mxu0 %v1461
    %1725 = vmatpush1.msra.mxu0 %v1460
    %1726 = vmatprep.subr.mxu0 %v1463
    %1727 = vmatpush1.msra.mxu0 %v1462
    %1728 = vmatprep.subr.mxu0 %v1465
    %1729 = vmatpush1.msra.mxu0 %v1464
    %1730 = vmatprep.subr.mxu0 %v1467
    %1731 = vmatpush1.msra.mxu0 %v1466
    %1732 = vmatprep.subr.mxu0 0.0
    %1733 = vmatpush1.msra.mxu0 0.0
    %1734 = vmatprep.subr.mxu0 0.0
    %1735 = vmatpush1.msra.mxu0 0.0
    %1736 = vmatprep.subr.mxu0 0.0
    %1737 = vmatpush1.msra.mxu0 0.0
    %1738 = vmatprep.subr.mxu0 0.0
    %1739 = vmatpush1.msra.mxu0 0.0
    %1740 = vmatprep.subr.mxu0 0.0
    %1741 = vmatpush1.msra.mxu0 0.0
    %1742 = vmatprep.subr.mxu0 0.0
    %1743 = vmatpush1.msra.mxu0 0.0
    %1744 = vmatprep.subr.mxu0 0.0
    %1745 = vmatpush1.msra.mxu0 0.0
    %1746 = vmatprep.subr.mxu0 0.0
    %1747 = vmatpush1.msra.mxu0 0.0
    %1748 = vmatprep.subr.mxu0 0.0
    %1749 = vmatpush1.msra.mxu0 0.0
    %1750 = vmatprep.subr.mxu0 0.0
    %1751 = vmatpush1.msra.mxu0 0.0
    %1752 = vmatprep.subr.mxu0 0.0
    %1753 = vmatpush1.msra.mxu0 0.0
    %1754 = vmatprep.subr.mxu0 0.0
    %1755 = vmatpush1.msra.mxu0 0.0
    %1756 = vmatprep.subr.mxu0 0.0
    %1757 = vmatpush1.msra.mxu0 0.0
    %1758 = vmatprep.subr.mxu0 0.0
    %1759 = vmatpush1.msra.mxu0 0.0
    %1760 = vmatprep.subr.mxu0 0.0
    %1761 = vmatpush1.msra.mxu0 0.0
    %1762 = vmatprep.subr.mxu0 0.0
    %1763 = vmatpush1.msra.mxu0 0.0
    %1764 = vmatprep.subr.mxu0 0.0
    %1765 = vmatpush1.msra.mxu0 0.0
    %1766 = vmatprep.subr.mxu0 0.0
    %1767 = vmatpush1.msra.mxu0 0.0
    %1768 = vmatprep.subr.mxu0 0.0
    %1769 = vmatpush1.msra.mxu0 0.0
    %1770 = vmatprep.subr.mxu0 0.0
    %1771 = vmatpush1.msra.mxu0 0.0
    %1772 = vmatprep.subr.mxu0 0.0
    %1773 = vmatpush1.msra.mxu0 0.0
    %1774 = vmatprep.subr.mxu0 0.0
    %1775 = vmatpush1.msra.mxu0 0.0
    %1776 = vmatprep.subr.mxu0 0.0
    %1777 = vmatpush1.msra.mxu0 0.0
    %1778 = vmatprep.subr.mxu0 0.0
    %1779 = vmatpush1.msra.mxu0 0.0
    %1780 = vmatprep.mubr.f32.mxu0 0.0
    %1781 = vmatmul.mubr.f32.gmra.mrb[0].mxu0 %v1714
    %v1782 = vpop.f32.mrb[0].mxu0
    %v1783 = vadd.f32 0.0, %v1782
    %v1784 = vpop.f32.mrb[0].mxu0
    %v1785 = vadd.f32 0.0, %v1784
    %1786 = vdwg.mxu0
    %v1787 = vadd.f32 %v1711, %v1783
    %v1788 = vadd.f32 %v1712, %v1785
    %1790 = vrot.lane.b32.xlu0 %v1788, 96
    %v1791 = vpop.permute.xlu0 %1790
    %v1793 = vsel %vm359, %v1787, %v1791
    %v1794 = vxor.u32 %v1793, 2147483648
    %v1795 = vxor.u32 %v1791, 2147483648
    %v1796 = vmul.f32 %v1794, 1.442695
    %v1797 = vpow.pop %v1796
    %v1798 = vmul.f32 %v1795, 1.442695
    %v1799 = vpow.pop %v1798
    %v1800 = vadd.f32 %v1797, 1.0
    %v1801 = vadd.f32 %v1799, 1.0
    %v1802 = vrcp.pop %v1800
    %v1803 = vmul.f32 1.0, %v1802
    %v1804 = vrcp.pop %v1801
    %v1805 = vmul.f32 1.0, %v1804
    %1807 = vrot.lane.b32.xlu0 %v1787, 32
    %v1808 = vpop.permute.xlu0 %1807
    %1810 = vrot.lane.b32.xlu0 %v1788, 64
    %v1811 = vpop.permute.xlu0 %1810
    %v1813 = vsel %vm380, %v1808, %v1811
    %v1814 = vtanh.pop %v1813
    %1816 = vrot.lane.b32.xlu0 %v1803, 64
    %v1817 = vpop.permute.xlu0 %1816
    %v1819 = vsel %vm380, %v1803, %v1817
    %1820 = vrot.lane.b32.xlu0 %v1803, 96
    %v1821 = vpop.permute.xlu0 %1820
    %1824 = vrot.lane.b32.xlu0 %v1805, 32
    %v1825 = vpop.permute.xlu0 %1824
    %v1827 = vsel %vm380, %v1821, %v1825
    %v1828 = vsel %vm380, %v1817, %v1805
    %v1829 = vmul.f32 %v1827, %v1708
    %v1830 = vmul.f32 %v1819, %v1814
    %v1831 = vadd.f32 %v1829, %v1830
    %v1832 = vtanh.pop %v1831
    %v1833 = vmul.f32 %v1828, %v1832
    %v1834 = vld [vmem:[#allocation2 + $0x30] sm:$0xff]
    %v1835 = vld [vmem:[#allocation2 + $0x48] sm:$0xff]
    %v1837 = vsel %vm278, %v1833, 0
    %1839 = vmatprep.subr.mxu0 %v1453
    %1840 = vmatpush1.msra.mxu0 %v1452
    %1841 = vmatprep.subr.mxu0 %v1455
    %1842 = vmatpush1.msra.mxu0 %v1454
    %1843 = vmatprep.subr.mxu0 %v1457
    %1844 = vmatpush1.msra.mxu0 %v1456
    %1845 = vmatprep.subr.mxu0 %v1459
    %1846 = vmatpush1.msra.mxu0 %v1458
    %1847 = vmatprep.subr.mxu0 %v1461
    %1848 = vmatpush1.msra.mxu0 %v1460
    %1849 = vmatprep.subr.mxu0 %v1463
    %1850 = vmatpush1.msra.mxu0 %v1462
    %1851 = vmatprep.subr.mxu0 %v1465
    %1852 = vmatpush1.msra.mxu0 %v1464
    %1853 = vmatprep.subr.mxu0 %v1467
    %1854 = vmatpush1.msra.mxu0 %v1466
    %1855 = vmatprep.subr.mxu0 0.0
    %1856 = vmatpush1.msra.mxu0 0.0
    %1857 = vmatprep.subr.mxu0 0.0
    %1858 = vmatpush1.msra.mxu0 0.0
    %1859 = vmatprep.subr.mxu0 0.0
    %1860 = vmatpush1.msra.mxu0 0.0
    %1861 = vmatprep.subr.mxu0 0.0
    %1862 = vmatpush1.msra.mxu0 0.0
    %1863 = vmatprep.subr.mxu0 0.0
    %1864 = vmatpush1.msra.mxu0 0.0
    %1865 = vmatprep.subr.mxu0 0.0
    %1866 = vmatpush1.msra.mxu0 0.0
    %1867 = vmatprep.subr.mxu0 0.0
    %1868 = vmatpush1.msra.mxu0 0.0
    %1869 = vmatprep.subr.mxu0 0.0
    %1870 = vmatpush1.msra.mxu0 0.0
    %1871 = vmatprep.subr.mxu0 0.0
    %1872 = vmatpush1.msra.mxu0 0.0
    %1873 = vmatprep.subr.mxu0 0.0
    %1874 = vmatpush1.msra.mxu0 0.0
    %1875 = vmatprep.subr.mxu0 0.0
    %1876 = vmatpush1.msra.mxu0 0.0
    %1877 = vmatprep.subr.mxu0 0.0
    %1878 = vmatpush1.msra.mxu0 0.0
    %1879 = vmatprep.subr.mxu0 0.0
    %1880 = vmatpush1.msra.mxu0 0.0
    %1881 = vmatprep.subr.mxu0 0.0
    %1882 = vmatpush1.msra.mxu0 0.0
    %1883 = vmatprep.subr.mxu0 0.0
    %1884 = vmatpush1.msra.mxu0 0.0
    %1885 = vmatprep.subr.mxu0 0.0
    %1886 = vmatpush1.msra.mxu0 0.0
    %1887 = vmatprep.subr.mxu0 0.0
    %1888 = vmatpush1.msra.mxu0 0.0
    %1889 = vmatprep.subr.mxu0 0.0
    %1890 = vmatpush1.msra.mxu0 0.0
    %1891 = vmatprep.subr.mxu0 0.0
    %1892 = vmatpush1.msra.mxu0 0.0
    %1893 = vmatprep.subr.mxu0 0.0
    %1894 = vmatpush1.msra.mxu0 0.0
    %1895 = vmatprep.subr.mxu0 0.0
    %1896 = vmatpush1.msra.mxu0 0.0
    %1897 = vmatprep.subr.mxu0 0.0
    %1898 = vmatpush1.msra.mxu0 0.0
    %1899 = vmatprep.subr.mxu0 0.0
    %1900 = vmatpush1.msra.mxu0 0.0
    %1901 = vmatprep.subr.mxu0 0.0
    %1902 = vmatpush1.msra.mxu0 0.0
    %1903 = vmatprep.mubr.f32.mxu0 0.0
    %1904 = vmatmul.mubr.f32.gmra.mrb[0].mxu0 %v1837
    %v1905 = vpop.f32.mrb[0].mxu0
    %v1906 = vadd.f32 0.0, %v1905
    %v1907 = vpop.f32.mrb[0].mxu0
    %v1908 = vadd.f32 0.0, %v1907
    %1909 = vdwg.mxu0
    %v1910 = vadd.f32 %v1834, %v1906
    %v1911 = vadd.f32 %v1835, %v1908
    %1913 = vrot.lane.b32.xlu0 %v1911, 96
    %v1914 = vpop.permute.xlu0 %1913
    %v1916 = vsel %vm359, %v1910, %v1914
    %v1917 = vxor.u32 %v1916, 2147483648
    %v1918 = vxor.u32 %v1914, 2147483648
    %v1919 = vmul.f32 %v1917, 1.442695
    %v1920 = vpow.pop %v1919
    %v1921 = vmul.f32 %v1918, 1.442695
    %v1922 = vpow.pop %v1921
    %v1923 = vadd.f32 %v1920, 1.0
    %v1924 = vadd.f32 %v1922, 1.0
    %v1925 = vrcp.pop %v1923
    %v1926 = vmul.f32 1.0, %v1925
    %v1927 = vrcp.pop %v1924
    %v1928 = vmul.f32 1.0, %v1927
    %1930 = vrot.lane.b32.xlu0 %v1910, 32
    %v1931 = vpop.permute.xlu0 %1930
    %1933 = vrot.lane.b32.xlu0 %v1911, 64
    %v1934 = vpop.permute.xlu0 %1933
    %v1936 = vsel %vm380, %v1931, %v1934
    %v1937 = vtanh.pop %v1936
    %1939 = vrot.lane.b32.xlu0 %v1926, 64
    %v1940 = vpop.permute.xlu0 %1939
    %v1942 = vsel %vm380, %v1926, %v1940
    %1943 = vrot.lane.b32.xlu0 %v1926, 96
    %v1944 = vpop.permute.xlu0 %1943
    %1947 = vrot.lane.b32.xlu0 %v1928, 32
    %v1948 = vpop.permute.xlu0 %1947
    %v1950 = vsel %vm380, %v1944, %v1948
    %v1951 = vsel %vm380, %v1940, %v1928
    %v1952 = vmul.f32 %v1950, %v1831
    %v1953 = vmul.f32 %v1942, %v1937
    %v1954 = vadd.f32 %v1952, %v1953
    %v1955 = vtanh.pop %v1954
    %v1956 = vmul.f32 %v1951, %v1955
    %v1957 = vld [vmem:[#allocation2 + $0x40] sm:$0xff]
    %v1958 = vld [vmem:[#allocation2 + $0x38] sm:$0xff]
    %v1960 = vsel %vm278, %v1956, 0
    %1962 = vmatprep.subr.mxu0 %v1453
    %1963 = vmatpush1.msra.mxu0 %v1452
    %1964 = vmatprep.subr.mxu0 %v1455
    %1965 = vmatpush1.msra.mxu0 %v1454
    %1966 = vmatprep.subr.mxu0 %v1457
    %1967 = vmatpush1.msra.mxu0 %v1456
    %1968 = vmatprep.subr.mxu0 %v1459
    %1969 = vmatpush1.msra.mxu0 %v1458
    %1970 = vmatprep.subr.mxu0 %v1461
    %1971 = vmatpush1.msra.mxu0 %v1460
    %1972 = vmatprep.subr.mxu0 %v1463
    %1973 = vmatpush1.msra.mxu0 %v1462
    %1974 = vmatprep.subr.mxu0 %v1465
    %1975 = vmatpush1.msra.mxu0 %v1464
    %1976 = vmatprep.subr.mxu0 %v1467
    %1977 = vmatpush1.msra.mxu0 %v1466
    %1978 = vmatprep.subr.mxu0 0.0
    %1979 = vmatpush1.msra.mxu0 0.0
    %1980 = vmatprep.subr.mxu0 0.0
    %1981 = vmatpush1.msra.mxu0 0.0
    %1982 = vmatprep.subr.mxu0 0.0
    %1983 = vmatpush1.msra.mxu0 0.0
    %1984 = vmatprep.subr.mxu0 0.0
    %1985 = vmatpush1.msra.mxu0 0.0
    %1986 = vmatprep.subr.mxu0 0.0
    %1987 = vmatpush1.msra.mxu0 0.0
    %1988 = vmatprep.subr.mxu0 0.0
    %1989 = vmatpush1.msra.mxu0 0.0
    %1990 = vmatprep.subr.mxu0 0.0
    %1991 = vmatpush1.msra.mxu0 0.0
    %1992 = vmatprep.subr.mxu0 0.0
    %1993 = vmatpush1.msra.mxu0 0.0
    %1994 = vmatprep.subr.mxu0 0.0
    %1995 = vmatpush1.msra.mxu0 0.0
    %1996 = vmatprep.subr.mxu0 0.0
    %1997 = vmatpush1.msra.mxu0 0.0
    %1998 = vmatprep.subr.mxu0 0.0
    %1999 = vmatpush1.msra.mxu0 0.0
    %2000 = vmatprep.subr.mxu0 0.0
    %2001 = vmatpush1.msra.mxu0 0.0
    %2002 = vmatprep.subr.mxu0 0.0
    %2003 = vmatpush1.msra.mxu0 0.0
    %2004 = vmatprep.subr.mxu0 0.0
    %2005 = vmatpush1.msra.mxu0 0.0
    %2006 = vmatprep.subr.mxu0 0.0
    %2007 = vmatpush1.msra.mxu0 0.0
    %2008 = vmatprep.subr.mxu0 0.0
    %2009 = vmatpush1.msra.mxu0 0.0
    %2010 = vmatprep.subr.mxu0 0.0
    %2011 = vmatpush1.msra.mxu0 0.0
    %2012 = vmatprep.subr.mxu0 0.0
    %2013 = vmatpush1.msra.mxu0 0.0
    %2014 = vmatprep.subr.mxu0 0.0
    %2015 = vmatpush1.msra.mxu0 0.0
    %2016 = vmatprep.subr.mxu0 0.0
    %2017 = vmatpush1.msra.mxu0 0.0
    %2018 = vmatprep.subr.mxu0 0.0
    %2019 = vmatpush1.msra.mxu0 0.0
    %2020 = vmatprep.subr.mxu0 0.0
    %2021 = vmatpush1.msra.mxu0 0.0
    %2022 = vmatprep.subr.mxu0 0.0
    %2023 = vmatpush1.msra.mxu0 0.0
    %2024 = vmatprep.subr.mxu0 0.0
    %2025 = vmatpush1.msra.mxu0 0.0
    %2026 = vmatprep.mubr.f32.mxu0 0.0
    %2027 = vmatmul.mubr.f32.gmra.mrb[0].mxu0 %v1960
    %v2028 = vpop.f32.mrb[0].mxu0
    %v2029 = vadd.f32 0.0, %v2028
    %v2030 = vpop.f32.mrb[0].mxu0
    %v2031 = vadd.f32 0.0, %v2030
    %2032 = vdwg.mxu0
    %v2033 = vadd.f32 %v1957, %v2029
    %v2034 = vadd.f32 %v1958, %v2031
    %2036 = vrot.lane.b32.xlu0 %v2034, 96
    %v2037 = vpop.permute.xlu0 %2036
    %v2039 = vsel %vm359, %v2033, %v2037
    %v2040 = vxor.u32 %v2039, 2147483648
    %v2041 = vxor.u32 %v2037, 2147483648
    %v2042 = vmul.f32 %v2040, 1.442695
    %v2043 = vpow.pop %v2042
    %v2044 = vmul.f32 %v2041, 1.442695
    %v2045 = vpow.pop %v2044
    %v2046 = vadd.f32 %v2043, 1.0
    %v2047 = vadd.f32 %v2045, 1.0
    %v2048 = vrcp.pop %v2046
    %v2049 = vmul.f32 1.0, %v2048
    %v2050 = vrcp.pop %v2047
    %v2051 = vmul.f32 1.0, %v2050
    %2053 = vrot.lane.b32.xlu0 %v2033, 32
    %v2054 = vpop.permute.xlu0 %2053
    %2056 = vrot.lane.b32.xlu0 %v2034, 64
    %v2057 = vpop.permute.xlu0 %2056
    %v2059 = vsel %vm380, %v2054, %v2057
    %v2060 = vtanh.pop %v2059
    %2062 = vrot.lane.b32.xlu0 %v2049, 64
    %v2063 = vpop.permute.xlu0 %2062
    %v2065 = vsel %vm380, %v2049, %v2063
    %2066 = vrot.lane.b32.xlu0 %v2049, 96
    %v2067 = vpop.permute.xlu0 %2066
    %2070 = vrot.lane.b32.xlu0 %v2051, 32
    %v2071 = vpop.permute.xlu0 %2070
    %v2073 = vsel %vm380, %v2067, %v2071
    %v2074 = vsel %vm380, %v2063, %v2051
    %v2075 = vmul.f32 %v2073, %v1954
    %v2076 = vmul.f32 %v2065, %v2060
    %v2077 = vadd.f32 %v2075, %v2076
    %v2078 = vtanh.pop %v2077
    %v2079 = vmul.f32 %v2074, %v2078
    %v2080 = vld [vmem:[#allocation2 + $0x50] sm:$0xff]
    %v2081 = vld [vmem:[#allocation2 + $0x28] sm:$0xff]
    %v2083 = vsel %vm278, %v2079, 0
    %2085 = vmatprep.subr.mxu0 %v1453
    %2086 = vmatpush1.msra.mxu0 %v1452
    %2087 = vmatprep.subr.mxu0 %v1455
    %2088 = vmatpush1.msra.mxu0 %v1454
    %2089 = vmatprep.subr.mxu0 %v1457
    %2090 = vmatpush1.msra.mxu0 %v1456
    %2091 = vmatprep.subr.mxu0 %v1459
    %2092 = vmatpush1.msra.mxu0 %v1458
    %2093 = vmatprep.subr.mxu0 %v1461
    %2094 = vmatpush1.msra.mxu0 %v1460
    %2095 = vmatprep.subr.mxu0 %v1463
    %2096 = vmatpush1.msra.mxu0 %v1462
    %2097 = vmatprep.subr.mxu0 %v1465
    %2098 = vmatpush1.msra.mxu0 %v1464
    %2099 = vmatprep.subr.mxu0 %v1467
    %2100 = vmatpush1.msra.mxu0 %v1466
    %2101 = vmatprep.subr.mxu0 0.0
    %2102 = vmatpush1.msra.mxu0 0.0
    %2103 = vmatprep.subr.mxu0 0.0
    %2104 = vmatpush1.msra.mxu0 0.0
    %2105 = vmatprep.subr.mxu0 0.0
    %2106 = vmatpush1.msra.mxu0 0.0
    %2107 = vmatprep.subr.mxu0 0.0
    %2108 = vmatpush1.msra.mxu0 0.0
    %2109 = vmatprep.subr.mxu0 0.0
    %2110 = vmatpush1.msra.mxu0 0.0
    %2111 = vmatprep.subr.mxu0 0.0
    %2112 = vmatpush1.msra.mxu0 0.0
    %2113 = vmatprep.subr.mxu0 0.0
    %2114 = vmatpush1.msra.mxu0 0.0
    %2115 = vmatprep.subr.mxu0 0.0
    %2116 = vmatpush1.msra.mxu0 0.0
    %2117 = vmatprep.subr.mxu0 0.0
    %2118 = vmatpush1.msra.mxu0 0.0
    %2119 = vmatprep.subr.mxu0 0.0
    %2120 = vmatpush1.msra.mxu0 0.0
    %2121 = vmatprep.subr.mxu0 0.0
    %2122 = vmatpush1.msra.mxu0 0.0
    %2123 = vmatprep.subr.mxu0 0.0
    %2124 = vmatpush1.msra.mxu0 0.0
    %2125 = vmatprep.subr.mxu0 0.0
    %2126 = vmatpush1.msra.mxu0 0.0
    %2127 = vmatprep.subr.mxu0 0.0
    %2128 = vmatpush1.msra.mxu0 0.0
    %2129 = vmatprep.subr.mxu0 0.0
    %2130 = vmatpush1.msra.mxu0 0.0
    %2131 = vmatprep.subr.mxu0 0.0
    %2132 = vmatpush1.msra.mxu0 0.0
    %2133 = vmatprep.subr.mxu0 0.0
    %2134 = vmatpush1.msra.mxu0 0.0
    %2135 = vmatprep.subr.mxu0 0.0
    %2136 = vmatpush1.msra.mxu0 0.0
    %2137 = vmatprep.subr.mxu0 0.0
    %2138 = vmatpush1.msra.mxu0 0.0
    %2139 = vmatprep.subr.mxu0 0.0
    %2140 = vmatpush1.msra.mxu0 0.0
    %2141 = vmatprep.subr.mxu0 0.0
    %2142 = vmatpush1.msra.mxu0 0.0
    %2143 = vmatprep.subr.mxu0 0.0
    %2144 = vmatpush1.msra.mxu0 0.0
    %2145 = vmatprep.subr.mxu0 0.0
    %2146 = vmatpush1.msra.mxu0 0.0
    %2147 = vmatprep.subr.mxu0 0.0
    %2148 = vmatpush1.msra.mxu0 0.0
    %2149 = vmatprep.mubr.f32.mxu0 0.0
    %2150 = vmatmul.mubr.f32.gmra.mrb[0].mxu0 %v2083
    %v2151 = vpop.f32.mrb[0].mxu0
    %v2152 = vadd.f32 0.0, %v2151
    %v2153 = vpop.f32.mrb[0].mxu0
    %v2154 = vadd.f32 0.0, %v2153
    %2155 = vdwg.mxu0
    %v2156 = vadd.f32 %v2080, %v2152
    %v2157 = vadd.f32 %v2081, %v2154
    %2159 = vrot.lane.b32.xlu0 %v2157, 96
    %v2160 = vpop.permute.xlu0 %2159
    %v2162 = vsel %vm359, %v2156, %v2160
    %v2163 = vxor.u32 %v2162, 2147483648
    %v2164 = vxor.u32 %v2160, 2147483648
    %v2165 = vmul.f32 %v2163, 1.442695
    %v2166 = vpow.pop %v2165
    %v2167 = vmul.f32 %v2164, 1.442695
    %v2168 = vpow.pop %v2167
    %v2169 = vadd.f32 %v2166, 1.0
    %v2170 = vadd.f32 %v2168, 1.0
    %v2171 = vrcp.pop %v2169
    %v2172 = vmul.f32 1.0, %v2171
    %v2173 = vrcp.pop %v2170
    %v2174 = vmul.f32 1.0, %v2173
    %2176 = vrot.lane.b32.xlu0 %v2156, 32
    %v2177 = vpop.permute.xlu0 %2176
    %2179 = vrot.lane.b32.xlu0 %v2157, 64
    %v2180 = vpop.permute.xlu0 %2179
    %v2182 = vsel %vm380, %v2177, %v2180
    %v2183 = vtanh.pop %v2182
    %2185 = vrot.lane.b32.xlu0 %v2172, 64
    %v2186 = vpop.permute.xlu0 %2185
    %v2188 = vsel %vm380, %v2172, %v2186
    %2189 = vrot.lane.b32.xlu0 %v2172, 96
    %v2190 = vpop.permute.xlu0 %2189
    %2193 = vrot.lane.b32.xlu0 %v2174, 32
    %v2194 = vpop.permute.xlu0 %2193
    %v2196 = vsel %vm380, %v2190, %v2194
    %v2197 = vsel %vm380, %v2186, %v2174
    %v2198 = vmul.f32 %v2196, %v2077
    %v2199 = vmul.f32 %v2188, %v2183
    %v2200 = vadd.f32 %v2198, %v2199
    %v2201 = vtanh.pop %v2200
    %v2202 = vmul.f32 %v2197, %v2201
    %v2203 = vld [vmem:[#allocation2 + $0x60] sm:$0xff]
    %v2204 = vld [vmem:[#allocation2 + $0x18] sm:$0xff]
    %v2206 = vsel %vm278, %v2202, 0
    %2208 = vmatprep.subr.mxu0 %v1453
    %2209 = vmatpush1.msra.mxu0 %v1452
    %2210 = vmatprep.subr.mxu0 %v1455
    %2211 = vmatpush1.msra.mxu0 %v1454
    %2212 = vmatprep.subr.mxu0 %v1457
    %2213 = vmatpush1.msra.mxu0 %v1456
    %2214 = vmatprep.subr.mxu0 %v1459
    %2215 = vmatpush1.msra.mxu0 %v1458
    %2216 = vmatprep.subr.mxu0 %v1461
    %2217 = vmatpush1.msra.mxu0 %v1460
    %2218 = vmatprep.subr.mxu0 %v1463
    %2219 = vmatpush1.msra.mxu0 %v1462
    %2220 = vmatprep.subr.mxu0 %v1465
    %2221 = vmatpush1.msra.mxu0 %v1464
    %2222 = vmatprep.subr.mxu0 %v1467
    %2223 = vmatpush1.msra.mxu0 %v1466
    %2224 = vmatprep.subr.mxu0 0.0
    %2225 = vmatpush1.msra.mxu0 0.0
    %2226 = vmatprep.subr.mxu0 0.0
    %2227 = vmatpush1.msra.mxu0 0.0
    %2228 = vmatprep.subr.mxu0 0.0
    %2229 = vmatpush1.msra.mxu0 0.0
    %2230 = vmatprep.subr.mxu0 0.0
    %2231 = vmatpush1.msra.mxu0 0.0
    %2232 = vmatprep.subr.mxu0 0.0
    %2233 = vmatpush1.msra.mxu0 0.0
    %2234 = vmatprep.subr.mxu0 0.0
    %2235 = vmatpush1.msra.mxu0 0.0
    %2236 = vmatprep.subr.mxu0 0.0
    %2237 = vmatpush1.msra.mxu0 0.0
    %2238 = vmatprep.subr.mxu0 0.0
    %2239 = vmatpush1.msra.mxu0 0.0
    %2240 = vmatprep.subr.mxu0 0.0
    %2241 = vmatpush1.msra.mxu0 0.0
    %2242 = vmatprep.subr.mxu0 0.0
    %2243 = vmatpush1.msra.mxu0 0.0
    %2244 = vmatprep.subr.mxu0 0.0
    %2245 = vmatpush1.msra.mxu0 0.0
    %2246 = vmatprep.subr.mxu0 0.0
    %2247 = vmatpush1.msra.mxu0 0.0
    %2248 = vmatprep.subr.mxu0 0.0
    %2249 = vmatpush1.msra.mxu0 0.0
    %2250 = vmatprep.subr.mxu0 0.0
    %2251 = vmatpush1.msra.mxu0 0.0
    %2252 = vmatprep.subr.mxu0 0.0
    %2253 = vmatpush1.msra.mxu0 0.0
    %2254 = vmatprep.subr.mxu0 0.0
    %2255 = vmatpush1.msra.mxu0 0.0
    %2256 = vmatprep.subr.mxu0 0.0
    %2257 = vmatpush1.msra.mxu0 0.0
    %2258 = vmatprep.subr.mxu0 0.0
    %2259 = vmatpush1.msra.mxu0 0.0
    %2260 = vmatprep.subr.mxu0 0.0
    %2261 = vmatpush1.msra.mxu0 0.0
    %2262 = vmatprep.subr.mxu0 0.0
    %2263 = vmatpush1.msra.mxu0 0.0
    %2264 = vmatprep.subr.mxu0 0.0
    %2265 = vmatpush1.msra.mxu0 0.0
    %2266 = vmatprep.subr.mxu0 0.0
    %2267 = vmatpush1.msra.mxu0 0.0
    %2268 = vmatprep.subr.mxu0 0.0
    %2269 = vmatpush1.msra.mxu0 0.0
    %2270 = vmatprep.subr.mxu0 0.0
    %2271 = vmatpush1.msra.mxu0 0.0
    %2272 = vmatprep.mubr.f32.mxu0 0.0
    %2273 = vmatmul.mubr.f32.gmra.mrb[0].mxu0 %v2206
    %v2274 = vpop.f32.mrb[0].mxu0
    %v2275 = vadd.f32 0.0, %v2274
    %v2276 = vpop.f32.mrb[0].mxu0
    %v2277 = vadd.f32 0.0, %v2276
    %2278 = vdwg.mxu0
    %v2279 = vadd.f32 %v2203, %v2275
    %v2280 = vadd.f32 %v2204, %v2277
    %2282 = vrot.lane.b32.xlu0 %v2280, 96
    %v2283 = vpop.permute.xlu0 %2282
    %v2285 = vsel %vm359, %v2279, %v2283
    %v2286 = vxor.u32 %v2285, 2147483648
    %v2287 = vxor.u32 %v2283, 2147483648
    %v2288 = vmul.f32 %v2286, 1.442695
    %v2289 = vpow.pop %v2288
    %v2290 = vmul.f32 %v2287, 1.442695
    %v2291 = vpow.pop %v2290
    %v2292 = vadd.f32 %v2289, 1.0
    %v2293 = vadd.f32 %v2291, 1.0
    %v2294 = vrcp.pop %v2292
    %v2295 = vmul.f32 1.0, %v2294
    %v2296 = vrcp.pop %v2293
    %v2297 = vmul.f32 1.0, %v2296
    %2299 = vrot.lane.b32.xlu0 %v2279, 32
    %v2300 = vpop.permute.xlu0 %2299
    %2302 = vrot.lane.b32.xlu0 %v2280, 64
    %v2303 = vpop.permute.xlu0 %2302
    %v2305 = vsel %vm380, %v2300, %v2303
    %v2306 = vtanh.pop %v2305
    %2308 = vrot.lane.b32.xlu0 %v2295, 64
    %v2309 = vpop.permute.xlu0 %2308
    %v2311 = vsel %vm380, %v2295, %v2309
    %2312 = vrot.lane.b32.xlu0 %v2295, 96
    %v2313 = vpop.permute.xlu0 %2312
    %2316 = vrot.lane.b32.xlu0 %v2297, 32
    %v2317 = vpop.permute.xlu0 %2316
    %v2319 = vsel %vm380, %v2313, %v2317
    %v2320 = vsel %vm380, %v2309, %v2297
    %v2321 = vmul.f32 %v2319, %v2200
    %v2322 = vmul.f32 %v2311, %v2306
    %v2323 = vadd.f32 %v2321, %v2322
    %v2324 = vtanh.pop %v2323
    %v2325 = vmul.f32 %v2320, %v2324
    %v2326 = vld [vmem:[#allocation2 + $0x70] sm:$0xff]
    %v2327 = vld [vmem:[#allocation2 + $0x8] sm:$0xff]
    %v2329 = vsel %vm278, %v2325, 0
    %2331 = vmatprep.subr.mxu0 %v1453
    %2332 = vmatpush1.msra.mxu0 %v1452
    %2333 = vmatprep.subr.mxu0 %v1455
    %2334 = vmatpush1.msra.mxu0 %v1454
    %2335 = vmatprep.subr.mxu0 %v1457
    %2336 = vmatpush1.msra.mxu0 %v1456
    %2337 = vmatprep.subr.mxu0 %v1459
    %2338 = vmatpush1.msra.mxu0 %v1458
    %2339 = vmatprep.subr.mxu0 %v1461
    %2340 = vmatpush1.msra.mxu0 %v1460
    %2341 = vmatprep.subr.mxu0 %v1463
    %2342 = vmatpush1.msra.mxu0 %v1462
    %2343 = vmatprep.subr.mxu0 %v1465
    %2344 = vmatpush1.msra.mxu0 %v1464
    %2345 = vmatprep.subr.mxu0 %v1467
    %2346 = vmatpush1.msra.mxu0 %v1466
    %2347 = vmatprep.subr.mxu0 0.0
    %2348 = vmatpush1.msra.mxu0 0.0
    %2349 = vmatprep.subr.mxu0 0.0
    %2350 = vmatpush1.msra.mxu0 0.0
    %2351 = vmatprep.subr.mxu0 0.0
    %2352 = vmatpush1.msra.mxu0 0.0
    %2353 = vmatprep.subr.mxu0 0.0
    %2354 = vmatpush1.msra.mxu0 0.0
    %2355 = vmatprep.subr.mxu0 0.0
    %2356 = vmatpush1.msra.mxu0 0.0
    %2357 = vmatprep.subr.mxu0 0.0
    %2358 = vmatpush1.msra.mxu0 0.0
    %2359 = vmatprep.subr.mxu0 0.0
    %2360 = vmatpush1.msra.mxu0 0.0
    %2361 = vmatprep.subr.mxu0 0.0
    %2362 = vmatpush1.msra.mxu0 0.0
    %2363 = vmatprep.subr.mxu0 0.0
    %2364 = vmatpush1.msra.mxu0 0.0
    %2365 = vmatprep.subr.mxu0 0.0
    %2366 = vmatpush1.msra.mxu0 0.0
    %2367 = vmatprep.subr.mxu0 0.0
    %2368 = vmatpush1.msra.mxu0 0.0
    %2369 = vmatprep.subr.mxu0 0.0
    %2370 = vmatpush1.msra.mxu0 0.0
    %2371 = vmatprep.subr.mxu0 0.0
    %2372 = vmatpush1.msra.mxu0 0.0
    %2373 = vmatprep.subr.mxu0 0.0
    %2374 = vmatpush1.msra.mxu0 0.0
    %2375 = vmatprep.subr.mxu0 0.0
    %2376 = vmatpush1.msra.mxu0 0.0
    %2377 = vmatprep.subr.mxu0 0.0
    %2378 = vmatpush1.msra.mxu0 0.0
    %2379 = vmatprep.subr.mxu0 0.0
    %2380 = vmatpush1.msra.mxu0 0.0
    %2381 = vmatprep.subr.mxu0 0.0
    %2382 = vmatpush1.msra.mxu0 0.0
    %2383 = vmatprep.subr.mxu0 0.0
    %2384 = vmatpush1.msra.mxu0 0.0
    %2385 = vmatprep.subr.mxu0 0.0
    %2386 = vmatpush1.msra.mxu0 0.0
    %2387 = vmatprep.subr.mxu0 0.0
    %2388 = vmatpush1.msra.mxu0 0.0
    %2389 = vmatprep.subr.mxu0 0.0
    %2390 = vmatpush1.msra.mxu0 0.0
    %2391 = vmatprep.subr.mxu0 0.0
    %2392 = vmatpush1.msra.mxu0 0.0
    %2393 = vmatprep.subr.mxu0 0.0
    %2394 = vmatpush1.msra.mxu0 0.0
    %2395 = vmatprep.mubr.f32.mxu0 0.0
    %2396 = vmatmul.mubr.f32.gmra.mrb[0].mxu0 %v2329
    %v2397 = vpop.f32.mrb[0].mxu0
    %v2398 = vadd.f32 0.0, %v2397
    %v2399 = vpop.f32.mrb[0].mxu0
    %v2400 = vadd.f32 0.0, %v2399
    %2401 = vdwg.mxu0
    %v2402 = vadd.f32 %v2326, %v2398
    %v2403 = vadd.f32 %v2327, %v2400
    %2405 = vrot.lane.b32.xlu0 %v2403, 96
    %v2406 = vpop.permute.xlu0 %2405
    %v2408 = vsel %vm359, %v2402, %v2406
    %v2409 = vxor.u32 %v2408, 2147483648
    %v2410 = vxor.u32 %v2406, 2147483648
    %v2411 = vmul.f32 %v2409, 1.442695
    %v2412 = vpow.pop %v2411
    %v2413 = vmul.f32 %v2410, 1.442695
    %v2414 = vpow.pop %v2413
    %v2415 = vadd.f32 %v2412, 1.0
    %v2416 = vadd.f32 %v2414, 1.0
    %v2417 = vrcp.pop %v2415
    %v2418 = vmul.f32 1.0, %v2417
    %v2419 = vrcp.pop %v2416
    %v2420 = vmul.f32 1.0, %v2419
    %2422 = vrot.lane.b32.xlu0 %v2402, 32
    %v2423 = vpop.permute.xlu0 %2422
    %2425 = vrot.lane.b32.xlu0 %v2403, 64
    %v2426 = vpop.permute.xlu0 %2425
    %v2428 = vsel %vm380, %v2423, %v2426
    %v2429 = vtanh.pop %v2428
    %2431 = vrot.lane.b32.xlu0 %v2418, 64
    %v2432 = vpop.permute.xlu0 %2431
    %v2434 = vsel %vm380, %v2418, %v2432
    %2435 = vrot.lane.b32.xlu0 %v2418, 96
    %v2436 = vpop.permute.xlu0 %2435
    %2439 = vrot.lane.b32.xlu0 %v2420, 32
    %v2440 = vpop.permute.xlu0 %2439
    %v2442 = vsel %vm380, %v2436, %v2440
    %v2443 = vsel %vm380, %v2432, %v2420
    %v2444 = vmul.f32 %v2442, %v2323
    %v2445 = vmul.f32 %v2434, %v2429
    %v2446 = vadd.f32 %v2444, %v2445
    %v2447 = vtanh.pop %v2446
    %v2448 = vmul.f32 %v2443, %v2447
    %v2449 = vsel %vm380, %v2448, %v1587
    %v2450 = vld [vmem:[%s7] sm:$0xff]
    %v2451 = vld [vmem:[%s7 + $0x8] sm:$0xff]
    %v2452 = vld [vmem:[%s7 + $0x10] sm:$0xff]
    %v2453 = vld [vmem:[%s7 + $0x18] sm:$0xff]
    %v2454 = vld [vmem:[%s7 + $0x20] sm:$0xff]
    %v2455 = vld [vmem:[%s7 + $0x28] sm:$0xff]
    %v2456 = vld [vmem:[%s7 + $0x30] sm:$0xff]
    %v2457 = vld [vmem:[%s7 + $0x38] sm:$0xff]
    %v2458 = vld [vmem:[#allocation7] sm:$0x1]
    %v2460 = vlaneseq
    %v2461 = vshrl.u32 %v2460, 7
    %v2462 = vsub.s32 0, %v2461
    %v2463 = vrot.slane %v2458, %v2462
    %v2466 = vsel %vm278, %v2449, 0
    %2468 = vmatprep.subr.mxu0 0.0
    %2469 = vmatpush1.msra.mxu0 %v2450
    %2470 = vmatprep.subr.mxu0 0.0
    %2471 = vmatpush1.msra.mxu0 %v2451
    %2472 = vmatprep.subr.mxu0 0.0
    %2473 = vmatpush1.msra.mxu0 %v2452
    %2474 = vmatprep.subr.mxu0 0.0
    %2475 = vmatpush1.msra.mxu0 %v2453
    %2476 = vmatprep.subr.mxu0 0.0
    %2477 = vmatpush1.msra.mxu0 %v2454
    %2478 = vmatprep.subr.mxu0 0.0
    %2479 = vmatpush1.msra.mxu0 %v2455
    %2480 = vmatprep.subr.mxu0 0.0
    %2481 = vmatpush1.msra.mxu0 %v2456
    %2482 = vmatprep.subr.mxu0 0.0
    %2483 = vmatpush1.msra.mxu0 %v2457
    %2484 = vmatprep.subr.mxu0 0.0
    %2485 = vmatpush1.msra.mxu0 0.0
    %2486 = vmatprep.subr.mxu0 0.0
    %2487 = vmatpush1.msra.mxu0 0.0
    %2488 = vmatprep.subr.mxu0 0.0
    %2489 = vmatpush1.msra.mxu0 0.0
    %2490 = vmatprep.subr.mxu0 0.0
    %2491 = vmatpush1.msra.mxu0 0.0
    %2492 = vmatprep.subr.mxu0 0.0
    %2493 = vmatpush1.msra.mxu0 0.0
    %2494 = vmatprep.subr.mxu0 0.0
    %2495 = vmatpush1.msra.mxu0 0.0
    %2496 = vmatprep.subr.mxu0 0.0
    %2497 = vmatpush1.msra.mxu0 0.0
    %2498 = vmatprep.subr.mxu0 0.0
    %2499 = vmatpush1.msra.mxu0 0.0
    %2500 = vmatprep.subr.mxu0 0.0
    %2501 = vmatpush1.msra.mxu0 0.0
    %2502 = vmatprep.subr.mxu0 0.0
    %2503 = vmatpush1.msra.mxu0 0.0
    %2504 = vmatprep.subr.mxu0 0.0
    %2505 = vmatpush1.msra.mxu0 0.0
    %2506 = vmatprep.subr.mxu0 0.0
    %2507 = vmatpush1.msra.mxu0 0.0
    %2508 = vmatprep.subr.mxu0 0.0
    %2509 = vmatpush1.msra.mxu0 0.0
    %2510 = vmatprep.subr.mxu0 0.0
    %2511 = vmatpush1.msra.mxu0 0.0
    %2512 = vmatprep.subr.mxu0 0.0
    %2513 = vmatpush1.msra.mxu0 0.0
    %2514 = vmatprep.subr.mxu0 0.0
    %2515 = vmatpush1.msra.mxu0 0.0
    %2516 = vmatprep.subr.mxu0 0.0
    %2517 = vmatpush1.msra.mxu0 0.0
    %2518 = vmatprep.subr.mxu0 0.0
    %2519 = vmatpush1.msra.mxu0 0.0
    %2520 = vmatprep.subr.mxu0 0.0
    %2521 = vmatpush1.msra.mxu0 0.0
    %2522 = vmatprep.subr.mxu0 0.0
    %2523 = vmatpush1.msra.mxu0 0.0
    %2524 = vmatprep.subr.mxu0 0.0
    %2525 = vmatpush1.msra.mxu0 0.0
    %2526 = vmatprep.subr.mxu0 0.0
    %2527 = vmatpush1.msra.mxu0 0.0
    %2528 = vmatprep.subr.mxu0 0.0
    %2529 = vmatpush1.msra.mxu0 0.0
    %2530 = vmatprep.subr.mxu0 0.0
    %2531 = vmatpush1.msra.mxu0 0.0
    %2532 = vmatprep.mubr.f32.mxu0 0.0
    %2533 = vmatmul.mubr.f32.gmra.mrb[0].mxu0 %v2466
    %v2534 = vpop.f32.mrb[0].mxu0
    %v2535 = vadd.f32 %v2463, %v2534
    %v2536 = vpop.f32.mrb[0].mxu0
    %2537 = vdwg.mxu0
    %vm2538 = vcmask 80896
    %2539 = vst.msk [vmem:[%s9] sm:$0xff] %vm2538, %v2535
    // Predicated region
    $region50: #{brnn_forward.1} parent=1 // pred_check
      _
    $region51: #{brnn_forward.1} parent=1 // pred_check_branch
      %2541 = sbr.rel (0) target = $region53
    $region52: #{brnn_forward.1} parent=1 // pred_region
      _
    $region53: #{brnn_forward.1} parent=1 // pred_fallthru
      _
    // Predicated region
    $region54: #{brnn_forward.1} parent=1 // pred_check
      _
    $region55: #{brnn_forward.1} parent=1 // pred_check_branch
      %2543 = sbr.rel (0) target = $region57
    $region56: #{brnn_forward.1} parent=1 // pred_region
      _
    $region57: #{brnn_forward.1} parent=1 // pred_fallthru
      _
    %2544 = vsyncpa [#allocation4], 1
    %2545 = vsyncpa [#allocation6], 1

</llo_original>
